<compile_context>
chip_gen: v7x
topology: tpu7x:2x2x1
jax: 0.10.0
libtpu: 0.0.40
codegen_flags: <defaults>
</compile_context>

<pallas_src>
import jax
import jax.numpy as jnp
import numpy as np
from jax import lax
from jax.experimental import pallas as pl
from jax.experimental.pallas import tpu as pltpu


# ----------------------------------------------------------------------------------
# Fused Conv2d(5x5, padding=2) + MaxPool2d(2) kernel: one im2col matmul per sample.
# ----------------------------------------------------------------------------------
def _conv5x5_pool_kernel(p_ref, w_ref, b_ref, o_ref):
    # p_ref: (1, H*W, 25*Cin) bf16   im2col patches for one sample (taps folded into K)
    # w_ref: (25*Cin, Cout)   bf16   folded conv weights
    # b_ref: (1, Cout)        f32
    # o_ref: (1, H//2, W-1, Cout) f32  H-pooled + adjacent-column max; the even columns
    #                                  hold the final 2x2-pooled values.
    _, Ho, Wm1, Cout = o_ref.shape
    W = Wm1 + 1

    # Single MXU matmul (bf16 in, f32 accumulate) -- no accumulation loop, no spills.
    y = jnp.dot(p_ref[0], w_ref[...], preferred_element_type=jnp.float32)
    y = y + b_ref[...]                              # (H*W, Cout) f32 epilogue

    # ---- fused MaxPool2d(2) ----
    # rows are (h, w) row-major; pooling over h is a layout-preserving reshape + max
    y = y.reshape(Ho, 2, W, Cout)
    yh = jnp.maximum(y[:, 0], y[:, 1])              # (Ho, W, Cout)
    # pooling over w: adjacent-column max; the stride-2 downselect of even columns is a
    # free XLA slice in the wrapper (fused into the next layer's patch extraction).
    o_ref[0] = jnp.maximum(yh[:, :W - 1, :], yh[:, 1:, :])


def _im2col_5x5(x_nhwc):
    # (N, H, W, C) -> (N, H*W, 25*C); feature order = (kh, kw, ci), matching the
    # folded-weight layout produced in prepare_params().
    N, H, W, C = x_nhwc.shape
    xp = jnp.pad(x_nhwc, ((0, 0), (2, 2), (2, 2), (0, 0)))
    cols = [xp[:, kh:kh + H, kw:kw + W, :] for kh in range(5) for kw in range(5)]
    return jnp.concatenate(cols, axis=-1).reshape(N, H * W, 25 * C)


def conv5x5_pool(x_nhwc, w_folded, bias):
    # x_nhwc: (N, H, W, Cin) f32; w_folded: (25*Cin, Cout) bf16; bias: (1, Cout) f32
    N, H, W, Cin = x_nhwc.shape
    Cout = w_folded.shape[1]
    Ho = H // 2
    K = 25 * Cin

    patches = _im2col_5x5(x_nhwc).astype(jnp.bfloat16)      # (N, H*W, 25*Cin)

    m = pl.pallas_call(
        _conv5x5_pool_kernel,
        out_shape=jax.ShapeDtypeStruct((N, Ho, W - 1, Cout), jnp.float32),
        grid=(N,),
        in_specs=[
            pl.BlockSpec((1, H * W, K), lambda b: (b, 0, 0)),
            pl.BlockSpec((K, Cout), lambda b: (0, 0)),
            pl.BlockSpec((1, Cout), lambda b: (0, 0)),
        ],
        out_specs=pl.BlockSpec((1, Ho, W - 1, Cout), lambda b: (b, 0, 0, 0)),
        compiler_params=pltpu.CompilerParams(dimension_semantics=("parallel",)),
    )(patches, w_folded, bias)

    # stride-2 downselect of the even columns completes the 2x2 pool (fuses into the
    # next layer's im2col slicing in XLA).
    return m[:, :, 0::2, :]                                  # (N, H//2, W//2, Cout)


# ----------------------------------------------------------------------------------
# Fused Linear(1024,64) -> Linear(64,10) head (bf16 matmuls, f32 accumulation).
# ----------------------------------------------------------------------------------
def _mlp_head_kernel(x_ref, w1_ref, b1_ref, w2_ref, b2_ref, o_ref):
    h = jnp.dot(x_ref[...], w1_ref[...], preferred_element_type=jnp.float32) + b1_ref[...]
    o = jnp.dot(h.astype(jnp.bfloat16), w2_ref[...],
                preferred_element_type=jnp.float32) + b2_ref[...]
    o_ref[...] = o


def mlp_head(x_flat_bf16, w1, b1, w2, b2):
    N = x_flat_bf16.shape[0]
    vmem = pl.BlockSpec(memory_space=pltpu.MemorySpace.VMEM)
    return pl.pallas_call(
        _mlp_head_kernel,
        out_shape=jax.ShapeDtypeStruct((N, w2.shape[1]), jnp.float32),
        in_specs=[vmem] * 5,
        out_specs=vmem,
    )(x_flat_bf16, w1, b1, w2, b2)


# ----------------------------------------------------------------------------------
# Parameters (deterministic, torch-like uniform init) and kernel-layout preparation.
# ----------------------------------------------------------------------------------
def init_params(key):
    ks = jax.random.split(key, 10)

    def u(k, shape, fan_in):
        bound = 1.0 / np.sqrt(fan_in)
        return jax.random.uniform(k, shape, jnp.float32, -bound, bound)

    return {
        "c1w": u(ks[0], (32, 3, 5, 5), 3 * 25),   "c1b": u(ks[1], (32,), 3 * 25),
        "c2w": u(ks[2], (32, 32, 5, 5), 32 * 25), "c2b": u(ks[3], (32,), 32 * 25),
        "c3w": u(ks[4], (64, 32, 5, 5), 32 * 25), "c3b": u(ks[5], (64,), 32 * 25),
        "fc1w": u(ks[6], (64, 1024), 1024),       "fc1b": u(ks[7], (64,), 1024),
        "fc2w": u(ks[8], (10, 64), 64),           "fc2b": u(ks[9], (10,), 64),
    }


def prepare_params(p):
    # One-time weight re-layout: fold conv taps into the K dim, permute fc1 columns from
    # torch's NCHW flatten order to our NHWC flatten order, pre-transpose FC weights,
    # and cast matmul operands to bf16 (biases stay f32).
    def fold_conv(w):                                  # (Cout, Cin, 5, 5) -> (25*Cin, Cout)
        cout, cin = w.shape[0], w.shape[1]
        return jnp.transpose(w, (2, 3, 1, 0)).reshape(25 * cin, cout).astype(jnp.bfloat16)

    fc1 = p["fc1w"].reshape(64, 64, 4, 4)              # (out, c, h, w)   [torch flatten]
    fc1 = jnp.transpose(fc1, (0, 2, 3, 1)).reshape(64, 1024)  # columns now (h, w, c)

    return {
        "c1w": fold_conv(p["c1w"]), "c1b": p["c1b"].reshape(1, -1),
        "c2w": fold_conv(p["c2w"]), "c2b": p["c2b"].reshape(1, -1),
        "c3w": fold_conv(p["c3w"]), "c3b": p["c3b"].reshape(1, -1),
        "fc1w": jnp.transpose(fc1).astype(jnp.bfloat16), "fc1b": p["fc1b"].reshape(1, -1),
        "fc2w": jnp.transpose(p["fc2w"]).astype(jnp.bfloat16), "fc2b": p["fc2b"].reshape(1, -1),
    }


# ----------------------------------------------------------------------------------
# Forward pass (Pallas path): 4 pallas_calls, no standalone pool kernels.
# ----------------------------------------------------------------------------------
def net_forward(x_nchw, p):
    kp = prepare_params(p)
    x = jnp.transpose(x_nchw, (0, 2, 3, 1))                   # NCHW -> NHWC (once)
    x = conv5x5_pool(x, kp["c1w"], kp["c1b"])                 # (N, 16, 16, 32)
    x = conv5x5_pool(x, kp["c2w"], kp["c2b"])                 # (N,  8,  8, 32)
    x = conv5x5_pool(x, kp["c3w"], kp["c3b"])                 # (N,  4,  4, 64)
    # NHWC flatten (free HBM reshape); fc1 columns were permuted to match this order.
    xf = x.reshape(x.shape[0], -1).astype(jnp.bfloat16)       # (N, 1024)
    return mlp_head(xf, kp["fc1w"], kp["fc1b"], kp["fc2w"], kp["fc2b"])   # (N, 10)


# ----------------------------------------------------------------------------------
# Pure-JAX reference for the correctness check.
# ----------------------------------------------------------------------------------
def net_forward_ref(x_nchw, p):
    def conv(x, w, b):
        y = lax.conv_general_dilated(x, w, (1, 1), [(2, 2), (2, 2)],
                                     dimension_numbers=("NCHW", "OIHW", "NCHW"),
                                     precision=lax.Precision.HIGHEST)
        return y + b[None, :, None, None]

    def pool(x):
        return lax.reduce_window(x, -jnp.inf, lax.max, (1, 1, 2, 2), (1, 1, 2, 2), "VALID")

    x = pool(conv(x_nchw, p["c1w"], p["c1b"]))
    x = pool(conv(x, p["c2w"], p["c2b"]))
    x = pool(conv(x, p["c3w"], p["c3b"]))
    x = x.reshape(x.shape[0], -1)
    h = x @ p["fc1w"].T + p["fc1b"]
    return h @ p["fc2w"].T + p["fc2b"]


if __name__ == "__main__":
    key = jax.random.PRNGKey(0)
    kp, kx = jax.random.split(key)
    params = init_params(kp)
    x = jax.random.normal(kx, (2, 3, 32, 32), jnp.float32)    # batch=2, CIFAR-sized input

    out = jax.jit(net_forward)(x, params)
    out = jax.block_until_ready(out)
    assert out.shape == (2, 10) and out.dtype == jnp.float32

    ref = net_forward_ref(x, params)
    assert np.allclose(np.asarray(out), np.asarray(ref), rtol=2e-2, atol=2e-2), \
        "Pallas output does not match JAX reference"

    print("KERNEL_OK")
</pallas_src>

<mosaic_0001>
module attributes {stable_mosaic.version = 11 : i64} {
  func.func @_conv5x5_pool_kernel(%arg0: i32, %arg1: memref<1x1024x75xbf16, #tpu.memory_space<vmem>>, %arg2: memref<75x32xbf16, #tpu.memory_space<vmem>>, %arg3: memref<1x32xf32, #tpu.memory_space<vmem>>, %arg4: memref<1x16x31x32xf32, #tpu.memory_space<vmem>>) attributes {dimension_semantics = [#tpu.dimension_semantics<parallel>], iteration_bounds = array<i64: 2>, scalar_prefetch = 0 : i64, scratch_operands = 0 : i64, tpu.core_type = #tpu.core_type<tc>, window_params = [{transform_indices = @transform_0, window_bounds = array<i64: 1, 1024, 75>}, {pipeline_mode = #tpu.pipeline_mode<synchronous>, transform_indices = @transform_1, window_bounds = array<i64: 75, 32>}, {pipeline_mode = #tpu.pipeline_mode<synchronous>, transform_indices = @transform_2, window_bounds = array<i64: 1, 32>}, {transform_indices = @transform_3, window_bounds = array<i64: 1, 16, 31, 32>}]} {
    %c0 = arith.constant 0 : index
    %c0_0 = arith.constant 0 : index
    %c0_1 = arith.constant 0 : index
    %0 = vector.load %arg1[%c0, %c0_0, %c0_1] : memref<1x1024x75xbf16, #tpu.memory_space<vmem>>, vector<1x1024x75xbf16>
    %1 = vector.shape_cast %0 : vector<1x1024x75xbf16> to vector<1024x75xbf16>
    %c0_2 = arith.constant 0 : index
    %c0_3 = arith.constant 0 : index
    %2 = vector.load %arg2[%c0_2, %c0_3] : memref<75x32xbf16, #tpu.memory_space<vmem>>, vector<75x32xbf16>
    %cst = arith.constant dense<0.000000e+00> : vector<1024x32xf32>
    %3 = tpu.matmul %1, %2, %cst {dimension_numbers = #tpu.dot_dimension_numbers<[1], [0], [0], [1], [0, 0, 1, 1], [], []>} : vector<1024x75xbf16>, vector<75x32xbf16>, vector<1024x32xf32> -> vector<1024x32xf32>
    %c0_4 = arith.constant 0 : index
    %c0_5 = arith.constant 0 : index
    %4 = vector.load %arg3[%c0_4, %c0_5] : memref<1x32xf32, #tpu.memory_space<vmem>>, vector<1x32xf32>
    %5 = vector.broadcast %4 : vector<1x32xf32> to vector<1024x32xf32>
    %6 = arith.addf %3, %5 : vector<1024x32xf32>
    %7 = vector.shape_cast %6 : vector<1024x32xf32> to vector<16x2x32x32xf32>
    %8 = vector.extract_strided_slice %7 {offsets = [0, 0, 0, 0], sizes = [16, 1, 32, 32], strides = [1, 1, 1, 1]} : vector<16x2x32x32xf32> to vector<16x1x32x32xf32>
    %9 = vector.shape_cast %8 : vector<16x1x32x32xf32> to vector<16x32x32xf32>
    %10 = vector.extract_strided_slice %7 {offsets = [0, 1, 0, 0], sizes = [16, 1, 32, 32], strides = [1, 1, 1, 1]} : vector<16x2x32x32xf32> to vector<16x1x32x32xf32>
    %11 = vector.shape_cast %10 : vector<16x1x32x32xf32> to vector<16x32x32xf32>
    %12 = arith.maximumf %9, %11 : vector<16x32x32xf32>
    %13 = vector.extract_strided_slice %12 {offsets = [0, 0, 0], sizes = [16, 31, 32], strides = [1, 1, 1]} : vector<16x32x32xf32> to vector<16x31x32xf32>
    %14 = vector.extract_strided_slice %12 {offsets = [0, 1, 0], sizes = [16, 31, 32], strides = [1, 1, 1]} : vector<16x32x32xf32> to vector<16x31x32xf32>
    %15 = arith.maximumf %13, %14 : vector<16x31x32xf32>
    %c0_6 = arith.constant 0 : index
    %c0_7 = arith.constant 0 : index
    %c0_8 = arith.constant 0 : index
    %c0_9 = arith.constant 0 : index
    %16 = vector.load %arg4[%c0_6, %c0_7, %c0_8, %c0_9] : memref<1x16x31x32xf32, #tpu.memory_space<vmem>>, vector<1x16x31x32xf32>
    %17 = vector.shape_cast %16 : vector<1x16x31x32xf32> to vector<16x31x32xf32>
    %18 = vector.shape_cast %15 : vector<16x31x32xf32> to vector<1x16x31x32xf32>
    tpu.vector_store %arg4[%c0_6, %c0_7, %c0_8, %c0_9], %18 {strides = array<i32>} : memref<1x16x31x32xf32, #tpu.memory_space<vmem>>, vector<1x16x31x32xf32>,
    return
  }
  func.func @transform_0(%arg0: i32) -> (i32, i32, i32) {
    %c0_i32 = arith.constant 0 : i32
    %c0_i32_0 = arith.constant 0 : i32
    %c0_i32_1 = arith.constant 0 : i32
    return %arg0, %c0_i32, %c0_i32_0 : i32, i32, i32
  }
  func.func @transform_1(%arg0: i32) -> (i32, i32) {
    %c0_i32 = arith.constant 0 : i32
    %c0_i32_0 = arith.constant 0 : i32
    %c0_i32_1 = arith.constant 0 : i32
    return %c0_i32, %c0_i32_0 : i32, i32
  }
  func.func @transform_2(%arg0: i32) -> (i32, i32) {
    %c0_i32 = arith.constant 0 : i32
    %c0_i32_0 = arith.constant 0 : i32
    %c0_i32_1 = arith.constant 0 : i32
    return %c0_i32, %c0_i32_0 : i32, i32
  }
  func.func @transform_3(%arg0: i32) -> (i32, i32, i32, i32) {
    %c0_i32 = arith.constant 0 : i32
    %c0_i32_0 = arith.constant 0 : i32
    %c0_i32_1 = arith.constant 0 : i32
    %c0_i32_2 = arith.constant 0 : i32
    return %arg0, %c0_i32, %c0_i32_0, %c0_i32_1 : i32, i32, i32, i32
  }
}

module attributes {stable_mosaic.version = 11 : i64} {
  func.func @_conv5x5_pool_kernel(%arg0: i32, %arg1: memref<1x256x800xbf16, #tpu.memory_space<vmem>>, %arg2: memref<800x32xbf16, #tpu.memory_space<vmem>>, %arg3: memref<1x32xf32, #tpu.memory_space<vmem>>, %arg4: memref<1x8x15x32xf32, #tpu.memory_space<vmem>>) attributes {dimension_semantics = [#tpu.dimension_semantics<parallel>], iteration_bounds = array<i64: 2>, scalar_prefetch = 0 : i64, scratch_operands = 0 : i64, tpu.core_type = #tpu.core_type<tc>, window_params = [{transform_indices = @transform_0, window_bounds = array<i64: 1, 256, 800>}, {pipeline_mode = #tpu.pipeline_mode<synchronous>, transform_indices = @transform_1, window_bounds = array<i64: 800, 32>}, {pipeline_mode = #tpu.pipeline_mode<synchronous>, transform_indices = @transform_2, window_bounds = array<i64: 1, 32>}, {transform_indices = @transform_3, window_bounds = array<i64: 1, 8, 15, 32>}]} {
    %c0 = arith.constant 0 : index
    %c0_0 = arith.constant 0 : index
    %c0_1 = arith.constant 0 : index
    %0 = vector.load %arg1[%c0, %c0_0, %c0_1] : memref<1x256x800xbf16, #tpu.memory_space<vmem>>, vector<1x256x800xbf16>
    %1 = vector.shape_cast %0 : vector<1x256x800xbf16> to vector<256x800xbf16>
    %c0_2 = arith.constant 0 : index
    %c0_3 = arith.constant 0 : index
    %2 = vector.load %arg2[%c0_2, %c0_3] : memref<800x32xbf16, #tpu.memory_space<vmem>>, vector<800x32xbf16>
    %cst = arith.constant dense<0.000000e+00> : vector<256x32xf32>
    %3 = tpu.matmul %1, %2, %cst {dimension_numbers = #tpu.dot_dimension_numbers<[1], [0], [0], [1], [0, 0, 1, 1], [], []>} : vector<256x800xbf16>, vector<800x32xbf16>, vector<256x32xf32> -> vector<256x32xf32>
    %c0_4 = arith.constant 0 : index
    %c0_5 = arith.constant 0 : index
    %4 = vector.load %arg3[%c0_4, %c0_5] : memref<1x32xf32, #tpu.memory_space<vmem>>, vector<1x32xf32>
    %5 = vector.broadcast %4 : vector<1x32xf32> to vector<256x32xf32>
    %6 = arith.addf %3, %5 : vector<256x32xf32>
    %7 = vector.shape_cast %6 : vector<256x32xf32> to vector<8x2x16x32xf32>
    %8 = vector.extract_strided_slice %7 {offsets = [0, 0, 0, 0], sizes = [8, 1, 16, 32], strides = [1, 1, 1, 1]} : vector<8x2x16x32xf32> to vector<8x1x16x32xf32>
    %9 = vector.shape_cast %8 : vector<8x1x16x32xf32> to vector<8x16x32xf32>
    %10 = vector.extract_strided_slice %7 {offsets = [0, 1, 0, 0], sizes = [8, 1, 16, 32], strides = [1, 1, 1, 1]} : vector<8x2x16x32xf32> to vector<8x1x16x32xf32>
    %11 = vector.shape_cast %10 : vector<8x1x16x32xf32> to vector<8x16x32xf32>
    %12 = arith.maximumf %9, %11 : vector<8x16x32xf32>
    %13 = vector.extract_strided_slice %12 {offsets = [0, 0, 0], sizes = [8, 15, 32], strides = [1, 1, 1]} : vector<8x16x32xf32> to vector<8x15x32xf32>
    %14 = vector.extract_strided_slice %12 {offsets = [0, 1, 0], sizes = [8, 15, 32], strides = [1, 1, 1]} : vector<8x16x32xf32> to vector<8x15x32xf32>
    %15 = arith.maximumf %13, %14 : vector<8x15x32xf32>
    %c0_6 = arith.constant 0 : index
    %c0_7 = arith.constant 0 : index
    %c0_8 = arith.constant 0 : index
    %c0_9 = arith.constant 0 : index
    %16 = vector.load %arg4[%c0_6, %c0_7, %c0_8, %c0_9] : memref<1x8x15x32xf32, #tpu.memory_space<vmem>>, vector<1x8x15x32xf32>
    %17 = vector.shape_cast %16 : vector<1x8x15x32xf32> to vector<8x15x32xf32>
    %18 = vector.shape_cast %15 : vector<8x15x32xf32> to vector<1x8x15x32xf32>
    tpu.vector_store %arg4[%c0_6, %c0_7, %c0_8, %c0_9], %18 {strides = array<i32>} : memref<1x8x15x32xf32, #tpu.memory_space<vmem>>, vector<1x8x15x32xf32>,
    return
  }
  func.func @transform_0(%arg0: i32) -> (i32, i32, i32) {
    %c0_i32 = arith.constant 0 : i32
    %c0_i32_0 = arith.constant 0 : i32
    %c0_i32_1 = arith.constant 0 : i32
    return %arg0, %c0_i32, %c0_i32_0 : i32, i32, i32
  }
  func.func @transform_1(%arg0: i32) -> (i32, i32) {
    %c0_i32 = arith.constant 0 : i32
    %c0_i32_0 = arith.constant 0 : i32
    %c0_i32_1 = arith.constant 0 : i32
    return %c0_i32, %c0_i32_0 : i32, i32
  }
  func.func @transform_2(%arg0: i32) -> (i32, i32) {
    %c0_i32 = arith.constant 0 : i32
    %c0_i32_0 = arith.constant 0 : i32
    %c0_i32_1 = arith.constant 0 : i32
    return %c0_i32, %c0_i32_0 : i32, i32
  }
  func.func @transform_3(%arg0: i32) -> (i32, i32, i32, i32) {
    %c0_i32 = arith.constant 0 : i32
    %c0_i32_0 = arith.constant 0 : i32
    %c0_i32_1 = arith.constant 0 : i32
    %c0_i32_2 = arith.constant 0 : i32
    return %arg0, %c0_i32, %c0_i32_0, %c0_i32_1 : i32, i32, i32, i32
  }
}

module attributes {stable_mosaic.version = 11 : i64} {
  func.func @_conv5x5_pool_kernel(%arg0: i32, %arg1: memref<1x64x800xbf16, #tpu.memory_space<vmem>>, %arg2: memref<800x64xbf16, #tpu.memory_space<vmem>>, %arg3: memref<1x64xf32, #tpu.memory_space<vmem>>, %arg4: memref<1x4x7x64xf32, #tpu.memory_space<vmem>>) attributes {dimension_semantics = [#tpu.dimension_semantics<parallel>], iteration_bounds = array<i64: 2>, scalar_prefetch = 0 : i64, scratch_operands = 0 : i64, tpu.core_type = #tpu.core_type<tc>, window_params = [{transform_indices = @transform_0, window_bounds = array<i64: 1, 64, 800>}, {pipeline_mode = #tpu.pipeline_mode<synchronous>, transform_indices = @transform_1, window_bounds = array<i64: 800, 64>}, {pipeline_mode = #tpu.pipeline_mode<synchronous>, transform_indices = @transform_2, window_bounds = array<i64: 1, 64>}, {transform_indices = @transform_3, window_bounds = array<i64: 1, 4, 7, 64>}]} {
    %c0 = arith.constant 0 : index
    %c0_0 = arith.constant 0 : index
    %c0_1 = arith.constant 0 : index
    %0 = vector.load %arg1[%c0, %c0_0, %c0_1] : memref<1x64x800xbf16, #tpu.memory_space<vmem>>, vector<1x64x800xbf16>
    %1 = vector.shape_cast %0 : vector<1x64x800xbf16> to vector<64x800xbf16>
    %c0_2 = arith.constant 0 : index
    %c0_3 = arith.constant 0 : index
    %2 = vector.load %arg2[%c0_2, %c0_3] : memref<800x64xbf16, #tpu.memory_space<vmem>>, vector<800x64xbf16>
    %cst = arith.constant dense<0.000000e+00> : vector<64x64xf32>
    %3 = tpu.matmul %1, %2, %cst {dimension_numbers = #tpu.dot_dimension_numbers<[1], [0], [0], [1], [0, 0, 1, 1], [], []>} : vector<64x800xbf16>, vector<800x64xbf16>, vector<64x64xf32> -> vector<64x64xf32>
    %c0_4 = arith.constant 0 : index
    %c0_5 = arith.constant 0 : index
    %4 = vector.load %arg3[%c0_4, %c0_5] : memref<1x64xf32, #tpu.memory_space<vmem>>, vector<1x64xf32>
    %5 = vector.broadcast %4 : vector<1x64xf32> to vector<64x64xf32>
    %6 = arith.addf %3, %5 : vector<64x64xf32>
    %7 = vector.shape_cast %6 : vector<64x64xf32> to vector<4x2x8x64xf32>
    %8 = vector.extract_strided_slice %7 {offsets = [0, 0, 0, 0], sizes = [4, 1, 8, 64], strides = [1, 1, 1, 1]} : vector<4x2x8x64xf32> to vector<4x1x8x64xf32>
    %9 = vector.shape_cast %8 : vector<4x1x8x64xf32> to vector<4x8x64xf32>
    %10 = vector.extract_strided_slice %7 {offsets = [0, 1, 0, 0], sizes = [4, 1, 8, 64], strides = [1, 1, 1, 1]} : vector<4x2x8x64xf32> to vector<4x1x8x64xf32>
    %11 = vector.shape_cast %10 : vector<4x1x8x64xf32> to vector<4x8x64xf32>
    %12 = arith.maximumf %9, %11 : vector<4x8x64xf32>
    %13 = vector.extract_strided_slice %12 {offsets = [0, 0, 0], sizes = [4, 7, 64], strides = [1, 1, 1]} : vector<4x8x64xf32> to vector<4x7x64xf32>
    %14 = vector.extract_strided_slice %12 {offsets = [0, 1, 0], sizes = [4, 7, 64], strides = [1, 1, 1]} : vector<4x8x64xf32> to vector<4x7x64xf32>
    %15 = arith.maximumf %13, %14 : vector<4x7x64xf32>
    %c0_6 = arith.constant 0 : index
    %c0_7 = arith.constant 0 : index
    %c0_8 = arith.constant 0 : index
    %c0_9 = arith.constant 0 : index
    %16 = vector.load %arg4[%c0_6, %c0_7, %c0_8, %c0_9] : memref<1x4x7x64xf32, #tpu.memory_space<vmem>>, vector<1x4x7x64xf32>
    %17 = vector.shape_cast %16 : vector<1x4x7x64xf32> to vector<4x7x64xf32>
    %18 = vector.shape_cast %15 : vector<4x7x64xf32> to vector<1x4x7x64xf32>
    tpu.vector_store %arg4[%c0_6, %c0_7, %c0_8, %c0_9], %18 {strides = array<i32>} : memref<1x4x7x64xf32, #tpu.memory_space<vmem>>, vector<1x4x7x64xf32>,
    return
  }
  func.func @transform_0(%arg0: i32) -> (i32, i32, i32) {
    %c0_i32 = arith.constant 0 : i32
    %c0_i32_0 = arith.constant 0 : i32
    %c0_i32_1 = arith.constant 0 : i32
    return %arg0, %c0_i32, %c0_i32_0 : i32, i32, i32
  }
  func.func @transform_1(%arg0: i32) -> (i32, i32) {
    %c0_i32 = arith.constant 0 : i32
    %c0_i32_0 = arith.constant 0 : i32
    %c0_i32_1 = arith.constant 0 : i32
    return %c0_i32, %c0_i32_0 : i32, i32
  }
  func.func @transform_2(%arg0: i32) -> (i32, i32) {
    %c0_i32 = arith.constant 0 : i32
    %c0_i32_0 = arith.constant 0 : i32
    %c0_i32_1 = arith.constant 0 : i32
    return %c0_i32, %c0_i32_0 : i32, i32
  }
  func.func @transform_3(%arg0: i32) -> (i32, i32, i32, i32) {
    %c0_i32 = arith.constant 0 : i32
    %c0_i32_0 = arith.constant 0 : i32
    %c0_i32_1 = arith.constant 0 : i32
    %c0_i32_2 = arith.constant 0 : i32
    return %arg0, %c0_i32, %c0_i32_0, %c0_i32_1 : i32, i32, i32, i32
  }
}

module attributes {stable_mosaic.version = 11 : i64} {
  func.func @_mlp_head_kernel(%arg0: memref<2x1024xbf16, #tpu.memory_space<vmem>>, %arg1: memref<1024x64xbf16, #tpu.memory_space<vmem>>, %arg2: memref<1x64xf32, #tpu.memory_space<vmem>>, %arg3: memref<64x10xbf16, #tpu.memory_space<vmem>>, %arg4: memref<1x10xf32, #tpu.memory_space<vmem>>, %arg5: memref<2x10xf32, #tpu.memory_space<vmem>>) attributes {dimension_semantics = [], scalar_prefetch = 0 : i64, scratch_operands = 0 : i64, tpu.core_type = #tpu.core_type<tc>} {
    %c0 = arith.constant 0 : index
    %c0_0 = arith.constant 0 : index
    %0 = vector.load %arg0[%c0, %c0_0] : memref<2x1024xbf16, #tpu.memory_space<vmem>>, vector<2x1024xbf16>
    %c0_1 = arith.constant 0 : index
    %c0_2 = arith.constant 0 : index
    %1 = vector.load %arg1[%c0_1, %c0_2] : memref<1024x64xbf16, #tpu.memory_space<vmem>>, vector<1024x64xbf16>
    %cst = arith.constant dense<0.000000e+00> : vector<2x64xf32>
    %2 = tpu.matmul %0, %1, %cst {dimension_numbers = #tpu.dot_dimension_numbers<[1], [0], [0], [1], [0, 0, 1, 1], [], []>} : vector<2x1024xbf16>, vector<1024x64xbf16>, vector<2x64xf32> -> vector<2x64xf32>
    %c0_3 = arith.constant 0 : index
    %c0_4 = arith.constant 0 : index
    %3 = vector.load %arg2[%c0_3, %c0_4] : memref<1x64xf32, #tpu.memory_space<vmem>>, vector<1x64xf32>
    %4 = vector.broadcast %3 : vector<1x64xf32> to vector<2x64xf32>
    %5 = arith.addf %2, %4 : vector<2x64xf32>
    %6 = arith.truncf %5 : vector<2x64xf32> to vector<2x64xbf16>
    %c0_5 = arith.constant 0 : index
    %c0_6 = arith.constant 0 : index
    %7 = vector.load %arg3[%c0_5, %c0_6] : memref<64x10xbf16, #tpu.memory_space<vmem>>, vector<64x10xbf16>
    %cst_7 = arith.constant dense<0.000000e+00> : vector<2x10xf32>
    %8 = tpu.matmul %6, %7, %cst_7 {dimension_numbers = #tpu.dot_dimension_numbers<[1], [0], [0], [1], [0, 0, 1, 1], [], []>} : vector<2x64xbf16>, vector<64x10xbf16>, vector<2x10xf32> -> vector<2x10xf32>
    %c0_8 = arith.constant 0 : index
    %c0_9 = arith.constant 0 : index
    %9 = vector.load %arg4[%c0_8, %c0_9] : memref<1x10xf32, #tpu.memory_space<vmem>>, vector<1x10xf32>
    %10 = vector.broadcast %9 : vector<1x10xf32> to vector<2x10xf32>
    %11 = arith.addf %8, %10 : vector<2x10xf32>
    %c0_10 = arith.constant 0 : index
    %c0_11 = arith.constant 0 : index
    %12 = vector.load %arg5[%c0_10, %c0_11] : memref<2x10xf32, #tpu.memory_space<vmem>>, vector<2x10xf32>
    tpu.vector_store %arg5[%c0_10, %c0_11], %11 {strides = array<i32>} : memref<2x10xf32, #tpu.memory_space<vmem>>, vector<2x10xf32>,
    return
  }
}

</mosaic_0001>

<llo_original>
// kernel: net_forward.4
$region0: #{net_forward.4}
  #allocation0 [shape = 'u32[]', space=smem, size = 0x4, offset = 0x4, fixed_abs, tag = 'smem constant byte address 0x4 - core index']
  #allocation1 [shape = 'u32[144,128]{1,0:T(1,128)}', space=vmem, size = 0x12000, scoped, tag = 'internal scratch']
  %s0 = inlined_call_operand.vmem [shape: bf16[2,1024,75], index: 0, kind: input, shape index: {}]
  %s1 = inlined_call_operand.vmem [shape: bf16[75,32], index: 1, kind: input, shape index: {}]
  %s2 = inlined_call_operand.vmem [shape: f32[1,32], index: 2, kind: input, shape index: {}]
  %s3 = inlined_call_operand.vmem [shape: f32[2,16,31,32], index: 3, kind: output, shape index: {}]
  %s4 = sld [smem:[#allocation0]]
  $region45: #{net_forward.4} parent=0
    _
  %s6 = ssub.s32 1, %s4
  %s7 = scalar_select 0, %s6, %s4
  loop: start=0, step=1, limit=4
  $region2: #{net_forward.4} parent=0 // loop_pre_header
    _
  $region3: #{net_forward.4} parent=0 // loop_header
    %s9 = sphi 0, %s13
    %p10 = scmp.ge.s32.totalorder %s9, 4
    %s19 = sphi 0, %s21
    %s22 = sphi 0, %s19
    %s23 = sphi 0, %s22
    %s39 = sphi 0, %s23
    %s43 = sphi 0, %s43
    %s45 = sphi 0, %s43
    %s46 = sphi 0, %s45
    %s60 = sphi 0, %s46
    %s64 = sphi 0, %s64
    %s66 = sphi 0, %s64
    %s67 = sphi 0, %s66
    %s81 = sphi 0, %s67
    %s87 = sphi 0, %s89
    %s90 = sphi 0, %s87
    %s91 = sphi 0, %s90
    %s107 = sphi 0, %s91
  $region4: #{net_forward.4} parent=0 // loop_header_branch
    %12 = sbr.rel (%p10) target = $region8
  $region5: #{net_forward.4} parent=0 // loop_body
    %s14 = ssub.s32 %s9, 1
    %s15 = ssub.s32 %s9, 2
    %s16 = sadd.s32 %s9, 1
    %s17 = ssub.s32 %s9, %s16
    %p18 = scmp.eq.s32.totalorder %s17, 0
    %s20 = sadd.s32 %s19, 1
    %s21 = scalar_select %p18, %s19, %s20
    %p24 = pneg %p18
    %p25 = scmp.eq.s32.totalorder %s9, 1
    %p26 = por %p24, %p25
    %p27 = scmp.ne.s32.totalorder %s19, %s22
    %p28 = scmp.eq.s32.totalorder %s9, 0
    %p29 = por %p27, %p28
    %p30 = scmp.ne.s32.totalorder %s19, %s22
    %p31 = scmp.eq.s32.totalorder %s14, 1
    %p32 = por %p30, %p31
    %p33 = scmp.ne.s32.totalorder %s22, %s23
    %p34 = scmp.eq.s32.totalorder %s14, 0
    %p35 = por %p33, %p34
    %p36 = scmp.ne.s32.totalorder %s22, %s23
    %p37 = scmp.eq.s32.totalorder %s15, 1
    %p38 = por %p36, %p37
    %p40 = scmp.ne.s32.totalorder %s23, %s39
    %p41 = scmp.eq.s32.totalorder %s15, 0
    %p42 = por %p40, %p41
    %s44 = sadd.s32 %s43, 1
    %p47 = scmp.eq.s32.totalorder %s9, 1
    %p48 = scmp.ne.s32.totalorder %s43, %s45
    %p49 = scmp.eq.s32.totalorder %s9, 0
    %p50 = por %p48, %p49
    %p51 = scmp.ne.s32.totalorder %s43, %s45
    %p52 = scmp.eq.s32.totalorder %s14, 1
    %p53 = por %p51, %p52
    %p54 = scmp.ne.s32.totalorder %s45, %s46
    %p55 = scmp.eq.s32.totalorder %s14, 0
    %p56 = por %p54, %p55
    %p57 = scmp.ne.s32.totalorder %s45, %s46
    %p58 = scmp.eq.s32.totalorder %s15, 1
    %p59 = por %p57, %p58
    %p61 = scmp.ne.s32.totalorder %s46, %s60
    %p62 = scmp.eq.s32.totalorder %s15, 0
    %p63 = por %p61, %p62
    %s65 = sadd.s32 %s64, 1
    %p68 = scmp.eq.s32.totalorder %s9, 1
    %p69 = scmp.ne.s32.totalorder %s64, %s66
    %p70 = scmp.eq.s32.totalorder %s9, 0
    %p71 = por %p69, %p70
    %p72 = scmp.ne.s32.totalorder %s64, %s66
    %p73 = scmp.eq.s32.totalorder %s14, 1
    %p74 = por %p72, %p73
    %p75 = scmp.ne.s32.totalorder %s66, %s67
    %p76 = scmp.eq.s32.totalorder %s14, 0
    %p77 = por %p75, %p76
    %p78 = scmp.ne.s32.totalorder %s66, %s67
    %p79 = scmp.eq.s32.totalorder %s15, 1
    %p80 = por %p78, %p79
    %p82 = scmp.ne.s32.totalorder %s67, %s81
    %p83 = scmp.eq.s32.totalorder %s15, 0
    %p84 = por %p82, %p83
    %s85 = ssub.s32 %s9, %s16
    %p86 = scmp.eq.s32.totalorder %s85, 0
    %s88 = sadd.s32 %s87, 1
    %s89 = scalar_select %p86, %s87, %s88
    %p92 = pneg %p86
    %p93 = scmp.eq.s32.totalorder %s9, 1
    %p94 = por %p92, %p93
    %p95 = scmp.ne.s32.totalorder %s87, %s90
    %p96 = scmp.eq.s32.totalorder %s9, 0
    %p97 = por %p95, %p96
    %p98 = scmp.ne.s32.totalorder %s87, %s90
    %p99 = scmp.eq.s32.totalorder %s14, 1
    %p100 = por %p98, %p99
    %p101 = scmp.ne.s32.totalorder %s90, %s91
    %p102 = scmp.eq.s32.totalorder %s14, 0
    %p103 = por %p101, %p102
    %p104 = scmp.ne.s32.totalorder %s90, %s91
    %p105 = scmp.eq.s32.totalorder %s15, 1
    %p106 = por %p104, %p105
    %p108 = scmp.ne.s32.totalorder %s91, %s107
    %p109 = scmp.eq.s32.totalorder %s15, 0
    %p110 = por %p108, %p109
    %p111 = scmp.le.s32.totalorder 1, %s9
    %p112 = scmp.lt.s32.totalorder %s9, 3
    %p113 = pnand %p111, %p112
    %p114 = pneg %p113
    // Predicated region
    $region9: #{net_forward.4} parent=5 // pred_check
      _
    $region10: #{net_forward.4} parent=5 // pred_check_branch
      %116 = sbr.rel (%p113) target = $region12
    $region11: #{net_forward.4} parent=5 // pred_region
      %s117 = ssub.s32 %s9, 1
      // Predicated region
      $region13: #{net_forward.4} parent=11 // pred_check
        %p118 = pneg %p56
      $region14: #{net_forward.4} parent=11 // pred_check_branch
        %120 = sbr.rel (%p118) target = $region16
      $region15: #{net_forward.4} parent=11 // pred_region
        _
      $region16: #{net_forward.4} parent=11 // pred_fallthru
        _
      // Predicated region
      $region17: #{net_forward.4} parent=11 // pred_check
        %p121 = pneg %p77
      $region18: #{net_forward.4} parent=11 // pred_check_branch
        %123 = sbr.rel (%p121) target = $region20
      $region19: #{net_forward.4} parent=11 // pred_region
        _
      $region20: #{net_forward.4} parent=11 // pred_fallthru
        _
    $region12: #{net_forward.4} parent=5 // pred_fallthru
      _
    %p124 = scmp.lt.s32.totalorder %s9, 2
    // Predicated region
    $region21: #{net_forward.4} parent=5 // pred_check
      %p125 = pneg %p124
    $region22: #{net_forward.4} parent=5 // pred_check_branch
      %127 = sbr.rel (%p125) target = $region24
    $region23: #{net_forward.4} parent=5 // pred_region
      // Predicated region
      $region25: #{net_forward.4} parent=23 // pred_check
        %p128 = pneg %p29
      $region26: #{net_forward.4} parent=23 // pred_check_branch
        %130 = sbr.rel (%p128) target = $region28
      $region27: #{net_forward.4} parent=23 // pred_region
        %p131 = scmp.lt.s32.totalorder %s9, 1
        %s132 = scalar_select %p131, %s9, 1
        %s133 = smul.addr %s132, 128
        %s134 = smul.addr %s133, 4
        %s135 = scalar_lea.vmem %s0, %s134
      $region28: #{net_forward.4} parent=23 // pred_fallthru
        _
    $region24: #{net_forward.4} parent=5 // pred_fallthru
      _
    %p136 = scmp.le.s32.totalorder 1, %s9
    %p137 = scmp.lt.s32.totalorder %s9, 3
    %p138 = pnand %p136, %p137
    %p139 = pneg %p138
    // Predicated region
    $region29: #{net_forward.4} parent=5 // pred_check
      _
    $region30: #{net_forward.4} parent=5 // pred_check_branch
      %141 = sbr.rel (%p138) target = $region32
    $region31: #{net_forward.4} parent=5 // pred_region
      %s142 = ssub.s32 %s9, 1
      %p143 = scmp.lt.s32.totalorder %s14, 1
      %s144 = scalar_select %p143, %s14, 1
      %s145 = smul.addr %s144, 128
      %s146 = smul.addr %s145, 4
      %s147 = scalar_lea.vmem %s0, %s146
      %p148 = pneg %p35
      %p149 = pneg %p32
      %p150 = pneg %p56
      %p151 = pneg %p53
      %p152 = pneg %p77
      %p153 = pneg %p74
      %p154 = pneg %p103
      %p155 = pneg %p100
      %p156 = scmp.lt.s32.totalorder %s14, 1
      %s157 = scalar_select %p156, %s14, 1
      %s158 = smul.addr %s157, 64
      %s159 = smul.addr %s158, 8
      %s160 = scalar_lea.vmem %s3, %s159
      %p161 = scmp.lt.s32.totalorder %s14, 1
      %s162 = scalar_select %p161, %s14, 1
      %s163 = smul.addr %s162, 128
      %s164 = smul.addr %s163, 4
      %s165 = scalar_lea.vmem %s0, %s164
      %p166 = scmp.lt.s32.totalorder %s14, 1
      %s167 = scalar_select %p166, %s14, 1
      %s168 = smul.addr %s167, 64
      %s169 = smul.addr %s168, 8
      %s170 = scalar_lea.vmem %s3, %s169
      %v172 = vld [vmem:[%s165] sm:$0xf]
      %v173 = vld [vmem:[%s165 + $0x4] sm:$0xf]
      %v174 = vld [vmem:[%s165 + $0x8] sm:$0xf]
      %v175 = vld [vmem:[%s165 + $0xc] sm:$0xf]
      %v176 = vld [vmem:[%s165 + $0x10] sm:$0xf]
      %v177 = vld [vmem:[%s165 + $0x14] sm:$0xf]
      %v178 = vld [vmem:[%s165 + $0x18] sm:$0xf]
      %v179 = vld [vmem:[%s165 + $0x1c] sm:$0xf]
      %v180 = vld [vmem:[%s165 + $0x20] sm:$0xf]
      %v181 = vld [vmem:[%s165 + $0x24] sm:$0xf]
      %v182 = vld [vmem:[%s165 + $0x28] sm:$0xf]
      %v183 = vld [vmem:[%s165 + $0x2c] sm:$0xf]
      %v184 = vld [vmem:[%s165 + $0x30] sm:$0xf]
      %v185 = vld [vmem:[%s165 + $0x34] sm:$0xf]
      %v186 = vld [vmem:[%s165 + $0x38] sm:$0xf]
      %v187 = vld [vmem:[%s165 + $0x3c] sm:$0xf]
      %v188 = vld [vmem:[%s165 + $0x40] sm:$0xf]
      %v189 = vld [vmem:[%s165 + $0x44] sm:$0xf]
      %v190 = vld [vmem:[%s165 + $0x48] sm:$0xf]
      %v191 = vld [vmem:[%s165 + $0x4c] sm:$0xf]
      %v192 = vld [vmem:[%s165 + $0x50] sm:$0xf]
      %v193 = vld [vmem:[%s165 + $0x54] sm:$0xf]
      %v194 = vld [vmem:[%s165 + $0x58] sm:$0xf]
      %v195 = vld [vmem:[%s165 + $0x5c] sm:$0xf]
      %v196 = vld [vmem:[%s165 + $0x60] sm:$0xf]
      %v197 = vld [vmem:[%s165 + $0x64] sm:$0xf]
      %v198 = vld [vmem:[%s165 + $0x68] sm:$0xf]
      %v199 = vld [vmem:[%s165 + $0x6c] sm:$0xf]
      %v200 = vld [vmem:[%s165 + $0x70] sm:$0xf]
      %v201 = vld [vmem:[%s165 + $0x74] sm:$0xf]
      %v202 = vld [vmem:[%s165 + $0x78] sm:$0xf]
      %v203 = vld [vmem:[%s165 + $0x7c] sm:$0xf]
      %v204 = vld [vmem:[%s165 + $0x80] sm:$0xf]
      %v205 = vld [vmem:[%s165 + $0x84] sm:$0xf]
      %v206 = vld [vmem:[%s165 + $0x88] sm:$0xf]
      %v207 = vld [vmem:[%s165 + $0x8c] sm:$0xf]
      %v208 = vld [vmem:[%s165 + $0x90] sm:$0xf]
      %v209 = vld [vmem:[%s165 + $0x94] sm:$0xf]
      %v210 = vld [vmem:[%s165 + $0x98] sm:$0xf]
      %v211 = vld [vmem:[%s165 + $0x9c] sm:$0xf]
      %v212 = vld [vmem:[%s165 + $0xa0] sm:$0xf]
      %v213 = vld [vmem:[%s165 + $0xa4] sm:$0xf]
      %v214 = vld [vmem:[%s165 + $0xa8] sm:$0xf]
      %v215 = vld [vmem:[%s165 + $0xac] sm:$0xf]
      %v216 = vld [vmem:[%s165 + $0xb0] sm:$0xf]
      %v217 = vld [vmem:[%s165 + $0xb4] sm:$0xf]
      %v218 = vld [vmem:[%s165 + $0xb8] sm:$0xf]
      %v219 = vld [vmem:[%s165 + $0xbc] sm:$0xf]
      %v220 = vld [vmem:[%s165 + $0xc0] sm:$0xf]
      %v221 = vld [vmem:[%s165 + $0xc4] sm:$0xf]
      %v222 = vld [vmem:[%s165 + $0xc8] sm:$0xf]
      %v223 = vld [vmem:[%s165 + $0xcc] sm:$0xf]
      %v224 = vld [vmem:[%s165 + $0xd0] sm:$0xf]
      %v225 = vld [vmem:[%s165 + $0xd4] sm:$0xf]
      %v226 = vld [vmem:[%s165 + $0xd8] sm:$0xf]
      %v227 = vld [vmem:[%s165 + $0xdc] sm:$0xf]
      %v228 = vld [vmem:[%s165 + $0xe0] sm:$0xf]
      %v229 = vld [vmem:[%s165 + $0xe4] sm:$0xf]
      %v230 = vld [vmem:[%s165 + $0xe8] sm:$0xf]
      %v231 = vld [vmem:[%s165 + $0xec] sm:$0xf]
      %v232 = vld [vmem:[%s165 + $0xf0] sm:$0xf]
      %v233 = vld [vmem:[%s165 + $0xf4] sm:$0xf]
      %v234 = vld [vmem:[%s165 + $0xf8] sm:$0xf]
      %v235 = vld [vmem:[%s165 + $0xfc] sm:$0xf]
      %v236 = vld [vmem:[%s165 + $0x100] sm:$0xf]
      %v237 = vld [vmem:[%s165 + $0x104] sm:$0xf]
      %v238 = vld [vmem:[%s165 + $0x108] sm:$0xf]
      %v239 = vld [vmem:[%s165 + $0x10c] sm:$0xf]
      %v240 = vld [vmem:[%s165 + $0x110] sm:$0xf]
      %v241 = vld [vmem:[%s165 + $0x114] sm:$0xf]
      %v242 = vld [vmem:[%s165 + $0x118] sm:$0xf]
      %v243 = vld [vmem:[%s165 + $0x11c] sm:$0xf]
      %v244 = vld [vmem:[%s165 + $0x120] sm:$0xf]
      %v245 = vld [vmem:[%s165 + $0x124] sm:$0xf]
      %v246 = vld [vmem:[%s165 + $0x128] sm:$0xf]
      %v247 = vld [vmem:[%s165 + $0x12c] sm:$0xf]
      %v248 = vld [vmem:[%s165 + $0x130] sm:$0xf]
      %v249 = vld [vmem:[%s165 + $0x134] sm:$0xf]
      %v250 = vld [vmem:[%s165 + $0x138] sm:$0xf]
      %v251 = vld [vmem:[%s165 + $0x13c] sm:$0xf]
      %v252 = vld [vmem:[%s165 + $0x140] sm:$0xf]
      %v253 = vld [vmem:[%s165 + $0x144] sm:$0xf]
      %v254 = vld [vmem:[%s165 + $0x148] sm:$0xf]
      %v255 = vld [vmem:[%s165 + $0x14c] sm:$0xf]
      %v256 = vld [vmem:[%s165 + $0x150] sm:$0xf]
      %v257 = vld [vmem:[%s165 + $0x154] sm:$0xf]
      %v258 = vld [vmem:[%s165 + $0x158] sm:$0xf]
      %v259 = vld [vmem:[%s165 + $0x15c] sm:$0xf]
      %v260 = vld [vmem:[%s165 + $0x160] sm:$0xf]
      %v261 = vld [vmem:[%s165 + $0x164] sm:$0xf]
      %v262 = vld [vmem:[%s165 + $0x168] sm:$0xf]
      %v263 = vld [vmem:[%s165 + $0x16c] sm:$0xf]
      %v264 = vld [vmem:[%s165 + $0x170] sm:$0xf]
      %v265 = vld [vmem:[%s165 + $0x174] sm:$0xf]
      %v266 = vld [vmem:[%s165 + $0x178] sm:$0xf]
      %v267 = vld [vmem:[%s165 + $0x17c] sm:$0xf]
      %v268 = vld [vmem:[%s165 + $0x180] sm:$0xf]
      %v269 = vld [vmem:[%s165 + $0x184] sm:$0xf]
      %v270 = vld [vmem:[%s165 + $0x188] sm:$0xf]
      %v271 = vld [vmem:[%s165 + $0x18c] sm:$0xf]
      %v272 = vld [vmem:[%s165 + $0x190] sm:$0xf]
      %v273 = vld [vmem:[%s165 + $0x194] sm:$0xf]
      %v274 = vld [vmem:[%s165 + $0x198] sm:$0xf]
      %v275 = vld [vmem:[%s165 + $0x19c] sm:$0xf]
      %v276 = vld [vmem:[%s165 + $0x1a0] sm:$0xf]
      %v277 = vld [vmem:[%s165 + $0x1a4] sm:$0xf]
      %v278 = vld [vmem:[%s165 + $0x1a8] sm:$0xf]
      %v279 = vld [vmem:[%s165 + $0x1ac] sm:$0xf]
      %v280 = vld [vmem:[%s165 + $0x1b0] sm:$0xf]
      %v281 = vld [vmem:[%s165 + $0x1b4] sm:$0xf]
      %v282 = vld [vmem:[%s165 + $0x1b8] sm:$0xf]
      %v283 = vld [vmem:[%s165 + $0x1bc] sm:$0xf]
      %v284 = vld [vmem:[%s165 + $0x1c0] sm:$0xf]
      %v285 = vld [vmem:[%s165 + $0x1c4] sm:$0xf]
      %v286 = vld [vmem:[%s165 + $0x1c8] sm:$0xf]
      %v287 = vld [vmem:[%s165 + $0x1cc] sm:$0xf]
      %v288 = vld [vmem:[%s165 + $0x1d0] sm:$0xf]
      %v289 = vld [vmem:[%s165 + $0x1d4] sm:$0xf]
      %v290 = vld [vmem:[%s165 + $0x1d8] sm:$0xf]
      %v291 = vld [vmem:[%s165 + $0x1dc] sm:$0xf]
      %v292 = vld [vmem:[%s165 + $0x1e0] sm:$0xf]
      %v293 = vld [vmem:[%s165 + $0x1e4] sm:$0xf]
      %v294 = vld [vmem:[%s165 + $0x1e8] sm:$0xf]
      %v295 = vld [vmem:[%s165 + $0x1ec] sm:$0xf]
      %v296 = vld [vmem:[%s165 + $0x1f0] sm:$0xf]
      %v297 = vld [vmem:[%s165 + $0x1f4] sm:$0xf]
      %v298 = vld [vmem:[%s165 + $0x1f8] sm:$0xf]
      %v299 = vld [vmem:[%s165 + $0x1fc] sm:$0xf]
      %v300 = vld [vmem:[%s1] sm:$0xf]
      %v301 = vld [vmem:[%s1 + $0x4] sm:$0xf]
      %v302 = vld [vmem:[%s1 + $0x8] sm:$0xf]
      %v303 = vld [vmem:[%s1 + $0xc] sm:$0xf]
      %v304 = vld [vmem:[%s1 + $0x10] sm:$0xf]
      %v305 = vld [vmem:[%s1 + $0x14] sm:$0xf]
      %v306 = vld [vmem:[%s1 + $0x18] sm:$0xf]
      %v307 = vld [vmem:[%s1 + $0x1c] sm:$0xf]
      %v308 = vld [vmem:[%s1 + $0x20] sm:$0xf]
      %v309 = vld [vmem:[%s1 + $0x24] sm:$0x3]
      %v310 = vld [vmem:[%s2] sm:$0x1]
      %v312 = vlaneseq
      %v313 = vshrl.u32 %v312, 7
      %v314 = vsub.s32 0, %v313
      %v315 = vrot.slane %v310, %v314
      %v445 = vunpack.c.l.b16 %v172
      %v446 = vunpack.c.l.b16 %v173
      %v447 = vunpack.c.l.b16 %v174
      %v448 = vunpack.c.l.b16 %v175
      %v449 = vunpack.c.l.b16 %v176
      %v450 = vunpack.c.l.b16 %v177
      %v451 = vunpack.c.l.b16 %v178
      %v452 = vunpack.c.l.b16 %v179
      %v453 = vunpack.c.l.b16 %v180
      %v454 = vunpack.c.l.b16 %v181
      %v455 = vunpack.c.l.b16 %v182
      %v456 = vunpack.c.l.b16 %v183
      %v457 = vunpack.c.l.b16 %v184
      %v458 = vunpack.c.l.b16 %v185
      %v459 = vunpack.c.l.b16 %v186
      %v460 = vunpack.c.l.b16 %v187
      %v461 = vunpack.c.l.b16 %v188
      %v462 = vunpack.c.l.b16 %v189
      %v463 = vunpack.c.l.b16 %v190
      %v464 = vunpack.c.l.b16 %v191
      %v465 = vunpack.c.l.b16 %v192
      %v466 = vunpack.c.l.b16 %v193
      %v467 = vunpack.c.l.b16 %v194
      %v468 = vunpack.c.l.b16 %v195
      %v469 = vunpack.c.l.b16 %v196
      %v470 = vunpack.c.l.b16 %v197
      %v471 = vunpack.c.l.b16 %v198
      %v472 = vunpack.c.l.b16 %v199
      %v473 = vunpack.c.l.b16 %v200
      %v474 = vunpack.c.l.b16 %v201
      %v475 = vunpack.c.l.b16 %v202
      %v476 = vunpack.c.l.b16 %v203
      %v477 = vunpack.c.l.b16 %v204
      %v478 = vunpack.c.l.b16 %v205
      %v479 = vunpack.c.l.b16 %v206
      %v480 = vunpack.c.l.b16 %v207
      %v481 = vunpack.c.l.b16 %v208
      %v482 = vunpack.c.l.b16 %v209
      %v483 = vunpack.c.l.b16 %v210
      %v484 = vunpack.c.l.b16 %v211
      %v485 = vunpack.c.l.b16 %v212
      %v486 = vunpack.c.l.b16 %v213
      %v487 = vunpack.c.l.b16 %v214
      %v488 = vunpack.c.l.b16 %v215
      %v489 = vunpack.c.l.b16 %v216
      %v490 = vunpack.c.l.b16 %v217
      %v491 = vunpack.c.l.b16 %v218
      %v492 = vunpack.c.l.b16 %v219
      %v493 = vunpack.c.l.b16 %v220
      %v494 = vunpack.c.l.b16 %v221
      %v495 = vunpack.c.l.b16 %v222
      %v496 = vunpack.c.l.b16 %v223
      %v497 = vunpack.c.l.b16 %v224
      %v498 = vunpack.c.l.b16 %v225
      %v499 = vunpack.c.l.b16 %v226
      %v500 = vunpack.c.l.b16 %v227
      %v501 = vunpack.c.l.b16 %v228
      %v502 = vunpack.c.l.b16 %v229
      %v503 = vunpack.c.l.b16 %v230
      %v504 = vunpack.c.l.b16 %v231
      %v505 = vunpack.c.l.b16 %v232
      %v506 = vunpack.c.l.b16 %v233
      %v507 = vunpack.c.l.b16 %v234
      %v508 = vunpack.c.l.b16 %v235
      %v509 = vunpack.c.l.b16 %v236
      %v510 = vunpack.c.l.b16 %v237
      %v511 = vunpack.c.l.b16 %v238
      %v512 = vunpack.c.l.b16 %v239
      %v513 = vunpack.c.l.b16 %v240
      %v514 = vunpack.c.l.b16 %v241
      %v515 = vunpack.c.l.b16 %v242
      %v516 = vunpack.c.l.b16 %v243
      %v517 = vunpack.c.l.b16 %v244
      %v518 = vunpack.c.l.b16 %v245
      %v519 = vunpack.c.l.b16 %v246
      %v520 = vunpack.c.l.b16 %v247
      %v521 = vunpack.c.l.b16 %v248
      %v522 = vunpack.c.l.b16 %v249
      %v523 = vunpack.c.l.b16 %v250
      %v524 = vunpack.c.l.b16 %v251
      %v525 = vunpack.c.l.b16 %v252
      %v526 = vunpack.c.l.b16 %v253
      %v527 = vunpack.c.l.b16 %v254
      %v528 = vunpack.c.l.b16 %v255
      %v529 = vunpack.c.l.b16 %v256
      %v530 = vunpack.c.l.b16 %v257
      %v531 = vunpack.c.l.b16 %v258
      %v532 = vunpack.c.l.b16 %v259
      %v533 = vunpack.c.l.b16 %v260
      %v534 = vunpack.c.l.b16 %v261
      %v535 = vunpack.c.l.b16 %v262
      %v536 = vunpack.c.l.b16 %v263
      %v537 = vunpack.c.l.b16 %v264
      %v538 = vunpack.c.l.b16 %v265
      %v539 = vunpack.c.l.b16 %v266
      %v540 = vunpack.c.l.b16 %v267
      %v541 = vunpack.c.l.b16 %v268
      %v542 = vunpack.c.l.b16 %v269
      %v543 = vunpack.c.l.b16 %v270
      %v544 = vunpack.c.l.b16 %v271
      %v545 = vunpack.c.l.b16 %v272
      %v546 = vunpack.c.l.b16 %v273
      %v547 = vunpack.c.l.b16 %v274
      %v548 = vunpack.c.l.b16 %v275
      %v549 = vunpack.c.l.b16 %v276
      %v550 = vunpack.c.l.b16 %v277
      %v551 = vunpack.c.l.b16 %v278
      %v552 = vunpack.c.l.b16 %v279
      %v553 = vunpack.c.l.b16 %v280
      %v554 = vunpack.c.l.b16 %v281
      %v555 = vunpack.c.l.b16 %v282
      %v556 = vunpack.c.l.b16 %v283
      %v557 = vunpack.c.l.b16 %v284
      %v558 = vunpack.c.l.b16 %v285
      %v559 = vunpack.c.l.b16 %v286
      %v560 = vunpack.c.l.b16 %v287
      %v561 = vunpack.c.l.b16 %v288
      %v562 = vunpack.c.l.b16 %v289
      %v563 = vunpack.c.l.b16 %v290
      %v564 = vunpack.c.l.b16 %v291
      %v565 = vunpack.c.l.b16 %v292
      %v566 = vunpack.c.l.b16 %v293
      %v567 = vunpack.c.l.b16 %v294
      %v568 = vunpack.c.l.b16 %v295
      %v569 = vunpack.c.l.b16 %v296
      %v570 = vunpack.c.l.b16 %v297
      %v571 = vunpack.c.l.b16 %v298
      %v572 = vunpack.c.l.b16 %v299
      %v573 = vpack.c.b16 %v446, %v445
      %v574 = vpack.c.b16 %v448, %v447
      %v575 = vpack.c.b16 %v450, %v449
      %v576 = vpack.c.b16 %v452, %v451
      %v577 = vpack.c.b16 %v454, %v453
      %v578 = vpack.c.b16 %v456, %v455
      %v579 = vpack.c.b16 %v458, %v457
      %v580 = vpack.c.b16 %v460, %v459
      %v581 = vpack.c.b16 %v462, %v461
      %v582 = vpack.c.b16 %v464, %v463
      %v583 = vpack.c.b16 %v466, %v465
      %v584 = vpack.c.b16 %v468, %v467
      %v585 = vpack.c.b16 %v470, %v469
      %v586 = vpack.c.b16 %v472, %v471
      %v587 = vpack.c.b16 %v474, %v473
      %v588 = vpack.c.b16 %v476, %v475
      %v589 = vpack.c.b16 %v478, %v477
      %v590 = vpack.c.b16 %v480, %v479
      %v591 = vpack.c.b16 %v482, %v481
      %v592 = vpack.c.b16 %v484, %v483
      %v593 = vpack.c.b16 %v486, %v485
      %v594 = vpack.c.b16 %v488, %v487
      %v595 = vpack.c.b16 %v490, %v489
      %v596 = vpack.c.b16 %v492, %v491
      %v597 = vpack.c.b16 %v494, %v493
      %v598 = vpack.c.b16 %v496, %v495
      %v599 = vpack.c.b16 %v498, %v497
      %v600 = vpack.c.b16 %v500, %v499
      %v601 = vpack.c.b16 %v502, %v501
      %v602 = vpack.c.b16 %v504, %v503
      %v603 = vpack.c.b16 %v506, %v505
      %v604 = vpack.c.b16 %v508, %v507
      %v605 = vpack.c.b16 %v510, %v509
      %v606 = vpack.c.b16 %v512, %v511
      %v607 = vpack.c.b16 %v514, %v513
      %v608 = vpack.c.b16 %v516, %v515
      %v609 = vpack.c.b16 %v518, %v517
      %v610 = vpack.c.b16 %v520, %v519
      %v611 = vpack.c.b16 %v522, %v521
      %v612 = vpack.c.b16 %v524, %v523
      %v613 = vpack.c.b16 %v526, %v525
      %v614 = vpack.c.b16 %v528, %v527
      %v615 = vpack.c.b16 %v530, %v529
      %v616 = vpack.c.b16 %v532, %v531
      %v617 = vpack.c.b16 %v534, %v533
      %v618 = vpack.c.b16 %v536, %v535
      %v619 = vpack.c.b16 %v538, %v537
      %v620 = vpack.c.b16 %v540, %v539
      %v621 = vpack.c.b16 %v542, %v541
      %v622 = vpack.c.b16 %v544, %v543
      %v623 = vpack.c.b16 %v546, %v545
      %v624 = vpack.c.b16 %v548, %v547
      %v625 = vpack.c.b16 %v550, %v549
      %v626 = vpack.c.b16 %v552, %v551
      %v627 = vpack.c.b16 %v554, %v553
      %v628 = vpack.c.b16 %v556, %v555
      %v629 = vpack.c.b16 %v558, %v557
      %v630 = vpack.c.b16 %v560, %v559
      %v631 = vpack.c.b16 %v562, %v561
      %v632 = vpack.c.b16 %v564, %v563
      %v633 = vpack.c.b16 %v566, %v565
      %v634 = vpack.c.b16 %v568, %v567
      %v635 = vpack.c.b16 %v570, %v569
      %v636 = vpack.c.b16 %v572, %v571
      %v647 = vunpack.c.l.b16 %v300
      %v648 = vunpack.c.l.b16 %v301
      %v649 = vunpack.c.l.b16 %v302
      %v650 = vunpack.c.l.b16 %v303
      %v651 = vunpack.c.l.b16 %v304
      %v652 = vunpack.c.l.b16 %v305
      %v653 = vunpack.c.l.b16 %v306
      %v654 = vunpack.c.l.b16 %v307
      %v655 = vunpack.c.l.b16 %v308
      %v656 = vunpack.c.l.b16 %v309
      %v657 = vpack.c.b16 %v648, %v647
      %v658 = vpack.c.b16 %v650, %v649
      %v659 = vpack.c.b16 %v652, %v651
      %v660 = vpack.c.b16 %v654, %v653
      %v661 = vpack.c.b16 %v656, %v655
      %vm666 = vcmask 613376
      %v668 = vsel %vm666, %v573, 0
      %v671 = vsel %vm666, %v574, 0
      %v674 = vsel %vm666, %v575, 0
      %v677 = vsel %vm666, %v576, 0
      %v680 = vsel %vm666, %v577, 0
      %v683 = vsel %vm666, %v578, 0
      %v686 = vsel %vm666, %v579, 0
      %v689 = vsel %vm666, %v580, 0
      %v692 = vsel %vm666, %v581, 0
      %v695 = vsel %vm666, %v582, 0
      %v698 = vsel %vm666, %v583, 0
      %v701 = vsel %vm666, %v584, 0
      %v704 = vsel %vm666, %v585, 0
      %v707 = vsel %vm666, %v586, 0
      %v710 = vsel %vm666, %v587, 0
      %v713 = vsel %vm666, %v588, 0
      %v716 = vsel %vm666, %v589, 0
      %v719 = vsel %vm666, %v590, 0
      %v722 = vsel %vm666, %v591, 0
      %v725 = vsel %vm666, %v592, 0
      %v728 = vsel %vm666, %v593, 0
      %v731 = vsel %vm666, %v594, 0
      %v734 = vsel %vm666, %v595, 0
      %v737 = vsel %vm666, %v596, 0
      %v740 = vsel %vm666, %v597, 0
      %v743 = vsel %vm666, %v598, 0
      %v746 = vsel %vm666, %v599, 0
      %v749 = vsel %vm666, %v600, 0
      %v752 = vsel %vm666, %v601, 0
      %v755 = vsel %vm666, %v602, 0
      %v758 = vsel %vm666, %v603, 0
      %v761 = vsel %vm666, %v604, 0
      %v764 = vsel %vm666, %v605, 0
      %v767 = vsel %vm666, %v606, 0
      %v770 = vsel %vm666, %v607, 0
      %v773 = vsel %vm666, %v608, 0
      %v776 = vsel %vm666, %v609, 0
      %v779 = vsel %vm666, %v610, 0
      %v782 = vsel %vm666, %v611, 0
      %v785 = vsel %vm666, %v612, 0
      %v788 = vsel %vm666, %v613, 0
      %v791 = vsel %vm666, %v614, 0
      %v794 = vsel %vm666, %v615, 0
      %v797 = vsel %vm666, %v616, 0
      %v800 = vsel %vm666, %v617, 0
      %v803 = vsel %vm666, %v618, 0
      %v806 = vsel %vm666, %v619, 0
      %v809 = vsel %vm666, %v620, 0
      %v812 = vsel %vm666, %v621, 0
      %v815 = vsel %vm666, %v622, 0
      %v818 = vsel %vm666, %v623, 0
      %v821 = vsel %vm666, %v624, 0
      %v824 = vsel %vm666, %v625, 0
      %v827 = vsel %vm666, %v626, 0
      %v830 = vsel %vm666, %v627, 0
      %v833 = vsel %vm666, %v628, 0
      %v836 = vsel %vm666, %v629, 0
      %v839 = vsel %vm666, %v630, 0
      %v842 = vsel %vm666, %v631, 0
      %v845 = vsel %vm666, %v632, 0
      %v848 = vsel %vm666, %v633, 0
      %v851 = vsel %vm666, %v634, 0
      %v854 = vsel %vm666, %v635, 0
      %v857 = vsel %vm666, %v636, 0
      %vm859 = vcmask 1044480
      %vm860 = vcmask 1045504
      %v861 = vsel %vm859, 4294967295, 65535
      %v862 = vsel %vm860, %v861, 0
      %v864 = vand.u32 %v661, %v862
      %866 = vmatprep.subr.bf16.mxu0 0
      %867 = vmatpush1.bf16.msra.mxu0 %v657
      %868 = vmatprep.subr.bf16.mxu0 0
      %869 = vmatpush1.bf16.msra.mxu0 %v658
      %870 = vmatprep.subr.bf16.mxu0 0
      %871 = vmatpush1.bf16.msra.mxu0 %v659
      %872 = vmatprep.subr.bf16.mxu0 0
      %873 = vmatpush1.bf16.msra.mxu0 %v660
      %874 = vmatprep.subr.bf16.mxu0 0
      %875 = vmatpush1.bf16.msra.mxu0 %v864
      %876 = vmatprep.subr.bf16.mxu0 0
      %877 = vmatpush1.bf16.msra.mxu0 0
      %878 = vmatprep.subr.bf16.mxu0 0
      %879 = vmatpush1.bf16.msra.mxu0 0
      %880 = vmatprep.subr.bf16.mxu0 0
      %881 = vmatpush1.bf16.msra.mxu0 0
      %882 = vmatprep.subr.bf16.mxu0 0
      %883 = vmatpush1.bf16.msra.mxu0 0
      %884 = vmatprep.subr.bf16.mxu0 0
      %885 = vmatpush1.bf16.msra.mxu0 0
      %886 = vmatprep.subr.bf16.mxu0 0
      %887 = vmatpush1.bf16.msra.mxu0 0
      %888 = vmatprep.subr.bf16.mxu0 0
      %889 = vmatpush1.bf16.msra.mxu0 0
      %890 = vmatprep.subr.bf16.mxu0 0
      %891 = vmatpush1.bf16.msra.mxu0 0
      %892 = vmatprep.subr.bf16.mxu0 0
      %893 = vmatpush1.bf16.msra.mxu0 0
      %894 = vmatprep.subr.bf16.mxu0 0
      %895 = vmatpush1.bf16.msra.mxu0 0
      %896 = vmatprep.subr.bf16.mxu0 0
      %897 = vmatpush1.bf16.msra.mxu0 0
      %898 = vmatprep.mubr.bf16.mxu0 0
      %899 = vmatmul.mubr.bf16.gmra.mrb[0].mxu0 %v668
      %v900 = vpop.f32.mrb[0].mxu0
      %v901 = vadd.f32 %v315, %v900
      %v902 = vpop.f32.mrb[0].mxu0
      %v903 = vpop.f32.mrb[0].mxu0
      %v904 = vadd.f32 %v315, %v903
      %v905 = vpop.f32.mrb[0].mxu0
      %906 = vmatprep.mubr.bf16.mxu0 0
      %907 = vmatmul.mubr.bf16.gmra.mrb[0].mxu0 %v671
      %v908 = vpop.f32.mrb[0].mxu0
      %v909 = vadd.f32 %v315, %v908
      %v910 = vpop.f32.mrb[0].mxu0
      %v911 = vpop.f32.mrb[0].mxu0
      %v912 = vadd.f32 %v315, %v911
      %v913 = vpop.f32.mrb[0].mxu0
      %914 = vmatprep.mubr.bf16.mxu0 0
      %915 = vmatmul.mubr.bf16.gmra.mrb[0].mxu0 %v674
      %v916 = vpop.f32.mrb[0].mxu0
      %v917 = vadd.f32 %v315, %v916
      %v918 = vpop.f32.mrb[0].mxu0
      %v919 = vpop.f32.mrb[0].mxu0
      %v920 = vadd.f32 %v315, %v919
      %v921 = vpop.f32.mrb[0].mxu0
      %922 = vmatprep.mubr.bf16.mxu0 0
      %923 = vmatmul.mubr.bf16.gmra.mrb[0].mxu0 %v677
      %v924 = vpop.f32.mrb[0].mxu0
      %v925 = vadd.f32 %v315, %v924
      %v926 = vpop.f32.mrb[0].mxu0
      %v927 = vpop.f32.mrb[0].mxu0
      %v928 = vadd.f32 %v315, %v927
      %v929 = vpop.f32.mrb[0].mxu0
      %930 = vmatprep.mubr.bf16.mxu0 0
      %931 = vmatmul.mubr.bf16.gmra.mrb[0].mxu0 %v680
      %v932 = vpop.f32.mrb[0].mxu0
      %v933 = vadd.f32 %v315, %v932
      %v934 = vpop.f32.mrb[0].mxu0
      %v935 = vpop.f32.mrb[0].mxu0
      %v936 = vadd.f32 %v315, %v935
      %v937 = vpop.f32.mrb[0].mxu0
      %938 = vmatprep.mubr.bf16.mxu0 0
      %939 = vmatmul.mubr.bf16.gmra.mrb[0].mxu0 %v683
      %v940 = vpop.f32.mrb[0].mxu0
      %v941 = vadd.f32 %v315, %v940
      %v942 = vpop.f32.mrb[0].mxu0
      %v943 = vpop.f32.mrb[0].mxu0
      %v944 = vadd.f32 %v315, %v943
      %v945 = vpop.f32.mrb[0].mxu0
      %946 = vmatprep.mubr.bf16.mxu0 0
      %947 = vmatmul.mubr.bf16.gmra.mrb[0].mxu0 %v686
      %v948 = vpop.f32.mrb[0].mxu0
      %v949 = vadd.f32 %v315, %v948
      %v950 = vpop.f32.mrb[0].mxu0
      %v951 = vpop.f32.mrb[0].mxu0
      %v952 = vadd.f32 %v315, %v951
      %v953 = vpop.f32.mrb[0].mxu0
      %954 = vmatprep.mubr.bf16.mxu0 0
      %955 = vmatmul.mubr.bf16.gmra.mrb[0].mxu0 %v689
      %v956 = vpop.f32.mrb[0].mxu0
      %v957 = vadd.f32 %v315, %v956
      %v958 = vpop.f32.mrb[0].mxu0
      %v959 = vpop.f32.mrb[0].mxu0
      %v960 = vadd.f32 %v315, %v959
      %v961 = vpop.f32.mrb[0].mxu0
      %962 = vmatprep.mubr.bf16.mxu0 0
      %963 = vmatmul.mubr.bf16.gmra.mrb[0].mxu0 %v692
      %v964 = vpop.f32.mrb[0].mxu0
      %v965 = vadd.f32 %v315, %v964
      %v966 = vpop.f32.mrb[0].mxu0
      %v967 = vpop.f32.mrb[0].mxu0
      %v968 = vadd.f32 %v315, %v967
      %v969 = vpop.f32.mrb[0].mxu0
      %970 = vmatprep.mubr.bf16.mxu0 0
      %971 = vmatmul.mubr.bf16.gmra.mrb[0].mxu0 %v695
      %v972 = vpop.f32.mrb[0].mxu0
      %v973 = vadd.f32 %v315, %v972
      %v974 = vpop.f32.mrb[0].mxu0
      %v975 = vpop.f32.mrb[0].mxu0
      %v976 = vadd.f32 %v315, %v975
      %v977 = vpop.f32.mrb[0].mxu0
      %978 = vmatprep.mubr.bf16.mxu0 0
      %979 = vmatmul.mubr.bf16.gmra.mrb[0].mxu0 %v698
      %v980 = vpop.f32.mrb[0].mxu0
      %v981 = vadd.f32 %v315, %v980
      %v982 = vpop.f32.mrb[0].mxu0
      %v983 = vpop.f32.mrb[0].mxu0
      %v984 = vadd.f32 %v315, %v983
      %v985 = vpop.f32.mrb[0].mxu0
      %986 = vmatprep.mubr.bf16.mxu0 0
      %987 = vmatmul.mubr.bf16.gmra.mrb[0].mxu0 %v701
      %v988 = vpop.f32.mrb[0].mxu0
      %v989 = vadd.f32 %v315, %v988
      %v990 = vpop.f32.mrb[0].mxu0
      %v991 = vpop.f32.mrb[0].mxu0
      %v992 = vadd.f32 %v315, %v991
      %v993 = vpop.f32.mrb[0].mxu0
      %994 = vmatprep.mubr.bf16.mxu0 0
      %995 = vmatmul.mubr.bf16.gmra.mrb[0].mxu0 %v704
      %v996 = vpop.f32.mrb[0].mxu0
      %v997 = vadd.f32 %v315, %v996
      %v998 = vpop.f32.mrb[0].mxu0
      %v999 = vpop.f32.mrb[0].mxu0
      %v1000 = vadd.f32 %v315, %v999
      %v1001 = vpop.f32.mrb[0].mxu0
      %1002 = vmatprep.mubr.bf16.mxu0 0
      %1003 = vmatmul.mubr.bf16.gmra.mrb[0].mxu0 %v707
      %v1004 = vpop.f32.mrb[0].mxu0
      %v1005 = vadd.f32 %v315, %v1004
      %v1006 = vpop.f32.mrb[0].mxu0
      %v1007 = vpop.f32.mrb[0].mxu0
      %v1008 = vadd.f32 %v315, %v1007
      %v1009 = vpop.f32.mrb[0].mxu0
      %1010 = vmatprep.mubr.bf16.mxu0 0
      %1011 = vmatmul.mubr.bf16.gmra.mrb[0].mxu0 %v710
      %v1012 = vpop.f32.mrb[0].mxu0
      %v1013 = vadd.f32 %v315, %v1012
      %v1014 = vpop.f32.mrb[0].mxu0
      %v1015 = vpop.f32.mrb[0].mxu0
      %v1016 = vadd.f32 %v315, %v1015
      %v1017 = vpop.f32.mrb[0].mxu0
      %1018 = vmatprep.mubr.bf16.mxu0 0
      %1019 = vmatmul.mubr.bf16.gmra.mrb[0].mxu0 %v713
      %v1020 = vpop.f32.mrb[0].mxu0
      %v1021 = vadd.f32 %v315, %v1020
      %v1022 = vpop.f32.mrb[0].mxu0
      %v1023 = vpop.f32.mrb[0].mxu0
      %v1024 = vadd.f32 %v315, %v1023
      %v1025 = vpop.f32.mrb[0].mxu0
      %1026 = vmatprep.mubr.bf16.mxu0 0
      %1027 = vmatmul.mubr.bf16.gmra.mrb[0].mxu0 %v716
      %v1028 = vpop.f32.mrb[0].mxu0
      %v1029 = vadd.f32 %v315, %v1028
      %v1030 = vpop.f32.mrb[0].mxu0
      %v1031 = vpop.f32.mrb[0].mxu0
      %v1032 = vadd.f32 %v315, %v1031
      %v1033 = vpop.f32.mrb[0].mxu0
      %1034 = vmatprep.mubr.bf16.mxu0 0
      %1035 = vmatmul.mubr.bf16.gmra.mrb[0].mxu0 %v719
      %v1036 = vpop.f32.mrb[0].mxu0
      %v1037 = vadd.f32 %v315, %v1036
      %v1038 = vpop.f32.mrb[0].mxu0
      %v1039 = vpop.f32.mrb[0].mxu0
      %v1040 = vadd.f32 %v315, %v1039
      %v1041 = vpop.f32.mrb[0].mxu0
      %1042 = vmatprep.mubr.bf16.mxu0 0
      %1043 = vmatmul.mubr.bf16.gmra.mrb[0].mxu0 %v722
      %v1044 = vpop.f32.mrb[0].mxu0
      %v1045 = vadd.f32 %v315, %v1044
      %v1046 = vpop.f32.mrb[0].mxu0
      %v1047 = vpop.f32.mrb[0].mxu0
      %v1048 = vadd.f32 %v315, %v1047
      %v1049 = vpop.f32.mrb[0].mxu0
      %1050 = vmatprep.mubr.bf16.mxu0 0
      %1051 = vmatmul.mubr.bf16.gmra.mrb[0].mxu0 %v725
      %v1052 = vpop.f32.mrb[0].mxu0
      %v1053 = vadd.f32 %v315, %v1052
      %v1054 = vpop.f32.mrb[0].mxu0
      %v1055 = vpop.f32.mrb[0].mxu0
      %v1056 = vadd.f32 %v315, %v1055
      %v1057 = vpop.f32.mrb[0].mxu0
      %1058 = vmatprep.mubr.bf16.mxu0 0
      %1059 = vmatmul.mubr.bf16.gmra.mrb[0].mxu0 %v728
      %v1060 = vpop.f32.mrb[0].mxu0
      %v1061 = vadd.f32 %v315, %v1060
      %v1062 = vpop.f32.mrb[0].mxu0
      %v1063 = vpop.f32.mrb[0].mxu0
      %v1064 = vadd.f32 %v315, %v1063
      %v1065 = vpop.f32.mrb[0].mxu0
      %1066 = vmatprep.mubr.bf16.mxu0 0
      %1067 = vmatmul.mubr.bf16.gmra.mrb[0].mxu0 %v731
      %v1068 = vpop.f32.mrb[0].mxu0
      %v1069 = vadd.f32 %v315, %v1068
      %v1070 = vpop.f32.mrb[0].mxu0
      %v1071 = vpop.f32.mrb[0].mxu0
      %v1072 = vadd.f32 %v315, %v1071
      %v1073 = vpop.f32.mrb[0].mxu0
      %1074 = vmatprep.mubr.bf16.mxu0 0
      %1075 = vmatmul.mubr.bf16.gmra.mrb[0].mxu0 %v734
      %v1076 = vpop.f32.mrb[0].mxu0
      %v1077 = vadd.f32 %v315, %v1076
      %v1078 = vpop.f32.mrb[0].mxu0
      %v1079 = vpop.f32.mrb[0].mxu0
      %v1080 = vadd.f32 %v315, %v1079
      %v1081 = vpop.f32.mrb[0].mxu0
      %1082 = vmatprep.mubr.bf16.mxu0 0
      %1083 = vmatmul.mubr.bf16.gmra.mrb[0].mxu0 %v737
      %v1084 = vpop.f32.mrb[0].mxu0
      %v1085 = vadd.f32 %v315, %v1084
      %v1086 = vpop.f32.mrb[0].mxu0
      %v1087 = vpop.f32.mrb[0].mxu0
      %v1088 = vadd.f32 %v315, %v1087
      %v1089 = vpop.f32.mrb[0].mxu0
      %1090 = vmatprep.mubr.bf16.mxu0 0
      %1091 = vmatmul.mubr.bf16.gmra.mrb[0].mxu0 %v740
      %v1092 = vpop.f32.mrb[0].mxu0
      %v1093 = vadd.f32 %v315, %v1092
      %v1094 = vpop.f32.mrb[0].mxu0
      %v1095 = vpop.f32.mrb[0].mxu0
      %v1096 = vadd.f32 %v315, %v1095
      %v1097 = vpop.f32.mrb[0].mxu0
      %1098 = vmatprep.mubr.bf16.mxu0 0
      %1099 = vmatmul.mubr.bf16.gmra.mrb[0].mxu0 %v743
      %v1100 = vpop.f32.mrb[0].mxu0
      %v1101 = vadd.f32 %v315, %v1100
      %v1102 = vpop.f32.mrb[0].mxu0
      %v1103 = vpop.f32.mrb[0].mxu0
      %v1104 = vadd.f32 %v315, %v1103
      %v1105 = vpop.f32.mrb[0].mxu0
      %1106 = vmatprep.mubr.bf16.mxu0 0
      %1107 = vmatmul.mubr.bf16.gmra.mrb[0].mxu0 %v746
      %v1108 = vpop.f32.mrb[0].mxu0
      %v1109 = vadd.f32 %v315, %v1108
      %v1110 = vpop.f32.mrb[0].mxu0
      %v1111 = vpop.f32.mrb[0].mxu0
      %v1112 = vadd.f32 %v315, %v1111
      %v1113 = vpop.f32.mrb[0].mxu0
      %1114 = vmatprep.mubr.bf16.mxu0 0
      %1115 = vmatmul.mubr.bf16.gmra.mrb[0].mxu0 %v749
      %v1116 = vpop.f32.mrb[0].mxu0
      %v1117 = vadd.f32 %v315, %v1116
      %v1118 = vpop.f32.mrb[0].mxu0
      %v1119 = vpop.f32.mrb[0].mxu0
      %v1120 = vadd.f32 %v315, %v1119
      %v1121 = vpop.f32.mrb[0].mxu0
      %1122 = vmatprep.mubr.bf16.mxu0 0
      %1123 = vmatmul.mubr.bf16.gmra.mrb[0].mxu0 %v752
      %v1124 = vpop.f32.mrb[0].mxu0
      %v1125 = vadd.f32 %v315, %v1124
      %v1126 = vpop.f32.mrb[0].mxu0
      %v1127 = vpop.f32.mrb[0].mxu0
      %v1128 = vadd.f32 %v315, %v1127
      %v1129 = vpop.f32.mrb[0].mxu0
      %1130 = vmatprep.mubr.bf16.mxu0 0
      %1131 = vmatmul.mubr.bf16.gmra.mrb[0].mxu0 %v755
      %v1132 = vpop.f32.mrb[0].mxu0
      %v1133 = vadd.f32 %v315, %v1132
      %v1134 = vpop.f32.mrb[0].mxu0
      %v1135 = vpop.f32.mrb[0].mxu0
      %v1136 = vadd.f32 %v315, %v1135
      %v1137 = vpop.f32.mrb[0].mxu0
      %1138 = vmatprep.mubr.bf16.mxu0 0
      %1139 = vmatmul.mubr.bf16.gmra.mrb[0].mxu0 %v758
      %v1140 = vpop.f32.mrb[0].mxu0
      %v1141 = vadd.f32 %v315, %v1140
      %v1142 = vpop.f32.mrb[0].mxu0
      %v1143 = vpop.f32.mrb[0].mxu0
      %v1144 = vadd.f32 %v315, %v1143
      %v1145 = vpop.f32.mrb[0].mxu0
      %1146 = vmatprep.mubr.bf16.mxu0 0
      %1147 = vmatmul.mubr.bf16.gmra.mrb[0].mxu0 %v761
      %v1148 = vpop.f32.mrb[0].mxu0
      %v1149 = vadd.f32 %v315, %v1148
      %v1150 = vpop.f32.mrb[0].mxu0
      %v1151 = vpop.f32.mrb[0].mxu0
      %v1152 = vadd.f32 %v315, %v1151
      %v1153 = vpop.f32.mrb[0].mxu0
      %1154 = vmatprep.mubr.bf16.mxu0 0
      %1155 = vmatmul.mubr.bf16.gmra.mrb[0].mxu0 %v764
      %v1156 = vpop.f32.mrb[0].mxu0
      %v1157 = vadd.f32 %v315, %v1156
      %v1158 = vpop.f32.mrb[0].mxu0
      %v1159 = vpop.f32.mrb[0].mxu0
      %v1160 = vadd.f32 %v315, %v1159
      %v1161 = vpop.f32.mrb[0].mxu0
      %1162 = vmatprep.mubr.bf16.mxu0 0
      %1163 = vmatmul.mubr.bf16.gmra.mrb[0].mxu0 %v767
      %v1164 = vpop.f32.mrb[0].mxu0
      %v1165 = vadd.f32 %v315, %v1164
      %v1166 = vpop.f32.mrb[0].mxu0
      %v1167 = vpop.f32.mrb[0].mxu0
      %v1168 = vadd.f32 %v315, %v1167
      %v1169 = vpop.f32.mrb[0].mxu0
      %1170 = vmatprep.mubr.bf16.mxu0 0
      %1171 = vmatmul.mubr.bf16.gmra.mrb[0].mxu0 %v770
      %v1172 = vpop.f32.mrb[0].mxu0
      %v1173 = vadd.f32 %v315, %v1172
      %v1174 = vpop.f32.mrb[0].mxu0
      %v1175 = vpop.f32.mrb[0].mxu0
      %v1176 = vadd.f32 %v315, %v1175
      %v1177 = vpop.f32.mrb[0].mxu0
      %1178 = vmatprep.mubr.bf16.mxu0 0
      %1179 = vmatmul.mubr.bf16.gmra.mrb[0].mxu0 %v773
      %v1180 = vpop.f32.mrb[0].mxu0
      %v1181 = vadd.f32 %v315, %v1180
      %v1182 = vpop.f32.mrb[0].mxu0
      %v1183 = vpop.f32.mrb[0].mxu0
      %v1184 = vadd.f32 %v315, %v1183
      %v1185 = vpop.f32.mrb[0].mxu0
      %1186 = vmatprep.mubr.bf16.mxu0 0
      %1187 = vmatmul.mubr.bf16.gmra.mrb[0].mxu0 %v776
      %v1188 = vpop.f32.mrb[0].mxu0
      %v1189 = vadd.f32 %v315, %v1188
      %v1190 = vpop.f32.mrb[0].mxu0
      %v1191 = vpop.f32.mrb[0].mxu0
      %v1192 = vadd.f32 %v315, %v1191
      %v1193 = vpop.f32.mrb[0].mxu0
      %1194 = vmatprep.mubr.bf16.mxu0 0
      %1195 = vmatmul.mubr.bf16.gmra.mrb[0].mxu0 %v779
      %v1196 = vpop.f32.mrb[0].mxu0
      %v1197 = vadd.f32 %v315, %v1196
      %v1198 = vpop.f32.mrb[0].mxu0
      %v1199 = vpop.f32.mrb[0].mxu0
      %v1200 = vadd.f32 %v315, %v1199
      %v1201 = vpop.f32.mrb[0].mxu0
      %1202 = vmatprep.mubr.bf16.mxu0 0
      %1203 = vmatmul.mubr.bf16.gmra.mrb[0].mxu0 %v782
      %v1204 = vpop.f32.mrb[0].mxu0
      %v1205 = vadd.f32 %v315, %v1204
      %v1206 = vpop.f32.mrb[0].mxu0
      %v1207 = vpop.f32.mrb[0].mxu0
      %v1208 = vadd.f32 %v315, %v1207
      %v1209 = vpop.f32.mrb[0].mxu0
      %1210 = vmatprep.mubr.bf16.mxu0 0
      %1211 = vmatmul.mubr.bf16.gmra.mrb[0].mxu0 %v785
      %v1212 = vpop.f32.mrb[0].mxu0
      %v1213 = vadd.f32 %v315, %v1212
      %v1214 = vpop.f32.mrb[0].mxu0
      %v1215 = vpop.f32.mrb[0].mxu0
      %v1216 = vadd.f32 %v315, %v1215
      %v1217 = vpop.f32.mrb[0].mxu0
      %1218 = vmatprep.mubr.bf16.mxu0 0
      %1219 = vmatmul.mubr.bf16.gmra.mrb[0].mxu0 %v788
      %v1220 = vpop.f32.mrb[0].mxu0
      %v1221 = vadd.f32 %v315, %v1220
      %v1222 = vpop.f32.mrb[0].mxu0
      %v1223 = vpop.f32.mrb[0].mxu0
      %v1224 = vadd.f32 %v315, %v1223
      %v1225 = vpop.f32.mrb[0].mxu0
      %1226 = vmatprep.mubr.bf16.mxu0 0
      %1227 = vmatmul.mubr.bf16.gmra.mrb[0].mxu0 %v791
      %v1228 = vpop.f32.mrb[0].mxu0
      %v1229 = vadd.f32 %v315, %v1228
      %v1230 = vpop.f32.mrb[0].mxu0
      %v1231 = vpop.f32.mrb[0].mxu0
      %v1232 = vadd.f32 %v315, %v1231
      %v1233 = vpop.f32.mrb[0].mxu0
      %1234 = vmatprep.mubr.bf16.mxu0 0
      %1235 = vmatmul.mubr.bf16.gmra.mrb[0].mxu0 %v794
      %v1236 = vpop.f32.mrb[0].mxu0
      %v1237 = vadd.f32 %v315, %v1236
      %v1238 = vpop.f32.mrb[0].mxu0
      %v1239 = vpop.f32.mrb[0].mxu0
      %v1240 = vadd.f32 %v315, %v1239
      %v1241 = vpop.f32.mrb[0].mxu0
      %1242 = vmatprep.mubr.bf16.mxu0 0
      %1243 = vmatmul.mubr.bf16.gmra.mrb[0].mxu0 %v797
      %v1244 = vpop.f32.mrb[0].mxu0
      %v1245 = vadd.f32 %v315, %v1244
      %v1246 = vpop.f32.mrb[0].mxu0
      %v1247 = vpop.f32.mrb[0].mxu0
      %v1248 = vadd.f32 %v315, %v1247
      %v1249 = vpop.f32.mrb[0].mxu0
      %1250 = vmatprep.mubr.bf16.mxu0 0
      %1251 = vmatmul.mubr.bf16.gmra.mrb[0].mxu0 %v800
      %v1252 = vpop.f32.mrb[0].mxu0
      %v1253 = vadd.f32 %v315, %v1252
      %v1254 = vpop.f32.mrb[0].mxu0
      %v1255 = vpop.f32.mrb[0].mxu0
      %v1256 = vadd.f32 %v315, %v1255
      %v1257 = vpop.f32.mrb[0].mxu0
      %1258 = vmatprep.mubr.bf16.mxu0 0
      %1259 = vmatmul.mubr.bf16.gmra.mrb[0].mxu0 %v803
      %v1260 = vpop.f32.mrb[0].mxu0
      %v1261 = vadd.f32 %v315, %v1260
      %v1262 = vpop.f32.mrb[0].mxu0
      %v1263 = vpop.f32.mrb[0].mxu0
      %v1264 = vadd.f32 %v315, %v1263
      %v1265 = vpop.f32.mrb[0].mxu0
      %1266 = vmatprep.mubr.bf16.mxu0 0
      %1267 = vmatmul.mubr.bf16.gmra.mrb[0].mxu0 %v806
      %v1268 = vpop.f32.mrb[0].mxu0
      %v1269 = vadd.f32 %v315, %v1268
      %v1270 = vpop.f32.mrb[0].mxu0
      %v1271 = vpop.f32.mrb[0].mxu0
      %v1272 = vadd.f32 %v315, %v1271
      %v1273 = vpop.f32.mrb[0].mxu0
      %1274 = vmatprep.mubr.bf16.mxu0 0
      %1275 = vmatmul.mubr.bf16.gmra.mrb[0].mxu0 %v809
      %v1276 = vpop.f32.mrb[0].mxu0
      %v1277 = vadd.f32 %v315, %v1276
      %v1278 = vpop.f32.mrb[0].mxu0
      %v1279 = vpop.f32.mrb[0].mxu0
      %v1280 = vadd.f32 %v315, %v1279
      %v1281 = vpop.f32.mrb[0].mxu0
      %1282 = vmatprep.mubr.bf16.mxu0 0
      %1283 = vmatmul.mubr.bf16.gmra.mrb[0].mxu0 %v812
      %v1284 = vpop.f32.mrb[0].mxu0
      %v1285 = vadd.f32 %v315, %v1284
      %v1286 = vpop.f32.mrb[0].mxu0
      %v1287 = vpop.f32.mrb[0].mxu0
      %v1288 = vadd.f32 %v315, %v1287
      %v1289 = vpop.f32.mrb[0].mxu0
      %1290 = vmatprep.mubr.bf16.mxu0 0
      %1291 = vmatmul.mubr.bf16.gmra.mrb[0].mxu0 %v815
      %v1292 = vpop.f32.mrb[0].mxu0
      %v1293 = vadd.f32 %v315, %v1292
      %v1294 = vpop.f32.mrb[0].mxu0
      %v1295 = vpop.f32.mrb[0].mxu0
      %v1296 = vadd.f32 %v315, %v1295
      %v1297 = vpop.f32.mrb[0].mxu0
      %1298 = vmatprep.mubr.bf16.mxu0 0
      %1299 = vmatmul.mubr.bf16.gmra.mrb[0].mxu0 %v818
      %v1300 = vpop.f32.mrb[0].mxu0
      %v1301 = vadd.f32 %v315, %v1300
      %v1302 = vpop.f32.mrb[0].mxu0
      %v1303 = vpop.f32.mrb[0].mxu0
      %v1304 = vadd.f32 %v315, %v1303
      %v1305 = vpop.f32.mrb[0].mxu0
      %1306 = vmatprep.mubr.bf16.mxu0 0
      %1307 = vmatmul.mubr.bf16.gmra.mrb[0].mxu0 %v821
      %v1308 = vpop.f32.mrb[0].mxu0
      %v1309 = vadd.f32 %v315, %v1308
      %v1310 = vpop.f32.mrb[0].mxu0
      %v1311 = vpop.f32.mrb[0].mxu0
      %v1312 = vadd.f32 %v315, %v1311
      %v1313 = vpop.f32.mrb[0].mxu0
      %1314 = vmatprep.mubr.bf16.mxu0 0
      %1315 = vmatmul.mubr.bf16.gmra.mrb[0].mxu0 %v824
      %v1316 = vpop.f32.mrb[0].mxu0
      %v1317 = vadd.f32 %v315, %v1316
      %v1318 = vpop.f32.mrb[0].mxu0
      %v1319 = vpop.f32.mrb[0].mxu0
      %v1320 = vadd.f32 %v315, %v1319
      %v1321 = vpop.f32.mrb[0].mxu0
      %1322 = vmatprep.mubr.bf16.mxu0 0
      %1323 = vmatmul.mubr.bf16.gmra.mrb[0].mxu0 %v827
      %v1324 = vpop.f32.mrb[0].mxu0
      %v1325 = vadd.f32 %v315, %v1324
      %v1326 = vpop.f32.mrb[0].mxu0
      %v1327 = vpop.f32.mrb[0].mxu0
      %v1328 = vadd.f32 %v315, %v1327
      %v1329 = vpop.f32.mrb[0].mxu0
      %1330 = vmatprep.mubr.bf16.mxu0 0
      %1331 = vmatmul.mubr.bf16.gmra.mrb[0].mxu0 %v830
      %v1332 = vpop.f32.mrb[0].mxu0
      %v1333 = vadd.f32 %v315, %v1332
      %v1334 = vpop.f32.mrb[0].mxu0
      %v1335 = vpop.f32.mrb[0].mxu0
      %v1336 = vadd.f32 %v315, %v1335
      %v1337 = vpop.f32.mrb[0].mxu0
      %1338 = vmatprep.mubr.bf16.mxu0 0
      %1339 = vmatmul.mubr.bf16.gmra.mrb[0].mxu0 %v833
      %v1340 = vpop.f32.mrb[0].mxu0
      %v1341 = vadd.f32 %v315, %v1340
      %v1342 = vpop.f32.mrb[0].mxu0
      %v1343 = vpop.f32.mrb[0].mxu0
      %v1344 = vadd.f32 %v315, %v1343
      %v1345 = vpop.f32.mrb[0].mxu0
      %1346 = vmatprep.mubr.bf16.mxu0 0
      %1347 = vmatmul.mubr.bf16.gmra.mrb[0].mxu0 %v836
      %v1348 = vpop.f32.mrb[0].mxu0
      %v1349 = vadd.f32 %v315, %v1348
      %v1350 = vpop.f32.mrb[0].mxu0
      %v1351 = vpop.f32.mrb[0].mxu0
      %v1352 = vadd.f32 %v315, %v1351
      %v1353 = vpop.f32.mrb[0].mxu0
      %1354 = vmatprep.mubr.bf16.mxu0 0
      %1355 = vmatmul.mubr.bf16.gmra.mrb[0].mxu0 %v839
      %v1356 = vpop.f32.mrb[0].mxu0
      %v1357 = vadd.f32 %v315, %v1356
      %v1358 = vpop.f32.mrb[0].mxu0
      %v1359 = vpop.f32.mrb[0].mxu0
      %v1360 = vadd.f32 %v315, %v1359
      %v1361 = vpop.f32.mrb[0].mxu0
      %1362 = vmatprep.mubr.bf16.mxu0 0
      %1363 = vmatmul.mubr.bf16.gmra.mrb[0].mxu0 %v842
      %v1364 = vpop.f32.mrb[0].mxu0
      %v1365 = vadd.f32 %v315, %v1364
      %v1366 = vpop.f32.mrb[0].mxu0
      %v1367 = vpop.f32.mrb[0].mxu0
      %v1368 = vadd.f32 %v315, %v1367
      %v1369 = vpop.f32.mrb[0].mxu0
      %1370 = vmatprep.mubr.bf16.mxu0 0
      %1371 = vmatmul.mubr.bf16.gmra.mrb[0].mxu0 %v845
      %v1372 = vpop.f32.mrb[0].mxu0
      %v1373 = vadd.f32 %v315, %v1372
      %v1374 = vpop.f32.mrb[0].mxu0
      %v1375 = vpop.f32.mrb[0].mxu0
      %v1376 = vadd.f32 %v315, %v1375
      %v1377 = vpop.f32.mrb[0].mxu0
      %1378 = vmatprep.mubr.bf16.mxu0 0
      %1379 = vmatmul.mubr.bf16.gmra.mrb[0].mxu0 %v848
      %v1380 = vpop.f32.mrb[0].mxu0
      %v1381 = vadd.f32 %v315, %v1380
      %v1382 = vpop.f32.mrb[0].mxu0
      %v1383 = vpop.f32.mrb[0].mxu0
      %v1384 = vadd.f32 %v315, %v1383
      %v1385 = vpop.f32.mrb[0].mxu0
      %1386 = vmatprep.mubr.bf16.mxu0 0
      %1387 = vmatmul.mubr.bf16.gmra.mrb[0].mxu0 %v851
      %v1388 = vpop.f32.mrb[0].mxu0
      %v1389 = vadd.f32 %v315, %v1388
      %v1390 = vpop.f32.mrb[0].mxu0
      %v1391 = vpop.f32.mrb[0].mxu0
      %v1392 = vadd.f32 %v315, %v1391
      %v1393 = vpop.f32.mrb[0].mxu0
      %1394 = vmatprep.mubr.bf16.mxu0 0
      %1395 = vmatmul.mubr.bf16.gmra.mrb[0].mxu0 %v854
      %v1396 = vpop.f32.mrb[0].mxu0
      %v1397 = vadd.f32 %v315, %v1396
      %v1398 = vpop.f32.mrb[0].mxu0
      %v1399 = vpop.f32.mrb[0].mxu0
      %v1400 = vadd.f32 %v315, %v1399
      %v1401 = vpop.f32.mrb[0].mxu0
      %1402 = vmatprep.mubr.bf16.mxu0 0
      %1403 = vmatmul.mubr.bf16.gmra.mrb[0].mxu0 %v857
      %v1404 = vpop.f32.mrb[0].mxu0
      %v1405 = vadd.f32 %v315, %v1404
      %v1406 = vpop.f32.mrb[0].mxu0
      %v1407 = vpop.f32.mrb[0].mxu0
      %v1408 = vadd.f32 %v315, %v1407
      %v1409 = vpop.f32.mrb[0].mxu0
      %1410 = vdwg.mxu0
      %v1411 = vmax.f32 %v901, %v917
      %v1412 = vmax.f32 %v904, %v920
      %v1413 = vmax.f32 %v909, %v925
      %v1414 = vmax.f32 %v912, %v928
      %v1415 = vmax.f32 %v933, %v949
      %v1416 = vmax.f32 %v936, %v952
      %v1417 = vmax.f32 %v941, %v957
      %v1418 = vmax.f32 %v944, %v960
      %v1419 = vmax.f32 %v965, %v981
      %v1420 = vmax.f32 %v968, %v984
      %v1421 = vmax.f32 %v973, %v989
      %v1422 = vmax.f32 %v976, %v992
      %v1423 = vmax.f32 %v997, %v1013
      %v1424 = vmax.f32 %v1000, %v1016
      %v1425 = vmax.f32 %v1005, %v1021
      %v1426 = vmax.f32 %v1008, %v1024
      %v1427 = vmax.f32 %v1029, %v1045
      %v1428 = vmax.f32 %v1032, %v1048
      %v1429 = vmax.f32 %v1037, %v1053
      %v1430 = vmax.f32 %v1040, %v1056
      %v1431 = vmax.f32 %v1061, %v1077
      %v1432 = vmax.f32 %v1064, %v1080
      %v1433 = vmax.f32 %v1069, %v1085
      %v1434 = vmax.f32 %v1072, %v1088
      %v1435 = vmax.f32 %v1093, %v1109
      %v1436 = vmax.f32 %v1096, %v1112
      %v1437 = vmax.f32 %v1101, %v1117
      %v1438 = vmax.f32 %v1104, %v1120
      %v1439 = vmax.f32 %v1125, %v1141
      %v1440 = vmax.f32 %v1128, %v1144
      %v1441 = vmax.f32 %v1133, %v1149
      %v1442 = vmax.f32 %v1136, %v1152
      %v1443 = vmax.f32 %v1157, %v1173
      %v1444 = vmax.f32 %v1160, %v1176
      %v1445 = vmax.f32 %v1165, %v1181
      %v1446 = vmax.f32 %v1168, %v1184
      %v1447 = vmax.f32 %v1189, %v1205
      %v1448 = vmax.f32 %v1192, %v1208
      %v1449 = vmax.f32 %v1197, %v1213
      %v1450 = vmax.f32 %v1200, %v1216
      %v1451 = vmax.f32 %v1221, %v1237
      %v1452 = vmax.f32 %v1224, %v1240
      %v1453 = vmax.f32 %v1229, %v1245
      %v1454 = vmax.f32 %v1232, %v1248
      %v1455 = vmax.f32 %v1253, %v1269
      %v1456 = vmax.f32 %v1256, %v1272
      %v1457 = vmax.f32 %v1261, %v1277
      %v1458 = vmax.f32 %v1264, %v1280
      %v1459 = vmax.f32 %v1285, %v1301
      %v1460 = vmax.f32 %v1288, %v1304
      %v1461 = vmax.f32 %v1293, %v1309
      %v1462 = vmax.f32 %v1296, %v1312
      %v1463 = vmax.f32 %v1317, %v1333
      %v1464 = vmax.f32 %v1320, %v1336
      %v1465 = vmax.f32 %v1325, %v1341
      %v1466 = vmax.f32 %v1328, %v1344
      %v1467 = vmax.f32 %v1349, %v1365
      %v1468 = vmax.f32 %v1352, %v1368
      %v1469 = vmax.f32 %v1357, %v1373
      %v1470 = vmax.f32 %v1360, %v1376
      %v1471 = vmax.f32 %v1381, %v1397
      %v1472 = vmax.f32 %v1384, %v1400
      %v1473 = vmax.f32 %v1389, %v1405
      %v1474 = vmax.f32 %v1392, %v1408
      %vm1539 = vcmask 1046528
      %v1540 = vrot.slane %v1411, 1
      %v1541 = vrot.slane %v1412, 1
      %v1542 = vsel %vm1539, %v1540, %v1541
      %v1543 = vrot.slane %v1413, 1
      %v1544 = vsel %vm1539, %v1541, %v1543
      %v1545 = vrot.slane %v1414, 1
      %v1546 = vsel %vm1539, %v1543, %v1545
      %v1547 = vrot.slane %v1415, 1
      %v1548 = vrot.slane %v1416, 1
      %v1549 = vsel %vm1539, %v1547, %v1548
      %v1550 = vrot.slane %v1417, 1
      %v1551 = vsel %vm1539, %v1548, %v1550
      %v1552 = vrot.slane %v1418, 1
      %v1553 = vsel %vm1539, %v1550, %v1552
      %v1554 = vrot.slane %v1419, 1
      %v1555 = vrot.slane %v1420, 1
      %v1556 = vsel %vm1539, %v1554, %v1555
      %v1557 = vrot.slane %v1421, 1
      %v1558 = vsel %vm1539, %v1555, %v1557
      %v1559 = vrot.slane %v1422, 1
      %v1560 = vsel %vm1539, %v1557, %v1559
      %v1561 = vrot.slane %v1423, 1
      %v1562 = vrot.slane %v1424, 1
      %v1563 = vsel %vm1539, %v1561, %v1562
      %v1564 = vrot.slane %v1425, 1
      %v1565 = vsel %vm1539, %v1562, %v1564
      %v1566 = vrot.slane %v1426, 1
      %v1567 = vsel %vm1539, %v1564, %v1566
      %v1568 = vrot.slane %v1427, 1
      %v1569 = vrot.slane %v1428, 1
      %v1570 = vsel %vm1539, %v1568, %v1569
      %v1571 = vrot.slane %v1429, 1
      %v1572 = vsel %vm1539, %v1569, %v1571
      %v1573 = vrot.slane %v1430, 1
      %v1574 = vsel %vm1539, %v1571, %v1573
      %v1575 = vrot.slane %v1431, 1
      %v1576 = vrot.slane %v1432, 1
      %v1577 = vsel %vm1539, %v1575, %v1576
      %v1578 = vrot.slane %v1433, 1
      %v1579 = vsel %vm1539, %v1576, %v1578
      %v1580 = vrot.slane %v1434, 1
      %v1581 = vsel %vm1539, %v1578, %v1580
      %v1582 = vrot.slane %v1435, 1
      %v1583 = vrot.slane %v1436, 1
      %v1584 = vsel %vm1539, %v1582, %v1583
      %v1585 = vrot.slane %v1437, 1
      %v1586 = vsel %vm1539, %v1583, %v1585
      %v1587 = vrot.slane %v1438, 1
      %v1588 = vsel %vm1539, %v1585, %v1587
      %v1589 = vrot.slane %v1439, 1
      %v1590 = vrot.slane %v1440, 1
      %v1591 = vsel %vm1539, %v1589, %v1590
      %v1592 = vrot.slane %v1441, 1
      %v1593 = vsel %vm1539, %v1590, %v1592
      %v1594 = vrot.slane %v1442, 1
      %v1595 = vsel %vm1539, %v1592, %v1594
      %v1596 = vrot.slane %v1443, 1
      %v1597 = vrot.slane %v1444, 1
      %v1598 = vsel %vm1539, %v1596, %v1597
      %v1599 = vrot.slane %v1445, 1
      %v1600 = vsel %vm1539, %v1597, %v1599
      %v1601 = vrot.slane %v1446, 1
      %v1602 = vsel %vm1539, %v1599, %v1601
      %v1603 = vrot.slane %v1447, 1
      %v1604 = vrot.slane %v1448, 1
      %v1605 = vsel %vm1539, %v1603, %v1604
      %v1606 = vrot.slane %v1449, 1
      %v1607 = vsel %vm1539, %v1604, %v1606
      %v1608 = vrot.slane %v1450, 1
      %v1609 = vsel %vm1539, %v1606, %v1608
      %v1610 = vrot.slane %v1451, 1
      %v1611 = vrot.slane %v1452, 1
      %v1612 = vsel %vm1539, %v1610, %v1611
      %v1613 = vrot.slane %v1453, 1
      %v1614 = vsel %vm1539, %v1611, %v1613
      %v1615 = vrot.slane %v1454, 1
      %v1616 = vsel %vm1539, %v1613, %v1615
      %v1617 = vrot.slane %v1455, 1
      %v1618 = vrot.slane %v1456, 1
      %v1619 = vsel %vm1539, %v1617, %v1618
      %v1620 = vrot.slane %v1457, 1
      %v1621 = vsel %vm1539, %v1618, %v1620
      %v1622 = vrot.slane %v1458, 1
      %v1623 = vsel %vm1539, %v1620, %v1622
      %v1624 = vrot.slane %v1459, 1
      %v1625 = vrot.slane %v1460, 1
      %v1626 = vsel %vm1539, %v1624, %v1625
      %v1627 = vrot.slane %v1461, 1
      %v1628 = vsel %vm1539, %v1625, %v1627
      %v1629 = vrot.slane %v1462, 1
      %v1630 = vsel %vm1539, %v1627, %v1629
      %v1631 = vrot.slane %v1463, 1
      %v1632 = vrot.slane %v1464, 1
      %v1633 = vsel %vm1539, %v1631, %v1632
      %v1634 = vrot.slane %v1465, 1
      %v1635 = vsel %vm1539, %v1632, %v1634
      %v1636 = vrot.slane %v1466, 1
      %v1637 = vsel %vm1539, %v1634, %v1636
      %v1638 = vrot.slane %v1467, 1
      %v1639 = vrot.slane %v1468, 1
      %v1640 = vsel %vm1539, %v1638, %v1639
      %v1641 = vrot.slane %v1469, 1
      %v1642 = vsel %vm1539, %v1639, %v1641
      %v1643 = vrot.slane %v1470, 1
      %v1644 = vsel %vm1539, %v1641, %v1643
      %v1645 = vrot.slane %v1471, 1
      %v1646 = vrot.slane %v1472, 1
      %v1647 = vsel %vm1539, %v1645, %v1646
      %v1648 = vrot.slane %v1473, 1
      %v1649 = vsel %vm1539, %v1646, %v1648
      %v1650 = vrot.slane %v1474, 1
      %v1651 = vsel %vm1539, %v1648, %v1650
      %v1716 = vmax.f32 %v1411, %v1542
      %v1717 = vmax.f32 %v1412, %v1544
      %v1718 = vmax.f32 %v1413, %v1546
      %v1719 = vmax.f32 %v1414, %v1545
      %v1720 = vmax.f32 %v1415, %v1549
      %v1721 = vmax.f32 %v1416, %v1551
      %v1722 = vmax.f32 %v1417, %v1553
      %v1723 = vmax.f32 %v1418, %v1552
      %v1724 = vmax.f32 %v1419, %v1556
      %v1725 = vmax.f32 %v1420, %v1558
      %v1726 = vmax.f32 %v1421, %v1560
      %v1727 = vmax.f32 %v1422, %v1559
      %v1728 = vmax.f32 %v1423, %v1563
      %v1729 = vmax.f32 %v1424, %v1565
      %v1730 = vmax.f32 %v1425, %v1567
      %v1731 = vmax.f32 %v1426, %v1566
      %v1732 = vmax.f32 %v1427, %v1570
      %v1733 = vmax.f32 %v1428, %v1572
      %v1734 = vmax.f32 %v1429, %v1574
      %v1735 = vmax.f32 %v1430, %v1573
      %v1736 = vmax.f32 %v1431, %v1577
      %v1737 = vmax.f32 %v1432, %v1579
      %v1738 = vmax.f32 %v1433, %v1581
      %v1739 = vmax.f32 %v1434, %v1580
      %v1740 = vmax.f32 %v1435, %v1584
      %v1741 = vmax.f32 %v1436, %v1586
      %v1742 = vmax.f32 %v1437, %v1588
      %v1743 = vmax.f32 %v1438, %v1587
      %v1744 = vmax.f32 %v1439, %v1591
      %v1745 = vmax.f32 %v1440, %v1593
      %v1746 = vmax.f32 %v1441, %v1595
      %v1747 = vmax.f32 %v1442, %v1594
      %v1748 = vmax.f32 %v1443, %v1598
      %v1749 = vmax.f32 %v1444, %v1600
      %v1750 = vmax.f32 %v1445, %v1602
      %v1751 = vmax.f32 %v1446, %v1601
      %v1752 = vmax.f32 %v1447, %v1605
      %v1753 = vmax.f32 %v1448, %v1607
      %v1754 = vmax.f32 %v1449, %v1609
      %v1755 = vmax.f32 %v1450, %v1608
      %v1756 = vmax.f32 %v1451, %v1612
      %v1757 = vmax.f32 %v1452, %v1614
      %v1758 = vmax.f32 %v1453, %v1616
      %v1759 = vmax.f32 %v1454, %v1615
      %v1760 = vmax.f32 %v1455, %v1619
      %v1761 = vmax.f32 %v1456, %v1621
      %v1762 = vmax.f32 %v1457, %v1623
      %v1763 = vmax.f32 %v1458, %v1622
      %v1764 = vmax.f32 %v1459, %v1626
      %v1765 = vmax.f32 %v1460, %v1628
      %v1766 = vmax.f32 %v1461, %v1630
      %v1767 = vmax.f32 %v1462, %v1629
      %v1768 = vmax.f32 %v1463, %v1633
      %v1769 = vmax.f32 %v1464, %v1635
      %v1770 = vmax.f32 %v1465, %v1637
      %v1771 = vmax.f32 %v1466, %v1636
      %v1772 = vmax.f32 %v1467, %v1640
      %v1773 = vmax.f32 %v1468, %v1642
      %v1774 = vmax.f32 %v1469, %v1644
      %v1775 = vmax.f32 %v1470, %v1643
      %v1776 = vmax.f32 %v1471, %v1647
      %v1777 = vmax.f32 %v1472, %v1649
      %v1778 = vmax.f32 %v1473, %v1651
      %v1779 = vmax.f32 %v1474, %v1650
      %vm1780 = vcmask 261120
      %1781 = vst.msk [vmem:[%s170] sm:$0xff] %vm1780, %v1716
      %1782 = vst.msk [vmem:[%s170 + $0x8] sm:$0xff] %vm1780, %v1717
      %1783 = vst.msk [vmem:[%s170 + $0x10] sm:$0xff] %vm1780, %v1718
      %vm1784 = vcmask 260096
      %1785 = vst.msk [vmem:[%s170 + $0x18] sm:$0x7f] %vm1784, %v1719
      %1786 = vst.msk [vmem:[%s170 + $0x20] sm:$0xff] %vm1780, %v1720
      %1787 = vst.msk [vmem:[%s170 + $0x28] sm:$0xff] %vm1780, %v1721
      %1788 = vst.msk [vmem:[%s170 + $0x30] sm:$0xff] %vm1780, %v1722
      %1789 = vst.msk [vmem:[%s170 + $0x38] sm:$0x7f] %vm1784, %v1723
      %1790 = vst.msk [vmem:[%s170 + $0x40] sm:$0xff] %vm1780, %v1724
      %1791 = vst.msk [vmem:[%s170 + $0x48] sm:$0xff] %vm1780, %v1725
      %1792 = vst.msk [vmem:[%s170 + $0x50] sm:$0xff] %vm1780, %v1726
      %1793 = vst.msk [vmem:[%s170 + $0x58] sm:$0x7f] %vm1784, %v1727
      %1794 = vst.msk [vmem:[%s170 + $0x60] sm:$0xff] %vm1780, %v1728
      %1795 = vst.msk [vmem:[%s170 + $0x68] sm:$0xff] %vm1780, %v1729
      %1796 = vst.msk [vmem:[%s170 + $0x70] sm:$0xff] %vm1780, %v1730
      %1797 = vst.msk [vmem:[%s170 + $0x78] sm:$0x7f] %vm1784, %v1731
      %1798 = vst.msk [vmem:[%s170 + $0x80] sm:$0xff] %vm1780, %v1732
      %1799 = vst.msk [vmem:[%s170 + $0x88] sm:$0xff] %vm1780, %v1733
      %1800 = vst.msk [vmem:[%s170 + $0x90] sm:$0xff] %vm1780, %v1734
      %1801 = vst.msk [vmem:[%s170 + $0x98] sm:$0x7f] %vm1784, %v1735
      %1802 = vst.msk [vmem:[%s170 + $0xa0] sm:$0xff] %vm1780, %v1736
      %1803 = vst.msk [vmem:[%s170 + $0xa8] sm:$0xff] %vm1780, %v1737
      %1804 = vst.msk [vmem:[%s170 + $0xb0] sm:$0xff] %vm1780, %v1738
      %1805 = vst.msk [vmem:[%s170 + $0xb8] sm:$0x7f] %vm1784, %v1739
      %1806 = vst.msk [vmem:[%s170 + $0xc0] sm:$0xff] %vm1780, %v1740
      %1807 = vst.msk [vmem:[%s170 + $0xc8] sm:$0xff] %vm1780, %v1741
      %1808 = vst.msk [vmem:[%s170 + $0xd0] sm:$0xff] %vm1780, %v1742
      %1809 = vst.msk [vmem:[%s170 + $0xd8] sm:$0x7f] %vm1784, %v1743
      %1810 = vst.msk [vmem:[%s170 + $0xe0] sm:$0xff] %vm1780, %v1744
      %1811 = vst.msk [vmem:[%s170 + $0xe8] sm:$0xff] %vm1780, %v1745
      %1812 = vst.msk [vmem:[%s170 + $0xf0] sm:$0xff] %vm1780, %v1746
      %1813 = vst.msk [vmem:[%s170 + $0xf8] sm:$0x7f] %vm1784, %v1747
      %1814 = vst.msk [vmem:[%s170 + $0x100] sm:$0xff] %vm1780, %v1748
      %1815 = vst.msk [vmem:[%s170 + $0x108] sm:$0xff] %vm1780, %v1749
      %1816 = vst.msk [vmem:[%s170 + $0x110] sm:$0xff] %vm1780, %v1750
      %1817 = vst.msk [vmem:[%s170 + $0x118] sm:$0x7f] %vm1784, %v1751
      %1818 = vst.msk [vmem:[%s170 + $0x120] sm:$0xff] %vm1780, %v1752
      %1819 = vst.msk [vmem:[%s170 + $0x128] sm:$0xff] %vm1780, %v1753
      %1820 = vst.msk [vmem:[%s170 + $0x130] sm:$0xff] %vm1780, %v1754
      %1821 = vst.msk [vmem:[%s170 + $0x138] sm:$0x7f] %vm1784, %v1755
      %1822 = vst.msk [vmem:[%s170 + $0x140] sm:$0xff] %vm1780, %v1756
      %1823 = vst.msk [vmem:[%s170 + $0x148] sm:$0xff] %vm1780, %v1757
      %1824 = vst.msk [vmem:[%s170 + $0x150] sm:$0xff] %vm1780, %v1758
      %1825 = vst.msk [vmem:[%s170 + $0x158] sm:$0x7f] %vm1784, %v1759
      %1826 = vst.msk [vmem:[%s170 + $0x160] sm:$0xff] %vm1780, %v1760
      %1827 = vst.msk [vmem:[%s170 + $0x168] sm:$0xff] %vm1780, %v1761
      %1828 = vst.msk [vmem:[%s170 + $0x170] sm:$0xff] %vm1780, %v1762
      %1829 = vst.msk [vmem:[%s170 + $0x178] sm:$0x7f] %vm1784, %v1763
      %1830 = vst.msk [vmem:[%s170 + $0x180] sm:$0xff] %vm1780, %v1764
      %1831 = vst.msk [vmem:[%s170 + $0x188] sm:$0xff] %vm1780, %v1765
      %1832 = vst.msk [vmem:[%s170 + $0x190] sm:$0xff] %vm1780, %v1766
      %1833 = vst.msk [vmem:[%s170 + $0x198] sm:$0x7f] %vm1784, %v1767
      %1834 = vst.msk [vmem:[%s170 + $0x1a0] sm:$0xff] %vm1780, %v1768
      %1835 = vst.msk [vmem:[%s170 + $0x1a8] sm:$0xff] %vm1780, %v1769
      %1836 = vst.msk [vmem:[%s170 + $0x1b0] sm:$0xff] %vm1780, %v1770
      %1837 = vst.msk [vmem:[%s170 + $0x1b8] sm:$0x7f] %vm1784, %v1771
      %1838 = vst.msk [vmem:[%s170 + $0x1c0] sm:$0xff] %vm1780, %v1772
      %1839 = vst.msk [vmem:[%s170 + $0x1c8] sm:$0xff] %vm1780, %v1773
      %1840 = vst.msk [vmem:[%s170 + $0x1d0] sm:$0xff] %vm1780, %v1774
      %1841 = vst.msk [vmem:[%s170 + $0x1d8] sm:$0x7f] %vm1784, %v1775
      %1842 = vst.msk [vmem:[%s170 + $0x1e0] sm:$0xff] %vm1780, %v1776
      %1843 = vst.msk [vmem:[%s170 + $0x1e8] sm:$0xff] %vm1780, %v1777
      %1844 = vst.msk [vmem:[%s170 + $0x1f0] sm:$0xff] %vm1780, %v1778
      %1845 = vst.msk [vmem:[%s170 + $0x1f8] sm:$0x7f] %vm1784, %v1779
      %p1846 = scmp.lt.s32.totalorder %s14, 1
      %s1847 = scalar_select %p1846, %s14, 1
      %s1848 = smul.addr %s1847, 64
      %s1849 = smul.addr %s1848, 8
      %s1850 = scalar_lea.vmem %s3, %s1849
      // Predicated region
      $region33: #{net_forward.4} parent=31 // pred_check
        %p1851 = pneg %p100
      $region34: #{net_forward.4} parent=31 // pred_check_branch
        %1853 = sbr.rel (%p1851) target = $region36
      $region35: #{net_forward.4} parent=31 // pred_region
        _
      $region36: #{net_forward.4} parent=31 // pred_fallthru
        _
    $region32: #{net_forward.4} parent=5 // pred_fallthru
      _
    %p1854 = scmp.le.s32.totalorder 2, %s9
    // Predicated region
    $region37: #{net_forward.4} parent=5 // pred_check
      %p1855 = pneg %p1854
    $region38: #{net_forward.4} parent=5 // pred_check_branch
      %1857 = sbr.rel (%p1855) target = $region40
    $region39: #{net_forward.4} parent=5 // pred_region
      %s1858 = ssub.s32 %s9, 2
      // Predicated region
      $region41: #{net_forward.4} parent=39 // pred_check
        %p1859 = pneg %p106
      $region42: #{net_forward.4} parent=39 // pred_check_branch
        %1861 = sbr.rel (%p1859) target = $region44
      $region43: #{net_forward.4} parent=39 // pred_region
        %p1862 = scmp.lt.s32.totalorder %s15, 1
        %s1863 = scalar_select %p1862, %s15, 1
        %s1864 = smul.addr %s1863, 64
        %s1865 = smul.addr %s1864, 8
        %s1866 = scalar_lea.vmem %s3, %s1865
      $region44: #{net_forward.4} parent=39 // pred_fallthru
        _
    $region40: #{net_forward.4} parent=5 // pred_fallthru
      _
  $region6: #{net_forward.4} parent=0 // loop_footer
    %s13 = sadd.s32 1, %s9
  $region7: #{net_forward.4} parent=0 // loop_footer_branch
    %8 = sbr.rel target = $region3
  $region8: #{net_forward.4} parent=0 // loop_exit
    _

// kernel: net_forward.5
$region0: #{net_forward.5}
  #allocation0 [shape = 'u32[]', space=smem, size = 0x4, offset = 0x4, fixed_abs, tag = 'smem constant byte address 0x4 - core index']
  #allocation1 [shape = 'u32[144,128]{1,0:T(1,128)}', space=vmem, size = 0x12000, scoped, tag = 'internal scratch']
  %s0 = inlined_call_operand.vmem [shape: bf16[2,256,800], index: 0, kind: input, shape index: {}]
  %s1 = inlined_call_operand.vmem [shape: bf16[800,32], index: 1, kind: input, shape index: {}]
  %s2 = inlined_call_operand.vmem [shape: f32[1,32], index: 2, kind: input, shape index: {}]
  %s3 = inlined_call_operand.vmem [shape: f32[2,8,15,32], index: 3, kind: output, shape index: {}]
  %s4 = sld [smem:[#allocation0]]
  $region45: #{net_forward.5} parent=0
    _
  %s6 = ssub.s32 1, %s4
  %s7 = scalar_select 0, %s6, %s4
  loop: start=0, step=1, limit=4
  $region2: #{net_forward.5} parent=0 // loop_pre_header
    _
  $region3: #{net_forward.5} parent=0 // loop_header
    %s9 = sphi 0, %s13
    %p10 = scmp.ge.s32.totalorder %s9, 4
    %s19 = sphi 0, %s21
    %s22 = sphi 0, %s19
    %s23 = sphi 0, %s22
    %s39 = sphi 0, %s23
    %s43 = sphi 0, %s43
    %s45 = sphi 0, %s43
    %s46 = sphi 0, %s45
    %s60 = sphi 0, %s46
    %s64 = sphi 0, %s64
    %s66 = sphi 0, %s64
    %s67 = sphi 0, %s66
    %s81 = sphi 0, %s67
    %s87 = sphi 0, %s89
    %s90 = sphi 0, %s87
    %s91 = sphi 0, %s90
    %s107 = sphi 0, %s91
  $region4: #{net_forward.5} parent=0 // loop_header_branch
    %12 = sbr.rel (%p10) target = $region8
  $region5: #{net_forward.5} parent=0 // loop_body
    %s14 = ssub.s32 %s9, 1
    %s15 = ssub.s32 %s9, 2
    %s16 = sadd.s32 %s9, 1
    %s17 = ssub.s32 %s9, %s16
    %p18 = scmp.eq.s32.totalorder %s17, 0
    %s20 = sadd.s32 %s19, 1
    %s21 = scalar_select %p18, %s19, %s20
    %p24 = pneg %p18
    %p25 = scmp.eq.s32.totalorder %s9, 1
    %p26 = por %p24, %p25
    %p27 = scmp.ne.s32.totalorder %s19, %s22
    %p28 = scmp.eq.s32.totalorder %s9, 0
    %p29 = por %p27, %p28
    %p30 = scmp.ne.s32.totalorder %s19, %s22
    %p31 = scmp.eq.s32.totalorder %s14, 1
    %p32 = por %p30, %p31
    %p33 = scmp.ne.s32.totalorder %s22, %s23
    %p34 = scmp.eq.s32.totalorder %s14, 0
    %p35 = por %p33, %p34
    %p36 = scmp.ne.s32.totalorder %s22, %s23
    %p37 = scmp.eq.s32.totalorder %s15, 1
    %p38 = por %p36, %p37
    %p40 = scmp.ne.s32.totalorder %s23, %s39
    %p41 = scmp.eq.s32.totalorder %s15, 0
    %p42 = por %p40, %p41
    %s44 = sadd.s32 %s43, 1
    %p47 = scmp.eq.s32.totalorder %s9, 1
    %p48 = scmp.ne.s32.totalorder %s43, %s45
    %p49 = scmp.eq.s32.totalorder %s9, 0
    %p50 = por %p48, %p49
    %p51 = scmp.ne.s32.totalorder %s43, %s45
    %p52 = scmp.eq.s32.totalorder %s14, 1
    %p53 = por %p51, %p52
    %p54 = scmp.ne.s32.totalorder %s45, %s46
    %p55 = scmp.eq.s32.totalorder %s14, 0
    %p56 = por %p54, %p55
    %p57 = scmp.ne.s32.totalorder %s45, %s46
    %p58 = scmp.eq.s32.totalorder %s15, 1
    %p59 = por %p57, %p58
    %p61 = scmp.ne.s32.totalorder %s46, %s60
    %p62 = scmp.eq.s32.totalorder %s15, 0
    %p63 = por %p61, %p62
    %s65 = sadd.s32 %s64, 1
    %p68 = scmp.eq.s32.totalorder %s9, 1
    %p69 = scmp.ne.s32.totalorder %s64, %s66
    %p70 = scmp.eq.s32.totalorder %s9, 0
    %p71 = por %p69, %p70
    %p72 = scmp.ne.s32.totalorder %s64, %s66
    %p73 = scmp.eq.s32.totalorder %s14, 1
    %p74 = por %p72, %p73
    %p75 = scmp.ne.s32.totalorder %s66, %s67
    %p76 = scmp.eq.s32.totalorder %s14, 0
    %p77 = por %p75, %p76
    %p78 = scmp.ne.s32.totalorder %s66, %s67
    %p79 = scmp.eq.s32.totalorder %s15, 1
    %p80 = por %p78, %p79
    %p82 = scmp.ne.s32.totalorder %s67, %s81
    %p83 = scmp.eq.s32.totalorder %s15, 0
    %p84 = por %p82, %p83
    %s85 = ssub.s32 %s9, %s16
    %p86 = scmp.eq.s32.totalorder %s85, 0
    %s88 = sadd.s32 %s87, 1
    %s89 = scalar_select %p86, %s87, %s88
    %p92 = pneg %p86
    %p93 = scmp.eq.s32.totalorder %s9, 1
    %p94 = por %p92, %p93
    %p95 = scmp.ne.s32.totalorder %s87, %s90
    %p96 = scmp.eq.s32.totalorder %s9, 0
    %p97 = por %p95, %p96
    %p98 = scmp.ne.s32.totalorder %s87, %s90
    %p99 = scmp.eq.s32.totalorder %s14, 1
    %p100 = por %p98, %p99
    %p101 = scmp.ne.s32.totalorder %s90, %s91
    %p102 = scmp.eq.s32.totalorder %s14, 0
    %p103 = por %p101, %p102
    %p104 = scmp.ne.s32.totalorder %s90, %s91
    %p105 = scmp.eq.s32.totalorder %s15, 1
    %p106 = por %p104, %p105
    %p108 = scmp.ne.s32.totalorder %s91, %s107
    %p109 = scmp.eq.s32.totalorder %s15, 0
    %p110 = por %p108, %p109
    %p111 = scmp.le.s32.totalorder 1, %s9
    %p112 = scmp.lt.s32.totalorder %s9, 3
    %p113 = pnand %p111, %p112
    %p114 = pneg %p113
    // Predicated region
    $region9: #{net_forward.5} parent=5 // pred_check
      _
    $region10: #{net_forward.5} parent=5 // pred_check_branch
      %116 = sbr.rel (%p113) target = $region12
    $region11: #{net_forward.5} parent=5 // pred_region
      %s117 = ssub.s32 %s9, 1
      // Predicated region
      $region13: #{net_forward.5} parent=11 // pred_check
        %p118 = pneg %p56
      $region14: #{net_forward.5} parent=11 // pred_check_branch
        %120 = sbr.rel (%p118) target = $region16
      $region15: #{net_forward.5} parent=11 // pred_region
        _
      $region16: #{net_forward.5} parent=11 // pred_fallthru
        _
      // Predicated region
      $region17: #{net_forward.5} parent=11 // pred_check
        %p121 = pneg %p77
      $region18: #{net_forward.5} parent=11 // pred_check_branch
        %123 = sbr.rel (%p121) target = $region20
      $region19: #{net_forward.5} parent=11 // pred_region
        _
      $region20: #{net_forward.5} parent=11 // pred_fallthru
        _
    $region12: #{net_forward.5} parent=5 // pred_fallthru
      _
    %p124 = scmp.lt.s32.totalorder %s9, 2
    // Predicated region
    $region21: #{net_forward.5} parent=5 // pred_check
      %p125 = pneg %p124
    $region22: #{net_forward.5} parent=5 // pred_check_branch
      %127 = sbr.rel (%p125) target = $region24
    $region23: #{net_forward.5} parent=5 // pred_region
      // Predicated region
      $region25: #{net_forward.5} parent=23 // pred_check
        %p128 = pneg %p29
      $region26: #{net_forward.5} parent=23 // pred_check_branch
        %130 = sbr.rel (%p128) target = $region28
      $region27: #{net_forward.5} parent=23 // pred_region
        %p131 = scmp.lt.s32.totalorder %s9, 1
        %s132 = scalar_select %p131, %s9, 1
        %s133 = smul.addr %s132, 224
        %s134 = smul.addr %s133, 4
        %s135 = scalar_lea.vmem %s0, %s134
      $region28: #{net_forward.5} parent=23 // pred_fallthru
        _
    $region24: #{net_forward.5} parent=5 // pred_fallthru
      _
    %p136 = scmp.le.s32.totalorder 1, %s9
    %p137 = scmp.lt.s32.totalorder %s9, 3
    %p138 = pnand %p136, %p137
    %p139 = pneg %p138
    // Predicated region
    $region29: #{net_forward.5} parent=5 // pred_check
      _
    $region30: #{net_forward.5} parent=5 // pred_check_branch
      %141 = sbr.rel (%p138) target = $region32
    $region31: #{net_forward.5} parent=5 // pred_region
      %s142 = ssub.s32 %s9, 1
      %p143 = scmp.lt.s32.totalorder %s14, 1
      %s144 = scalar_select %p143, %s14, 1
      %s145 = smul.addr %s144, 224
      %s146 = smul.addr %s145, 4
      %s147 = scalar_lea.vmem %s0, %s146
      %p148 = pneg %p35
      %p149 = pneg %p32
      %p150 = pneg %p56
      %p151 = pneg %p53
      %p152 = pneg %p77
      %p153 = pneg %p74
      %p154 = pneg %p103
      %p155 = pneg %p100
      %p156 = scmp.lt.s32.totalorder %s14, 1
      %s157 = scalar_select %p156, %s14, 1
      %s158 = smul.addr %s157, 16
      %s159 = smul.addr %s158, 8
      %s160 = scalar_lea.vmem %s3, %s159
      %p161 = scmp.lt.s32.totalorder %s14, 1
      %s162 = scalar_select %p161, %s14, 1
      %s163 = smul.addr %s162, 224
      %s164 = smul.addr %s163, 4
      %s165 = scalar_lea.vmem %s0, %s164
      %p166 = scmp.lt.s32.totalorder %s14, 1
      %s167 = scalar_select %p166, %s14, 1
      %s168 = smul.addr %s167, 16
      %s169 = smul.addr %s168, 8
      %s170 = scalar_lea.vmem %s3, %s169
      %v172 = vld [vmem:[%s165] sm:$0xff]
      %v173 = vld [vmem:[%s165 + $0x8] sm:$0xff]
      %v174 = vld [vmem:[%s165 + $0x10] sm:$0xff]
      %v175 = vld [vmem:[%s165 + $0x18] sm:$0xf]
      %v176 = vld [vmem:[%s165 + $0x1c] sm:$0xff]
      %v177 = vld [vmem:[%s165 + $0x24] sm:$0xff]
      %v178 = vld [vmem:[%s165 + $0x2c] sm:$0xff]
      %v179 = vld [vmem:[%s165 + $0x34] sm:$0xf]
      %v180 = vld [vmem:[%s165 + $0x38] sm:$0xff]
      %v181 = vld [vmem:[%s165 + $0x40] sm:$0xff]
      %v182 = vld [vmem:[%s165 + $0x48] sm:$0xff]
      %v183 = vld [vmem:[%s165 + $0x50] sm:$0xf]
      %v184 = vld [vmem:[%s165 + $0x54] sm:$0xff]
      %v185 = vld [vmem:[%s165 + $0x5c] sm:$0xff]
      %v186 = vld [vmem:[%s165 + $0x64] sm:$0xff]
      %v187 = vld [vmem:[%s165 + $0x6c] sm:$0xf]
      %v188 = vld [vmem:[%s165 + $0x70] sm:$0xff]
      %v189 = vld [vmem:[%s165 + $0x78] sm:$0xff]
      %v190 = vld [vmem:[%s165 + $0x80] sm:$0xff]
      %v191 = vld [vmem:[%s165 + $0x88] sm:$0xf]
      %v192 = vld [vmem:[%s165 + $0x8c] sm:$0xff]
      %v193 = vld [vmem:[%s165 + $0x94] sm:$0xff]
      %v194 = vld [vmem:[%s165 + $0x9c] sm:$0xff]
      %v195 = vld [vmem:[%s165 + $0xa4] sm:$0xf]
      %v196 = vld [vmem:[%s165 + $0xa8] sm:$0xff]
      %v197 = vld [vmem:[%s165 + $0xb0] sm:$0xff]
      %v198 = vld [vmem:[%s165 + $0xb8] sm:$0xff]
      %v199 = vld [vmem:[%s165 + $0xc0] sm:$0xf]
      %v200 = vld [vmem:[%s165 + $0xc4] sm:$0xff]
      %v201 = vld [vmem:[%s165 + $0xcc] sm:$0xff]
      %v202 = vld [vmem:[%s165 + $0xd4] sm:$0xff]
      %v203 = vld [vmem:[%s165 + $0xdc] sm:$0xf]
      %v204 = vld [vmem:[%s165 + $0xe0] sm:$0xff]
      %v205 = vld [vmem:[%s165 + $0xe8] sm:$0xff]
      %v206 = vld [vmem:[%s165 + $0xf0] sm:$0xff]
      %v207 = vld [vmem:[%s165 + $0xf8] sm:$0xf]
      %v208 = vld [vmem:[%s165 + $0xfc] sm:$0xff]
      %v209 = vld [vmem:[%s165 + $0x104] sm:$0xff]
      %v210 = vld [vmem:[%s165 + $0x10c] sm:$0xff]
      %v211 = vld [vmem:[%s165 + $0x114] sm:$0xf]
      %v212 = vld [vmem:[%s165 + $0x118] sm:$0xff]
      %v213 = vld [vmem:[%s165 + $0x120] sm:$0xff]
      %v214 = vld [vmem:[%s165 + $0x128] sm:$0xff]
      %v215 = vld [vmem:[%s165 + $0x130] sm:$0xf]
      %v216 = vld [vmem:[%s165 + $0x134] sm:$0xff]
      %v217 = vld [vmem:[%s165 + $0x13c] sm:$0xff]
      %v218 = vld [vmem:[%s165 + $0x144] sm:$0xff]
      %v219 = vld [vmem:[%s165 + $0x14c] sm:$0xf]
      %v220 = vld [vmem:[%s165 + $0x150] sm:$0xff]
      %v221 = vld [vmem:[%s165 + $0x158] sm:$0xff]
      %v222 = vld [vmem:[%s165 + $0x160] sm:$0xff]
      %v223 = vld [vmem:[%s165 + $0x168] sm:$0xf]
      %v224 = vld [vmem:[%s165 + $0x16c] sm:$0xff]
      %v225 = vld [vmem:[%s165 + $0x174] sm:$0xff]
      %v226 = vld [vmem:[%s165 + $0x17c] sm:$0xff]
      %v227 = vld [vmem:[%s165 + $0x184] sm:$0xf]
      %v228 = vld [vmem:[%s165 + $0x188] sm:$0xff]
      %v229 = vld [vmem:[%s165 + $0x190] sm:$0xff]
      %v230 = vld [vmem:[%s165 + $0x198] sm:$0xff]
      %v231 = vld [vmem:[%s165 + $0x1a0] sm:$0xf]
      %v232 = vld [vmem:[%s165 + $0x1a4] sm:$0xff]
      %v233 = vld [vmem:[%s165 + $0x1ac] sm:$0xff]
      %v234 = vld [vmem:[%s165 + $0x1b4] sm:$0xff]
      %v235 = vld [vmem:[%s165 + $0x1bc] sm:$0xf]
      %v236 = vld [vmem:[%s165 + $0x1c0] sm:$0xff]
      %v237 = vld [vmem:[%s165 + $0x1c8] sm:$0xff]
      %v238 = vld [vmem:[%s165 + $0x1d0] sm:$0xff]
      %v239 = vld [vmem:[%s165 + $0x1d8] sm:$0xf]
      %v240 = vld [vmem:[%s165 + $0x1dc] sm:$0xff]
      %v241 = vld [vmem:[%s165 + $0x1e4] sm:$0xff]
      %v242 = vld [vmem:[%s165 + $0x1ec] sm:$0xff]
      %v243 = vld [vmem:[%s165 + $0x1f4] sm:$0xf]
      %v244 = vld [vmem:[%s165 + $0x1f8] sm:$0xff]
      %v245 = vld [vmem:[%s165 + $0x200] sm:$0xff]
      %v246 = vld [vmem:[%s165 + $0x208] sm:$0xff]
      %v247 = vld [vmem:[%s165 + $0x210] sm:$0xf]
      %v248 = vld [vmem:[%s165 + $0x214] sm:$0xff]
      %v249 = vld [vmem:[%s165 + $0x21c] sm:$0xff]
      %v250 = vld [vmem:[%s165 + $0x224] sm:$0xff]
      %v251 = vld [vmem:[%s165 + $0x22c] sm:$0xf]
      %v252 = vld [vmem:[%s165 + $0x230] sm:$0xff]
      %v253 = vld [vmem:[%s165 + $0x238] sm:$0xff]
      %v254 = vld [vmem:[%s165 + $0x240] sm:$0xff]
      %v255 = vld [vmem:[%s165 + $0x248] sm:$0xf]
      %v256 = vld [vmem:[%s165 + $0x24c] sm:$0xff]
      %v257 = vld [vmem:[%s165 + $0x254] sm:$0xff]
      %v258 = vld [vmem:[%s165 + $0x25c] sm:$0xff]
      %v259 = vld [vmem:[%s165 + $0x264] sm:$0xf]
      %v260 = vld [vmem:[%s165 + $0x268] sm:$0xff]
      %v261 = vld [vmem:[%s165 + $0x270] sm:$0xff]
      %v262 = vld [vmem:[%s165 + $0x278] sm:$0xff]
      %v263 = vld [vmem:[%s165 + $0x280] sm:$0xf]
      %v264 = vld [vmem:[%s165 + $0x284] sm:$0xff]
      %v265 = vld [vmem:[%s165 + $0x28c] sm:$0xff]
      %v266 = vld [vmem:[%s165 + $0x294] sm:$0xff]
      %v267 = vld [vmem:[%s165 + $0x29c] sm:$0xf]
      %v268 = vld [vmem:[%s165 + $0x2a0] sm:$0xff]
      %v269 = vld [vmem:[%s165 + $0x2a8] sm:$0xff]
      %v270 = vld [vmem:[%s165 + $0x2b0] sm:$0xff]
      %v271 = vld [vmem:[%s165 + $0x2b8] sm:$0xf]
      %v272 = vld [vmem:[%s165 + $0x2bc] sm:$0xff]
      %v273 = vld [vmem:[%s165 + $0x2c4] sm:$0xff]
      %v274 = vld [vmem:[%s165 + $0x2cc] sm:$0xff]
      %v275 = vld [vmem:[%s165 + $0x2d4] sm:$0xf]
      %v276 = vld [vmem:[%s165 + $0x2d8] sm:$0xff]
      %v277 = vld [vmem:[%s165 + $0x2e0] sm:$0xff]
      %v278 = vld [vmem:[%s165 + $0x2e8] sm:$0xff]
      %v279 = vld [vmem:[%s165 + $0x2f0] sm:$0xf]
      %v280 = vld [vmem:[%s165 + $0x2f4] sm:$0xff]
      %v281 = vld [vmem:[%s165 + $0x2fc] sm:$0xff]
      %v282 = vld [vmem:[%s165 + $0x304] sm:$0xff]
      %v283 = vld [vmem:[%s165 + $0x30c] sm:$0xf]
      %v284 = vld [vmem:[%s165 + $0x310] sm:$0xff]
      %v285 = vld [vmem:[%s165 + $0x318] sm:$0xff]
      %v286 = vld [vmem:[%s165 + $0x320] sm:$0xff]
      %v287 = vld [vmem:[%s165 + $0x328] sm:$0xf]
      %v288 = vld [vmem:[%s165 + $0x32c] sm:$0xff]
      %v289 = vld [vmem:[%s165 + $0x334] sm:$0xff]
      %v290 = vld [vmem:[%s165 + $0x33c] sm:$0xff]
      %v291 = vld [vmem:[%s165 + $0x344] sm:$0xf]
      %v292 = vld [vmem:[%s165 + $0x348] sm:$0xff]
      %v293 = vld [vmem:[%s165 + $0x350] sm:$0xff]
      %v294 = vld [vmem:[%s165 + $0x358] sm:$0xff]
      %v295 = vld [vmem:[%s165 + $0x360] sm:$0xf]
      %v296 = vld [vmem:[%s165 + $0x364] sm:$0xff]
      %v297 = vld [vmem:[%s165 + $0x36c] sm:$0xff]
      %v298 = vld [vmem:[%s165 + $0x374] sm:$0xff]
      %v299 = vld [vmem:[%s165 + $0x37c] sm:$0xf]
      %v300 = vld [vmem:[%s1] sm:$0xf]
      %v301 = vld [vmem:[%s1 + $0x4] sm:$0xf]
      %v302 = vld [vmem:[%s1 + $0x8] sm:$0xf]
      %v303 = vld [vmem:[%s1 + $0xc] sm:$0xf]
      %v304 = vld [vmem:[%s1 + $0x10] sm:$0xf]
      %v305 = vld [vmem:[%s1 + $0x14] sm:$0xf]
      %v306 = vld [vmem:[%s1 + $0x18] sm:$0xf]
      %v307 = vld [vmem:[%s1 + $0x1c] sm:$0xf]
      %v308 = vld [vmem:[%s1 + $0x20] sm:$0xf]
      %v309 = vld [vmem:[%s1 + $0x24] sm:$0xf]
      %v310 = vld [vmem:[%s1 + $0x28] sm:$0xf]
      %v311 = vld [vmem:[%s1 + $0x2c] sm:$0xf]
      %v312 = vld [vmem:[%s1 + $0x30] sm:$0xf]
      %v313 = vld [vmem:[%s1 + $0x34] sm:$0xf]
      %v314 = vld [vmem:[%s1 + $0x38] sm:$0xf]
      %v315 = vld [vmem:[%s1 + $0x3c] sm:$0xf]
      %v316 = vld [vmem:[%s1 + $0x40] sm:$0xf]
      %v317 = vld [vmem:[%s1 + $0x44] sm:$0xf]
      %v318 = vld [vmem:[%s1 + $0x48] sm:$0xf]
      %v319 = vld [vmem:[%s1 + $0x4c] sm:$0xf]
      %v320 = vld [vmem:[%s1 + $0x50] sm:$0xf]
      %v321 = vld [vmem:[%s1 + $0x54] sm:$0xf]
      %v322 = vld [vmem:[%s1 + $0x58] sm:$0xf]
      %v323 = vld [vmem:[%s1 + $0x5c] sm:$0xf]
      %v324 = vld [vmem:[%s1 + $0x60] sm:$0xf]
      %v325 = vld [vmem:[%s1 + $0x64] sm:$0xf]
      %v326 = vld [vmem:[%s1 + $0x68] sm:$0xf]
      %v327 = vld [vmem:[%s1 + $0x6c] sm:$0xf]
      %v328 = vld [vmem:[%s1 + $0x70] sm:$0xf]
      %v329 = vld [vmem:[%s1 + $0x74] sm:$0xf]
      %v330 = vld [vmem:[%s1 + $0x78] sm:$0xf]
      %v331 = vld [vmem:[%s1 + $0x7c] sm:$0xf]
      %v332 = vld [vmem:[%s1 + $0x80] sm:$0xf]
      %v333 = vld [vmem:[%s1 + $0x84] sm:$0xf]
      %v334 = vld [vmem:[%s1 + $0x88] sm:$0xf]
      %v335 = vld [vmem:[%s1 + $0x8c] sm:$0xf]
      %v336 = vld [vmem:[%s1 + $0x90] sm:$0xf]
      %v337 = vld [vmem:[%s1 + $0x94] sm:$0xf]
      %v338 = vld [vmem:[%s1 + $0x98] sm:$0xf]
      %v339 = vld [vmem:[%s1 + $0x9c] sm:$0xf]
      %v340 = vld [vmem:[%s1 + $0xa0] sm:$0xf]
      %v341 = vld [vmem:[%s1 + $0xa4] sm:$0xf]
      %v342 = vld [vmem:[%s1 + $0xa8] sm:$0xf]
      %v343 = vld [vmem:[%s1 + $0xac] sm:$0xf]
      %v344 = vld [vmem:[%s1 + $0xb0] sm:$0xf]
      %v345 = vld [vmem:[%s1 + $0xb4] sm:$0xf]
      %v346 = vld [vmem:[%s1 + $0xb8] sm:$0xf]
      %v347 = vld [vmem:[%s1 + $0xbc] sm:$0xf]
      %v348 = vld [vmem:[%s1 + $0xc0] sm:$0xf]
      %v349 = vld [vmem:[%s1 + $0xc4] sm:$0xf]
      %v350 = vld [vmem:[%s1 + $0xc8] sm:$0xf]
      %v351 = vld [vmem:[%s1 + $0xcc] sm:$0xf]
      %v352 = vld [vmem:[%s1 + $0xd0] sm:$0xf]
      %v353 = vld [vmem:[%s1 + $0xd4] sm:$0xf]
      %v354 = vld [vmem:[%s1 + $0xd8] sm:$0xf]
      %v355 = vld [vmem:[%s1 + $0xdc] sm:$0xf]
      %v356 = vld [vmem:[%s1 + $0xe0] sm:$0xf]
      %v357 = vld [vmem:[%s1 + $0xe4] sm:$0xf]
      %v358 = vld [vmem:[%s1 + $0xe8] sm:$0xf]
      %v359 = vld [vmem:[%s1 + $0xec] sm:$0xf]
      %v360 = vld [vmem:[%s1 + $0xf0] sm:$0xf]
      %v361 = vld [vmem:[%s1 + $0xf4] sm:$0xf]
      %v362 = vld [vmem:[%s1 + $0xf8] sm:$0xf]
      %v363 = vld [vmem:[%s1 + $0xfc] sm:$0xf]
      %v364 = vld [vmem:[%s1 + $0x100] sm:$0xf]
      %v365 = vld [vmem:[%s1 + $0x104] sm:$0xf]
      %v366 = vld [vmem:[%s1 + $0x108] sm:$0xf]
      %v367 = vld [vmem:[%s1 + $0x10c] sm:$0xf]
      %v368 = vld [vmem:[%s1 + $0x110] sm:$0xf]
      %v369 = vld [vmem:[%s1 + $0x114] sm:$0xf]
      %v370 = vld [vmem:[%s1 + $0x118] sm:$0xf]
      %v371 = vld [vmem:[%s1 + $0x11c] sm:$0xf]
      %v372 = vld [vmem:[%s1 + $0x120] sm:$0xf]
      %v373 = vld [vmem:[%s1 + $0x124] sm:$0xf]
      %v374 = vld [vmem:[%s1 + $0x128] sm:$0xf]
      %v375 = vld [vmem:[%s1 + $0x12c] sm:$0xf]
      %v376 = vld [vmem:[%s1 + $0x130] sm:$0xf]
      %v377 = vld [vmem:[%s1 + $0x134] sm:$0xf]
      %v378 = vld [vmem:[%s1 + $0x138] sm:$0xf]
      %v379 = vld [vmem:[%s1 + $0x13c] sm:$0xf]
      %v380 = vld [vmem:[%s1 + $0x140] sm:$0xf]
      %v381 = vld [vmem:[%s1 + $0x144] sm:$0xf]
      %v382 = vld [vmem:[%s1 + $0x148] sm:$0xf]
      %v383 = vld [vmem:[%s1 + $0x14c] sm:$0xf]
      %v384 = vld [vmem:[%s1 + $0x150] sm:$0xf]
      %v385 = vld [vmem:[%s1 + $0x154] sm:$0xf]
      %v386 = vld [vmem:[%s1 + $0x158] sm:$0xf]
      %v387 = vld [vmem:[%s1 + $0x15c] sm:$0xf]
      %v388 = vld [vmem:[%s1 + $0x160] sm:$0xf]
      %v389 = vld [vmem:[%s1 + $0x164] sm:$0xf]
      %v390 = vld [vmem:[%s1 + $0x168] sm:$0xf]
      %v391 = vld [vmem:[%s1 + $0x16c] sm:$0xf]
      %v392 = vld [vmem:[%s1 + $0x170] sm:$0xf]
      %v393 = vld [vmem:[%s1 + $0x174] sm:$0xf]
      %v394 = vld [vmem:[%s1 + $0x178] sm:$0xf]
      %v395 = vld [vmem:[%s1 + $0x17c] sm:$0xf]
      %v396 = vld [vmem:[%s1 + $0x180] sm:$0xf]
      %v397 = vld [vmem:[%s1 + $0x184] sm:$0xf]
      %v398 = vld [vmem:[%s1 + $0x188] sm:$0xf]
      %v399 = vld [vmem:[%s1 + $0x18c] sm:$0xf]
      %v400 = vld [vmem:[%s2] sm:$0x1]
      %v402 = vlaneseq
      %v403 = vshrl.u32 %v402, 7
      %v404 = vsub.s32 0, %v403
      %v405 = vrot.slane %v400, %v404
      %v535 = vunpack.c.l.b16 %v172
      %v536 = vunpack.c.h.b16 %v172
      %v537 = vunpack.c.l.b16 %v173
      %v538 = vunpack.c.h.b16 %v173
      %v539 = vunpack.c.l.b16 %v174
      %v540 = vunpack.c.h.b16 %v174
      %v541 = vunpack.c.l.b16 %v175
      %v542 = vunpack.c.l.b16 %v176
      %v543 = vunpack.c.h.b16 %v176
      %v544 = vunpack.c.l.b16 %v177
      %v545 = vunpack.c.h.b16 %v177
      %v546 = vunpack.c.l.b16 %v178
      %v547 = vunpack.c.h.b16 %v178
      %v548 = vunpack.c.l.b16 %v179
      %v549 = vunpack.c.l.b16 %v180
      %v550 = vunpack.c.h.b16 %v180
      %v551 = vunpack.c.l.b16 %v181
      %v552 = vunpack.c.h.b16 %v181
      %v553 = vunpack.c.l.b16 %v182
      %v554 = vunpack.c.h.b16 %v182
      %v555 = vunpack.c.l.b16 %v183
      %v556 = vunpack.c.l.b16 %v184
      %v557 = vunpack.c.h.b16 %v184
      %v558 = vunpack.c.l.b16 %v185
      %v559 = vunpack.c.h.b16 %v185
      %v560 = vunpack.c.l.b16 %v186
      %v561 = vunpack.c.h.b16 %v186
      %v562 = vunpack.c.l.b16 %v187
      %v563 = vunpack.c.l.b16 %v188
      %v564 = vunpack.c.h.b16 %v188
      %v565 = vunpack.c.l.b16 %v189
      %v566 = vunpack.c.h.b16 %v189
      %v567 = vunpack.c.l.b16 %v190
      %v568 = vunpack.c.h.b16 %v190
      %v569 = vunpack.c.l.b16 %v191
      %v570 = vunpack.c.l.b16 %v192
      %v571 = vunpack.c.h.b16 %v192
      %v572 = vunpack.c.l.b16 %v193
      %v573 = vunpack.c.h.b16 %v193
      %v574 = vunpack.c.l.b16 %v194
      %v575 = vunpack.c.h.b16 %v194
      %v576 = vunpack.c.l.b16 %v195
      %v577 = vunpack.c.l.b16 %v196
      %v578 = vunpack.c.h.b16 %v196
      %v579 = vunpack.c.l.b16 %v197
      %v580 = vunpack.c.h.b16 %v197
      %v581 = vunpack.c.l.b16 %v198
      %v582 = vunpack.c.h.b16 %v198
      %v583 = vunpack.c.l.b16 %v199
      %v584 = vunpack.c.l.b16 %v200
      %v585 = vunpack.c.h.b16 %v200
      %v586 = vunpack.c.l.b16 %v201
      %v587 = vunpack.c.h.b16 %v201
      %v588 = vunpack.c.l.b16 %v202
      %v589 = vunpack.c.h.b16 %v202
      %v590 = vunpack.c.l.b16 %v203
      %v591 = vunpack.c.l.b16 %v204
      %v592 = vunpack.c.h.b16 %v204
      %v593 = vunpack.c.l.b16 %v205
      %v594 = vunpack.c.h.b16 %v205
      %v595 = vunpack.c.l.b16 %v206
      %v596 = vunpack.c.h.b16 %v206
      %v597 = vunpack.c.l.b16 %v207
      %v598 = vunpack.c.l.b16 %v208
      %v599 = vunpack.c.h.b16 %v208
      %v600 = vunpack.c.l.b16 %v209
      %v601 = vunpack.c.h.b16 %v209
      %v602 = vunpack.c.l.b16 %v210
      %v603 = vunpack.c.h.b16 %v210
      %v604 = vunpack.c.l.b16 %v211
      %v605 = vunpack.c.l.b16 %v212
      %v606 = vunpack.c.h.b16 %v212
      %v607 = vunpack.c.l.b16 %v213
      %v608 = vunpack.c.h.b16 %v213
      %v609 = vunpack.c.l.b16 %v214
      %v610 = vunpack.c.h.b16 %v214
      %v611 = vunpack.c.l.b16 %v215
      %v612 = vunpack.c.l.b16 %v216
      %v613 = vunpack.c.h.b16 %v216
      %v614 = vunpack.c.l.b16 %v217
      %v615 = vunpack.c.h.b16 %v217
      %v616 = vunpack.c.l.b16 %v218
      %v617 = vunpack.c.h.b16 %v218
      %v618 = vunpack.c.l.b16 %v219
      %v619 = vunpack.c.l.b16 %v220
      %v620 = vunpack.c.h.b16 %v220
      %v621 = vunpack.c.l.b16 %v221
      %v622 = vunpack.c.h.b16 %v221
      %v623 = vunpack.c.l.b16 %v222
      %v624 = vunpack.c.h.b16 %v222
      %v625 = vunpack.c.l.b16 %v223
      %v626 = vunpack.c.l.b16 %v224
      %v627 = vunpack.c.h.b16 %v224
      %v628 = vunpack.c.l.b16 %v225
      %v629 = vunpack.c.h.b16 %v225
      %v630 = vunpack.c.l.b16 %v226
      %v631 = vunpack.c.h.b16 %v226
      %v632 = vunpack.c.l.b16 %v227
      %v633 = vunpack.c.l.b16 %v228
      %v634 = vunpack.c.h.b16 %v228
      %v635 = vunpack.c.l.b16 %v229
      %v636 = vunpack.c.h.b16 %v229
      %v637 = vunpack.c.l.b16 %v230
      %v638 = vunpack.c.h.b16 %v230
      %v639 = vunpack.c.l.b16 %v231
      %v640 = vunpack.c.l.b16 %v232
      %v641 = vunpack.c.h.b16 %v232
      %v642 = vunpack.c.l.b16 %v233
      %v643 = vunpack.c.h.b16 %v233
      %v644 = vunpack.c.l.b16 %v234
      %v645 = vunpack.c.h.b16 %v234
      %v646 = vunpack.c.l.b16 %v235
      %v647 = vunpack.c.l.b16 %v236
      %v648 = vunpack.c.h.b16 %v236
      %v649 = vunpack.c.l.b16 %v237
      %v650 = vunpack.c.h.b16 %v237
      %v651 = vunpack.c.l.b16 %v238
      %v652 = vunpack.c.h.b16 %v238
      %v653 = vunpack.c.l.b16 %v239
      %v654 = vunpack.c.l.b16 %v240
      %v655 = vunpack.c.h.b16 %v240
      %v656 = vunpack.c.l.b16 %v241
      %v657 = vunpack.c.h.b16 %v241
      %v658 = vunpack.c.l.b16 %v242
      %v659 = vunpack.c.h.b16 %v242
      %v660 = vunpack.c.l.b16 %v243
      %v661 = vunpack.c.l.b16 %v244
      %v662 = vunpack.c.h.b16 %v244
      %v663 = vunpack.c.l.b16 %v245
      %v664 = vunpack.c.h.b16 %v245
      %v665 = vunpack.c.l.b16 %v246
      %v666 = vunpack.c.h.b16 %v246
      %v667 = vunpack.c.l.b16 %v247
      %v668 = vunpack.c.l.b16 %v248
      %v669 = vunpack.c.h.b16 %v248
      %v670 = vunpack.c.l.b16 %v249
      %v671 = vunpack.c.h.b16 %v249
      %v672 = vunpack.c.l.b16 %v250
      %v673 = vunpack.c.h.b16 %v250
      %v674 = vunpack.c.l.b16 %v251
      %v675 = vunpack.c.l.b16 %v252
      %v676 = vunpack.c.h.b16 %v252
      %v677 = vunpack.c.l.b16 %v253
      %v678 = vunpack.c.h.b16 %v253
      %v679 = vunpack.c.l.b16 %v254
      %v680 = vunpack.c.h.b16 %v254
      %v681 = vunpack.c.l.b16 %v255
      %v682 = vunpack.c.l.b16 %v256
      %v683 = vunpack.c.h.b16 %v256
      %v684 = vunpack.c.l.b16 %v257
      %v685 = vunpack.c.h.b16 %v257
      %v686 = vunpack.c.l.b16 %v258
      %v687 = vunpack.c.h.b16 %v258
      %v688 = vunpack.c.l.b16 %v259
      %v689 = vunpack.c.l.b16 %v260
      %v690 = vunpack.c.h.b16 %v260
      %v691 = vunpack.c.l.b16 %v261
      %v692 = vunpack.c.h.b16 %v261
      %v693 = vunpack.c.l.b16 %v262
      %v694 = vunpack.c.h.b16 %v262
      %v695 = vunpack.c.l.b16 %v263
      %v696 = vunpack.c.l.b16 %v264
      %v697 = vunpack.c.h.b16 %v264
      %v698 = vunpack.c.l.b16 %v265
      %v699 = vunpack.c.h.b16 %v265
      %v700 = vunpack.c.l.b16 %v266
      %v701 = vunpack.c.h.b16 %v266
      %v702 = vunpack.c.l.b16 %v267
      %v703 = vunpack.c.l.b16 %v268
      %v704 = vunpack.c.h.b16 %v268
      %v705 = vunpack.c.l.b16 %v269
      %v706 = vunpack.c.h.b16 %v269
      %v707 = vunpack.c.l.b16 %v270
      %v708 = vunpack.c.h.b16 %v270
      %v709 = vunpack.c.l.b16 %v271
      %v710 = vunpack.c.l.b16 %v272
      %v711 = vunpack.c.h.b16 %v272
      %v712 = vunpack.c.l.b16 %v273
      %v713 = vunpack.c.h.b16 %v273
      %v714 = vunpack.c.l.b16 %v274
      %v715 = vunpack.c.h.b16 %v274
      %v716 = vunpack.c.l.b16 %v275
      %v717 = vunpack.c.l.b16 %v276
      %v718 = vunpack.c.h.b16 %v276
      %v719 = vunpack.c.l.b16 %v277
      %v720 = vunpack.c.h.b16 %v277
      %v721 = vunpack.c.l.b16 %v278
      %v722 = vunpack.c.h.b16 %v278
      %v723 = vunpack.c.l.b16 %v279
      %v724 = vunpack.c.l.b16 %v280
      %v725 = vunpack.c.h.b16 %v280
      %v726 = vunpack.c.l.b16 %v281
      %v727 = vunpack.c.h.b16 %v281
      %v728 = vunpack.c.l.b16 %v282
      %v729 = vunpack.c.h.b16 %v282
      %v730 = vunpack.c.l.b16 %v283
      %v731 = vunpack.c.l.b16 %v284
      %v732 = vunpack.c.h.b16 %v284
      %v733 = vunpack.c.l.b16 %v285
      %v734 = vunpack.c.h.b16 %v285
      %v735 = vunpack.c.l.b16 %v286
      %v736 = vunpack.c.h.b16 %v286
      %v737 = vunpack.c.l.b16 %v287
      %v738 = vunpack.c.l.b16 %v288
      %v739 = vunpack.c.h.b16 %v288
      %v740 = vunpack.c.l.b16 %v289
      %v741 = vunpack.c.h.b16 %v289
      %v742 = vunpack.c.l.b16 %v290
      %v743 = vunpack.c.h.b16 %v290
      %v744 = vunpack.c.l.b16 %v291
      %v745 = vunpack.c.l.b16 %v292
      %v746 = vunpack.c.h.b16 %v292
      %v747 = vunpack.c.l.b16 %v293
      %v748 = vunpack.c.h.b16 %v293
      %v749 = vunpack.c.l.b16 %v294
      %v750 = vunpack.c.h.b16 %v294
      %v751 = vunpack.c.l.b16 %v295
      %v752 = vunpack.c.l.b16 %v296
      %v753 = vunpack.c.h.b16 %v296
      %v754 = vunpack.c.l.b16 %v297
      %v755 = vunpack.c.h.b16 %v297
      %v756 = vunpack.c.l.b16 %v298
      %v757 = vunpack.c.h.b16 %v298
      %v758 = vunpack.c.l.b16 %v299
      %v759 = vpack.c.b16 %v542, %v535
      %v760 = vpack.c.b16 %v543, %v536
      %v761 = vpack.c.b16 %v544, %v537
      %v762 = vpack.c.b16 %v545, %v538
      %v763 = vpack.c.b16 %v546, %v539
      %v764 = vpack.c.b16 %v547, %v540
      %v765 = vpack.c.b16 %v548, %v541
      %v766 = vpack.c.b16 %v556, %v549
      %v767 = vpack.c.b16 %v557, %v550
      %v768 = vpack.c.b16 %v558, %v551
      %v769 = vpack.c.b16 %v559, %v552
      %v770 = vpack.c.b16 %v560, %v553
      %v771 = vpack.c.b16 %v561, %v554
      %v772 = vpack.c.b16 %v562, %v555
      %v773 = vpack.c.b16 %v570, %v563
      %v774 = vpack.c.b16 %v571, %v564
      %v775 = vpack.c.b16 %v572, %v565
      %v776 = vpack.c.b16 %v573, %v566
      %v777 = vpack.c.b16 %v574, %v567
      %v778 = vpack.c.b16 %v575, %v568
      %v779 = vpack.c.b16 %v576, %v569
      %v780 = vpack.c.b16 %v584, %v577
      %v781 = vpack.c.b16 %v585, %v578
      %v782 = vpack.c.b16 %v586, %v579
      %v783 = vpack.c.b16 %v587, %v580
      %v784 = vpack.c.b16 %v588, %v581
      %v785 = vpack.c.b16 %v589, %v582
      %v786 = vpack.c.b16 %v590, %v583
      %v787 = vpack.c.b16 %v598, %v591
      %v788 = vpack.c.b16 %v599, %v592
      %v789 = vpack.c.b16 %v600, %v593
      %v790 = vpack.c.b16 %v601, %v594
      %v791 = vpack.c.b16 %v602, %v595
      %v792 = vpack.c.b16 %v603, %v596
      %v793 = vpack.c.b16 %v604, %v597
      %v794 = vpack.c.b16 %v612, %v605
      %v795 = vpack.c.b16 %v613, %v606
      %v796 = vpack.c.b16 %v614, %v607
      %v797 = vpack.c.b16 %v615, %v608
      %v798 = vpack.c.b16 %v616, %v609
      %v799 = vpack.c.b16 %v617, %v610
      %v800 = vpack.c.b16 %v618, %v611
      %v801 = vpack.c.b16 %v626, %v619
      %v802 = vpack.c.b16 %v627, %v620
      %v803 = vpack.c.b16 %v628, %v621
      %v804 = vpack.c.b16 %v629, %v622
      %v805 = vpack.c.b16 %v630, %v623
      %v806 = vpack.c.b16 %v631, %v624
      %v807 = vpack.c.b16 %v632, %v625
      %v808 = vpack.c.b16 %v640, %v633
      %v809 = vpack.c.b16 %v641, %v634
      %v810 = vpack.c.b16 %v642, %v635
      %v811 = vpack.c.b16 %v643, %v636
      %v812 = vpack.c.b16 %v644, %v637
      %v813 = vpack.c.b16 %v645, %v638
      %v814 = vpack.c.b16 %v646, %v639
      %v815 = vpack.c.b16 %v654, %v647
      %v816 = vpack.c.b16 %v655, %v648
      %v817 = vpack.c.b16 %v656, %v649
      %v818 = vpack.c.b16 %v657, %v650
      %v819 = vpack.c.b16 %v658, %v651
      %v820 = vpack.c.b16 %v659, %v652
      %v821 = vpack.c.b16 %v660, %v653
      %v822 = vpack.c.b16 %v668, %v661
      %v823 = vpack.c.b16 %v669, %v662
      %v824 = vpack.c.b16 %v670, %v663
      %v825 = vpack.c.b16 %v671, %v664
      %v826 = vpack.c.b16 %v672, %v665
      %v827 = vpack.c.b16 %v673, %v666
      %v828 = vpack.c.b16 %v674, %v667
      %v829 = vpack.c.b16 %v682, %v675
      %v830 = vpack.c.b16 %v683, %v676
      %v831 = vpack.c.b16 %v684, %v677
      %v832 = vpack.c.b16 %v685, %v678
      %v833 = vpack.c.b16 %v686, %v679
      %v834 = vpack.c.b16 %v687, %v680
      %v835 = vpack.c.b16 %v688, %v681
      %v836 = vpack.c.b16 %v696, %v689
      %v837 = vpack.c.b16 %v697, %v690
      %v838 = vpack.c.b16 %v698, %v691
      %v839 = vpack.c.b16 %v699, %v692
      %v840 = vpack.c.b16 %v700, %v693
      %v841 = vpack.c.b16 %v701, %v694
      %v842 = vpack.c.b16 %v702, %v695
      %v843 = vpack.c.b16 %v710, %v703
      %v844 = vpack.c.b16 %v711, %v704
      %v845 = vpack.c.b16 %v712, %v705
      %v846 = vpack.c.b16 %v713, %v706
      %v847 = vpack.c.b16 %v714, %v707
      %v848 = vpack.c.b16 %v715, %v708
      %v849 = vpack.c.b16 %v716, %v709
      %v850 = vpack.c.b16 %v724, %v717
      %v851 = vpack.c.b16 %v725, %v718
      %v852 = vpack.c.b16 %v726, %v719
      %v853 = vpack.c.b16 %v727, %v720
      %v854 = vpack.c.b16 %v728, %v721
      %v855 = vpack.c.b16 %v729, %v722
      %v856 = vpack.c.b16 %v730, %v723
      %v857 = vpack.c.b16 %v738, %v731
      %v858 = vpack.c.b16 %v739, %v732
      %v859 = vpack.c.b16 %v740, %v733
      %v860 = vpack.c.b16 %v741, %v734
      %v861 = vpack.c.b16 %v742, %v735
      %v862 = vpack.c.b16 %v743, %v736
      %v863 = vpack.c.b16 %v744, %v737
      %v864 = vpack.c.b16 %v752, %v745
      %v865 = vpack.c.b16 %v753, %v746
      %v866 = vpack.c.b16 %v754, %v747
      %v867 = vpack.c.b16 %v755, %v748
      %v868 = vpack.c.b16 %v756, %v749
      %v869 = vpack.c.b16 %v757, %v750
      %v870 = vpack.c.b16 %v758, %v751
      %v1067 = vunpack.c.l.b16 %v300
      %v1068 = vunpack.c.l.b16 %v301
      %v1069 = vunpack.c.l.b16 %v302
      %v1070 = vunpack.c.l.b16 %v303
      %v1071 = vunpack.c.l.b16 %v304
      %v1072 = vunpack.c.l.b16 %v305
      %v1073 = vunpack.c.l.b16 %v306
      %v1074 = vunpack.c.l.b16 %v307
      %v1075 = vunpack.c.l.b16 %v308
      %v1076 = vunpack.c.l.b16 %v309
      %v1077 = vunpack.c.l.b16 %v310
      %v1078 = vunpack.c.l.b16 %v311
      %v1079 = vunpack.c.l.b16 %v312
      %v1080 = vunpack.c.l.b16 %v313
      %v1081 = vunpack.c.l.b16 %v314
      %v1082 = vunpack.c.l.b16 %v315
      %v1083 = vunpack.c.l.b16 %v316
      %v1084 = vunpack.c.l.b16 %v317
      %v1085 = vunpack.c.l.b16 %v318
      %v1086 = vunpack.c.l.b16 %v319
      %v1087 = vunpack.c.l.b16 %v320
      %v1088 = vunpack.c.l.b16 %v321
      %v1089 = vunpack.c.l.b16 %v322
      %v1090 = vunpack.c.l.b16 %v323
      %v1091 = vunpack.c.l.b16 %v324
      %v1092 = vunpack.c.l.b16 %v325
      %v1093 = vunpack.c.l.b16 %v326
      %v1094 = vunpack.c.l.b16 %v327
      %v1095 = vunpack.c.l.b16 %v328
      %v1096 = vunpack.c.l.b16 %v329
      %v1097 = vunpack.c.l.b16 %v330
      %v1098 = vunpack.c.l.b16 %v331
      %v1099 = vunpack.c.l.b16 %v332
      %v1100 = vunpack.c.l.b16 %v333
      %v1101 = vunpack.c.l.b16 %v334
      %v1102 = vunpack.c.l.b16 %v335
      %v1103 = vunpack.c.l.b16 %v336
      %v1104 = vunpack.c.l.b16 %v337
      %v1105 = vunpack.c.l.b16 %v338
      %v1106 = vunpack.c.l.b16 %v339
      %v1107 = vunpack.c.l.b16 %v340
      %v1108 = vunpack.c.l.b16 %v341
      %v1109 = vunpack.c.l.b16 %v342
      %v1110 = vunpack.c.l.b16 %v343
      %v1111 = vunpack.c.l.b16 %v344
      %v1112 = vunpack.c.l.b16 %v345
      %v1113 = vunpack.c.l.b16 %v346
      %v1114 = vunpack.c.l.b16 %v347
      %v1115 = vunpack.c.l.b16 %v348
      %v1116 = vunpack.c.l.b16 %v349
      %v1117 = vunpack.c.l.b16 %v350
      %v1118 = vunpack.c.l.b16 %v351
      %v1119 = vunpack.c.l.b16 %v352
      %v1120 = vunpack.c.l.b16 %v353
      %v1121 = vunpack.c.l.b16 %v354
      %v1122 = vunpack.c.l.b16 %v355
      %v1123 = vunpack.c.l.b16 %v356
      %v1124 = vunpack.c.l.b16 %v357
      %v1125 = vunpack.c.l.b16 %v358
      %v1126 = vunpack.c.l.b16 %v359
      %v1127 = vunpack.c.l.b16 %v360
      %v1128 = vunpack.c.l.b16 %v361
      %v1129 = vunpack.c.l.b16 %v362
      %v1130 = vunpack.c.l.b16 %v363
      %v1131 = vunpack.c.l.b16 %v364
      %v1132 = vunpack.c.l.b16 %v365
      %v1133 = vunpack.c.l.b16 %v366
      %v1134 = vunpack.c.l.b16 %v367
      %v1135 = vunpack.c.l.b16 %v368
      %v1136 = vunpack.c.l.b16 %v369
      %v1137 = vunpack.c.l.b16 %v370
      %v1138 = vunpack.c.l.b16 %v371
      %v1139 = vunpack.c.l.b16 %v372
      %v1140 = vunpack.c.l.b16 %v373
      %v1141 = vunpack.c.l.b16 %v374
      %v1142 = vunpack.c.l.b16 %v375
      %v1143 = vunpack.c.l.b16 %v376
      %v1144 = vunpack.c.l.b16 %v377
      %v1145 = vunpack.c.l.b16 %v378
      %v1146 = vunpack.c.l.b16 %v379
      %v1147 = vunpack.c.l.b16 %v380
      %v1148 = vunpack.c.l.b16 %v381
      %v1149 = vunpack.c.l.b16 %v382
      %v1150 = vunpack.c.l.b16 %v383
      %v1151 = vunpack.c.l.b16 %v384
      %v1152 = vunpack.c.l.b16 %v385
      %v1153 = vunpack.c.l.b16 %v386
      %v1154 = vunpack.c.l.b16 %v387
      %v1155 = vunpack.c.l.b16 %v388
      %v1156 = vunpack.c.l.b16 %v389
      %v1157 = vunpack.c.l.b16 %v390
      %v1158 = vunpack.c.l.b16 %v391
      %v1159 = vunpack.c.l.b16 %v392
      %v1160 = vunpack.c.l.b16 %v393
      %v1161 = vunpack.c.l.b16 %v394
      %v1162 = vunpack.c.l.b16 %v395
      %v1163 = vunpack.c.l.b16 %v396
      %v1164 = vunpack.c.l.b16 %v397
      %v1165 = vunpack.c.l.b16 %v398
      %v1166 = vunpack.c.l.b16 %v399
      %v1167 = vpack.c.b16 %v1068, %v1067
      %v1168 = vpack.c.b16 %v1070, %v1069
      %v1169 = vpack.c.b16 %v1072, %v1071
      %v1170 = vpack.c.b16 %v1074, %v1073
      %v1171 = vpack.c.b16 %v1076, %v1075
      %v1172 = vpack.c.b16 %v1078, %v1077
      %v1173 = vpack.c.b16 %v1080, %v1079
      %v1174 = vpack.c.b16 %v1082, %v1081
      %v1175 = vpack.c.b16 %v1084, %v1083
      %v1176 = vpack.c.b16 %v1086, %v1085
      %v1177 = vpack.c.b16 %v1088, %v1087
      %v1178 = vpack.c.b16 %v1090, %v1089
      %v1179 = vpack.c.b16 %v1092, %v1091
      %v1180 = vpack.c.b16 %v1094, %v1093
      %v1181 = vpack.c.b16 %v1096, %v1095
      %v1182 = vpack.c.b16 %v1098, %v1097
      %v1183 = vpack.c.b16 %v1100, %v1099
      %v1184 = vpack.c.b16 %v1102, %v1101
      %v1185 = vpack.c.b16 %v1104, %v1103
      %v1186 = vpack.c.b16 %v1106, %v1105
      %v1187 = vpack.c.b16 %v1108, %v1107
      %v1188 = vpack.c.b16 %v1110, %v1109
      %v1189 = vpack.c.b16 %v1112, %v1111
      %v1190 = vpack.c.b16 %v1114, %v1113
      %v1191 = vpack.c.b16 %v1116, %v1115
      %v1192 = vpack.c.b16 %v1118, %v1117
      %v1193 = vpack.c.b16 %v1120, %v1119
      %v1194 = vpack.c.b16 %v1122, %v1121
      %v1195 = vpack.c.b16 %v1124, %v1123
      %v1196 = vpack.c.b16 %v1126, %v1125
      %v1197 = vpack.c.b16 %v1128, %v1127
      %v1198 = vpack.c.b16 %v1130, %v1129
      %v1199 = vpack.c.b16 %v1132, %v1131
      %v1200 = vpack.c.b16 %v1134, %v1133
      %v1201 = vpack.c.b16 %v1136, %v1135
      %v1202 = vpack.c.b16 %v1138, %v1137
      %v1203 = vpack.c.b16 %v1140, %v1139
      %v1204 = vpack.c.b16 %v1142, %v1141
      %v1205 = vpack.c.b16 %v1144, %v1143
      %v1206 = vpack.c.b16 %v1146, %v1145
      %v1207 = vpack.c.b16 %v1148, %v1147
      %v1208 = vpack.c.b16 %v1150, %v1149
      %v1209 = vpack.c.b16 %v1152, %v1151
      %v1210 = vpack.c.b16 %v1154, %v1153
      %v1211 = vpack.c.b16 %v1156, %v1155
      %v1212 = vpack.c.b16 %v1158, %v1157
      %v1213 = vpack.c.b16 %v1160, %v1159
      %v1214 = vpack.c.b16 %v1162, %v1161
      %v1215 = vpack.c.b16 %v1164, %v1163
      %v1216 = vpack.c.b16 %v1166, %v1165
      %vm1267 = vcmask 261120
      %v1269 = vsel %vm1267, %v765, 0
      %v1272 = vsel %vm1267, %v772, 0
      %v1275 = vsel %vm1267, %v779, 0
      %v1278 = vsel %vm1267, %v786, 0
      %v1281 = vsel %vm1267, %v793, 0
      %v1284 = vsel %vm1267, %v800, 0
      %v1287 = vsel %vm1267, %v807, 0
      %v1290 = vsel %vm1267, %v814, 0
      %v1293 = vsel %vm1267, %v821, 0
      %v1296 = vsel %vm1267, %v828, 0
      %v1299 = vsel %vm1267, %v835, 0
      %v1302 = vsel %vm1267, %v842, 0
      %v1305 = vsel %vm1267, %v849, 0
      %v1308 = vsel %vm1267, %v856, 0
      %v1311 = vsel %vm1267, %v863, 0
      %v1314 = vsel %vm1267, %v870, 0
      %1316 = vmatprep.subr.bf16.mxu0 0
      %1317 = vmatpush1.bf16.msra.mxu0 %v1167
      %1318 = vmatprep.subr.bf16.mxu0 0
      %1319 = vmatpush1.bf16.msra.mxu0 %v1168
      %1320 = vmatprep.subr.bf16.mxu0 0
      %1321 = vmatpush1.bf16.msra.mxu0 %v1169
      %1322 = vmatprep.subr.bf16.mxu0 0
      %1323 = vmatpush1.bf16.msra.mxu0 %v1170
      %1324 = vmatprep.subr.bf16.mxu0 0
      %1325 = vmatpush1.bf16.msra.mxu0 %v1171
      %1326 = vmatprep.subr.bf16.mxu0 0
      %1327 = vmatpush1.bf16.msra.mxu0 %v1172
      %1328 = vmatprep.subr.bf16.mxu0 0
      %1329 = vmatpush1.bf16.msra.mxu0 %v1173
      %1330 = vmatprep.subr.bf16.mxu0 0
      %1331 = vmatpush1.bf16.msra.mxu0 %v1174
      %1332 = vmatprep.subr.bf16.mxu0 0
      %1333 = vmatpush1.bf16.msra.mxu0 %v1175
      %1334 = vmatprep.subr.bf16.mxu0 0
      %1335 = vmatpush1.bf16.msra.mxu0 %v1176
      %1336 = vmatprep.subr.bf16.mxu0 0
      %1337 = vmatpush1.bf16.msra.mxu0 %v1177
      %1338 = vmatprep.subr.bf16.mxu0 0
      %1339 = vmatpush1.bf16.msra.mxu0 %v1178
      %1340 = vmatprep.subr.bf16.mxu0 0
      %1341 = vmatpush1.bf16.msra.mxu0 %v1179
      %1342 = vmatprep.subr.bf16.mxu0 0
      %1343 = vmatpush1.bf16.msra.mxu0 %v1180
      %1344 = vmatprep.subr.bf16.mxu0 0
      %1345 = vmatpush1.bf16.msra.mxu0 %v1181
      %1346 = vmatprep.subr.bf16.mxu0 0
      %1347 = vmatpush1.bf16.msra.mxu0 %v1182
      %1348 = vmatprep.mubr.bf16.mxu0 %v760
      %1349 = vmatmul.mubr.bf16.gmra.mrb[0].mxu0 %v759
      %v1350 = vpop.f32.mrb[0].mxu0
      %v1351 = vadd.f32 %v405, %v1350
      %v1352 = vpop.f32.mrb[0].mxu0
      %v1353 = vpop.f32.mrb[0].mxu0
      %v1354 = vadd.f32 %v405, %v1353
      %v1355 = vpop.f32.mrb[0].mxu0
      %1356 = vmatprep.mubr.bf16.mxu0 %v767
      %1357 = vmatmul.mubr.bf16.gmra.mrb[0].mxu0 %v766
      %v1358 = vpop.f32.mrb[0].mxu0
      %v1359 = vadd.f32 %v405, %v1358
      %v1360 = vpop.f32.mrb[0].mxu0
      %v1361 = vpop.f32.mrb[0].mxu0
      %v1362 = vadd.f32 %v405, %v1361
      %v1363 = vpop.f32.mrb[0].mxu0
      %1364 = vmatprep.mubr.bf16.mxu0 %v774
      %1365 = vmatmul.mubr.bf16.gmra.mrb[0].mxu0 %v773
      %v1366 = vpop.f32.mrb[0].mxu0
      %v1367 = vadd.f32 %v405, %v1366
      %v1368 = vpop.f32.mrb[0].mxu0
      %v1369 = vpop.f32.mrb[0].mxu0
      %v1370 = vadd.f32 %v405, %v1369
      %v1371 = vpop.f32.mrb[0].mxu0
      %1372 = vmatprep.mubr.bf16.mxu0 %v781
      %1373 = vmatmul.mubr.bf16.gmra.mrb[0].mxu0 %v780
      %v1374 = vpop.f32.mrb[0].mxu0
      %v1375 = vadd.f32 %v405, %v1374
      %v1376 = vpop.f32.mrb[0].mxu0
      %v1377 = vpop.f32.mrb[0].mxu0
      %v1378 = vadd.f32 %v405, %v1377
      %v1379 = vpop.f32.mrb[0].mxu0
      %1380 = vmatprep.mubr.bf16.mxu0 %v788
      %1381 = vmatmul.mubr.bf16.gmra.mrb[0].mxu0 %v787
      %v1382 = vpop.f32.mrb[0].mxu0
      %v1383 = vadd.f32 %v405, %v1382
      %v1384 = vpop.f32.mrb[0].mxu0
      %v1385 = vpop.f32.mrb[0].mxu0
      %v1386 = vadd.f32 %v405, %v1385
      %v1387 = vpop.f32.mrb[0].mxu0
      %1388 = vmatprep.mubr.bf16.mxu0 %v795
      %1389 = vmatmul.mubr.bf16.gmra.mrb[0].mxu0 %v794
      %v1390 = vpop.f32.mrb[0].mxu0
      %v1391 = vadd.f32 %v405, %v1390
      %v1392 = vpop.f32.mrb[0].mxu0
      %v1393 = vpop.f32.mrb[0].mxu0
      %v1394 = vadd.f32 %v405, %v1393
      %v1395 = vpop.f32.mrb[0].mxu0
      %1396 = vmatprep.mubr.bf16.mxu0 %v802
      %1397 = vmatmul.mubr.bf16.gmra.mrb[0].mxu0 %v801
      %v1398 = vpop.f32.mrb[0].mxu0
      %v1399 = vadd.f32 %v405, %v1398
      %v1400 = vpop.f32.mrb[0].mxu0
      %v1401 = vpop.f32.mrb[0].mxu0
      %v1402 = vadd.f32 %v405, %v1401
      %v1403 = vpop.f32.mrb[0].mxu0
      %1404 = vmatprep.mubr.bf16.mxu0 %v809
      %1405 = vmatmul.mubr.bf16.gmra.mrb[0].mxu0 %v808
      %v1406 = vpop.f32.mrb[0].mxu0
      %v1407 = vadd.f32 %v405, %v1406
      %v1408 = vpop.f32.mrb[0].mxu0
      %v1409 = vpop.f32.mrb[0].mxu0
      %v1410 = vadd.f32 %v405, %v1409
      %v1411 = vpop.f32.mrb[0].mxu0
      %1412 = vmatprep.mubr.bf16.mxu0 %v816
      %1413 = vmatmul.mubr.bf16.gmra.mrb[0].mxu0 %v815
      %v1414 = vpop.f32.mrb[0].mxu0
      %v1415 = vadd.f32 %v405, %v1414
      %v1416 = vpop.f32.mrb[0].mxu0
      %v1417 = vpop.f32.mrb[0].mxu0
      %v1418 = vadd.f32 %v405, %v1417
      %v1419 = vpop.f32.mrb[0].mxu0
      %1420 = vmatprep.mubr.bf16.mxu0 %v823
      %1421 = vmatmul.mubr.bf16.gmra.mrb[0].mxu0 %v822
      %v1422 = vpop.f32.mrb[0].mxu0
      %v1423 = vadd.f32 %v405, %v1422
      %v1424 = vpop.f32.mrb[0].mxu0
      %v1425 = vpop.f32.mrb[0].mxu0
      %v1426 = vadd.f32 %v405, %v1425
      %v1427 = vpop.f32.mrb[0].mxu0
      %1428 = vmatprep.mubr.bf16.mxu0 %v830
      %1429 = vmatmul.mubr.bf16.gmra.mrb[0].mxu0 %v829
      %v1430 = vpop.f32.mrb[0].mxu0
      %v1431 = vadd.f32 %v405, %v1430
      %v1432 = vpop.f32.mrb[0].mxu0
      %v1433 = vpop.f32.mrb[0].mxu0
      %v1434 = vadd.f32 %v405, %v1433
      %v1435 = vpop.f32.mrb[0].mxu0
      %1436 = vmatprep.mubr.bf16.mxu0 %v837
      %1437 = vmatmul.mubr.bf16.gmra.mrb[0].mxu0 %v836
      %v1438 = vpop.f32.mrb[0].mxu0
      %v1439 = vadd.f32 %v405, %v1438
      %v1440 = vpop.f32.mrb[0].mxu0
      %v1441 = vpop.f32.mrb[0].mxu0
      %v1442 = vadd.f32 %v405, %v1441
      %v1443 = vpop.f32.mrb[0].mxu0
      %1444 = vmatprep.mubr.bf16.mxu0 %v844
      %1445 = vmatmul.mubr.bf16.gmra.mrb[0].mxu0 %v843
      %v1446 = vpop.f32.mrb[0].mxu0
      %v1447 = vadd.f32 %v405, %v1446
      %v1448 = vpop.f32.mrb[0].mxu0
      %v1449 = vpop.f32.mrb[0].mxu0
      %v1450 = vadd.f32 %v405, %v1449
      %v1451 = vpop.f32.mrb[0].mxu0
      %1452 = vmatprep.mubr.bf16.mxu0 %v851
      %1453 = vmatmul.mubr.bf16.gmra.mrb[0].mxu0 %v850
      %v1454 = vpop.f32.mrb[0].mxu0
      %v1455 = vadd.f32 %v405, %v1454
      %v1456 = vpop.f32.mrb[0].mxu0
      %v1457 = vpop.f32.mrb[0].mxu0
      %v1458 = vadd.f32 %v405, %v1457
      %v1459 = vpop.f32.mrb[0].mxu0
      %1460 = vmatprep.mubr.bf16.mxu0 %v858
      %1461 = vmatmul.mubr.bf16.gmra.mrb[0].mxu0 %v857
      %v1462 = vpop.f32.mrb[0].mxu0
      %v1463 = vadd.f32 %v405, %v1462
      %v1464 = vpop.f32.mrb[0].mxu0
      %v1465 = vpop.f32.mrb[0].mxu0
      %v1466 = vadd.f32 %v405, %v1465
      %v1467 = vpop.f32.mrb[0].mxu0
      %1468 = vmatprep.mubr.bf16.mxu0 %v865
      %1469 = vmatmul.mubr.bf16.gmra.mrb[0].mxu0 %v864
      %v1470 = vpop.f32.mrb[0].mxu0
      %v1471 = vadd.f32 %v405, %v1470
      %v1472 = vpop.f32.mrb[0].mxu0
      %v1473 = vpop.f32.mrb[0].mxu0
      %v1474 = vadd.f32 %v405, %v1473
      %v1475 = vpop.f32.mrb[0].mxu0
      %1476 = vdwg.mxu0
      %1477 = vmatprep.subr.bf16.mxu0 0
      %1478 = vmatpush1.bf16.msra.mxu0 %v1183
      %1479 = vmatprep.subr.bf16.mxu0 0
      %1480 = vmatpush1.bf16.msra.mxu0 %v1184
      %1481 = vmatprep.subr.bf16.mxu0 0
      %1482 = vmatpush1.bf16.msra.mxu0 %v1185
      %1483 = vmatprep.subr.bf16.mxu0 0
      %1484 = vmatpush1.bf16.msra.mxu0 %v1186
      %1485 = vmatprep.subr.bf16.mxu0 0
      %1486 = vmatpush1.bf16.msra.mxu0 %v1187
      %1487 = vmatprep.subr.bf16.mxu0 0
      %1488 = vmatpush1.bf16.msra.mxu0 %v1188
      %1489 = vmatprep.subr.bf16.mxu0 0
      %1490 = vmatpush1.bf16.msra.mxu0 %v1189
      %1491 = vmatprep.subr.bf16.mxu0 0
      %1492 = vmatpush1.bf16.msra.mxu0 %v1190
      %1493 = vmatprep.subr.bf16.mxu0 0
      %1494 = vmatpush1.bf16.msra.mxu0 %v1191
      %1495 = vmatprep.subr.bf16.mxu0 0
      %1496 = vmatpush1.bf16.msra.mxu0 %v1192
      %1497 = vmatprep.subr.bf16.mxu0 0
      %1498 = vmatpush1.bf16.msra.mxu0 %v1193
      %1499 = vmatprep.subr.bf16.mxu0 0
      %1500 = vmatpush1.bf16.msra.mxu0 %v1194
      %1501 = vmatprep.subr.bf16.mxu0 0
      %1502 = vmatpush1.bf16.msra.mxu0 %v1195
      %1503 = vmatprep.subr.bf16.mxu0 0
      %1504 = vmatpush1.bf16.msra.mxu0 %v1196
      %1505 = vmatprep.subr.bf16.mxu0 0
      %1506 = vmatpush1.bf16.msra.mxu0 %v1197
      %1507 = vmatprep.subr.bf16.mxu0 0
      %1508 = vmatpush1.bf16.msra.mxu0 %v1198
      %1509 = vmatprep.mubr.bf16.mxu0 %v762
      %1510 = vmatmul.mubr.bf16.gmra.mrb[0].mxu0 %v761
      %v1511 = vpop.f32.mrb[0].mxu0
      %v1512 = vadd.f32 %v1351, %v1511
      %v1513 = vpop.f32.mrb[0].mxu0
      %v1514 = vpop.f32.mrb[0].mxu0
      %v1515 = vadd.f32 %v1354, %v1514
      %v1516 = vpop.f32.mrb[0].mxu0
      %1517 = vmatprep.mubr.bf16.mxu0 %v769
      %1518 = vmatmul.mubr.bf16.gmra.mrb[0].mxu0 %v768
      %v1519 = vpop.f32.mrb[0].mxu0
      %v1520 = vadd.f32 %v1359, %v1519
      %v1521 = vpop.f32.mrb[0].mxu0
      %v1522 = vpop.f32.mrb[0].mxu0
      %v1523 = vadd.f32 %v1362, %v1522
      %v1524 = vpop.f32.mrb[0].mxu0
      %1525 = vmatprep.mubr.bf16.mxu0 %v776
      %1526 = vmatmul.mubr.bf16.gmra.mrb[0].mxu0 %v775
      %v1527 = vpop.f32.mrb[0].mxu0
      %v1528 = vadd.f32 %v1367, %v1527
      %v1529 = vpop.f32.mrb[0].mxu0
      %v1530 = vpop.f32.mrb[0].mxu0
      %v1531 = vadd.f32 %v1370, %v1530
      %v1532 = vpop.f32.mrb[0].mxu0
      %1533 = vmatprep.mubr.bf16.mxu0 %v783
      %1534 = vmatmul.mubr.bf16.gmra.mrb[0].mxu0 %v782
      %v1535 = vpop.f32.mrb[0].mxu0
      %v1536 = vadd.f32 %v1375, %v1535
      %v1537 = vpop.f32.mrb[0].mxu0
      %v1538 = vpop.f32.mrb[0].mxu0
      %v1539 = vadd.f32 %v1378, %v1538
      %v1540 = vpop.f32.mrb[0].mxu0
      %1541 = vmatprep.mubr.bf16.mxu0 %v790
      %1542 = vmatmul.mubr.bf16.gmra.mrb[0].mxu0 %v789
      %v1543 = vpop.f32.mrb[0].mxu0
      %v1544 = vadd.f32 %v1383, %v1543
      %v1545 = vpop.f32.mrb[0].mxu0
      %v1546 = vpop.f32.mrb[0].mxu0
      %v1547 = vadd.f32 %v1386, %v1546
      %v1548 = vpop.f32.mrb[0].mxu0
      %1549 = vmatprep.mubr.bf16.mxu0 %v797
      %1550 = vmatmul.mubr.bf16.gmra.mrb[0].mxu0 %v796
      %v1551 = vpop.f32.mrb[0].mxu0
      %v1552 = vadd.f32 %v1391, %v1551
      %v1553 = vpop.f32.mrb[0].mxu0
      %v1554 = vpop.f32.mrb[0].mxu0
      %v1555 = vadd.f32 %v1394, %v1554
      %v1556 = vpop.f32.mrb[0].mxu0
      %1557 = vmatprep.mubr.bf16.mxu0 %v804
      %1558 = vmatmul.mubr.bf16.gmra.mrb[0].mxu0 %v803
      %v1559 = vpop.f32.mrb[0].mxu0
      %v1560 = vadd.f32 %v1399, %v1559
      %v1561 = vpop.f32.mrb[0].mxu0
      %v1562 = vpop.f32.mrb[0].mxu0
      %v1563 = vadd.f32 %v1402, %v1562
      %v1564 = vpop.f32.mrb[0].mxu0
      %1565 = vmatprep.mubr.bf16.mxu0 %v811
      %1566 = vmatmul.mubr.bf16.gmra.mrb[0].mxu0 %v810
      %v1567 = vpop.f32.mrb[0].mxu0
      %v1568 = vadd.f32 %v1407, %v1567
      %v1569 = vpop.f32.mrb[0].mxu0
      %v1570 = vpop.f32.mrb[0].mxu0
      %v1571 = vadd.f32 %v1410, %v1570
      %v1572 = vpop.f32.mrb[0].mxu0
      %1573 = vmatprep.mubr.bf16.mxu0 %v818
      %1574 = vmatmul.mubr.bf16.gmra.mrb[0].mxu0 %v817
      %v1575 = vpop.f32.mrb[0].mxu0
      %v1576 = vadd.f32 %v1415, %v1575
      %v1577 = vpop.f32.mrb[0].mxu0
      %v1578 = vpop.f32.mrb[0].mxu0
      %v1579 = vadd.f32 %v1418, %v1578
      %v1580 = vpop.f32.mrb[0].mxu0
      %1581 = vmatprep.mubr.bf16.mxu0 %v825
      %1582 = vmatmul.mubr.bf16.gmra.mrb[0].mxu0 %v824
      %v1583 = vpop.f32.mrb[0].mxu0
      %v1584 = vadd.f32 %v1423, %v1583
      %v1585 = vpop.f32.mrb[0].mxu0
      %v1586 = vpop.f32.mrb[0].mxu0
      %v1587 = vadd.f32 %v1426, %v1586
      %v1588 = vpop.f32.mrb[0].mxu0
      %1589 = vmatprep.mubr.bf16.mxu0 %v832
      %1590 = vmatmul.mubr.bf16.gmra.mrb[0].mxu0 %v831
      %v1591 = vpop.f32.mrb[0].mxu0
      %v1592 = vadd.f32 %v1431, %v1591
      %v1593 = vpop.f32.mrb[0].mxu0
      %v1594 = vpop.f32.mrb[0].mxu0
      %v1595 = vadd.f32 %v1434, %v1594
      %v1596 = vpop.f32.mrb[0].mxu0
      %1597 = vmatprep.mubr.bf16.mxu0 %v839
      %1598 = vmatmul.mubr.bf16.gmra.mrb[0].mxu0 %v838
      %v1599 = vpop.f32.mrb[0].mxu0
      %v1600 = vadd.f32 %v1439, %v1599
      %v1601 = vpop.f32.mrb[0].mxu0
      %v1602 = vpop.f32.mrb[0].mxu0
      %v1603 = vadd.f32 %v1442, %v1602
      %v1604 = vpop.f32.mrb[0].mxu0
      %1605 = vmatprep.mubr.bf16.mxu0 %v846
      %1606 = vmatmul.mubr.bf16.gmra.mrb[0].mxu0 %v845
      %v1607 = vpop.f32.mrb[0].mxu0
      %v1608 = vadd.f32 %v1447, %v1607
      %v1609 = vpop.f32.mrb[0].mxu0
      %v1610 = vpop.f32.mrb[0].mxu0
      %v1611 = vadd.f32 %v1450, %v1610
      %v1612 = vpop.f32.mrb[0].mxu0
      %1613 = vmatprep.mubr.bf16.mxu0 %v853
      %1614 = vmatmul.mubr.bf16.gmra.mrb[0].mxu0 %v852
      %v1615 = vpop.f32.mrb[0].mxu0
      %v1616 = vadd.f32 %v1455, %v1615
      %v1617 = vpop.f32.mrb[0].mxu0
      %v1618 = vpop.f32.mrb[0].mxu0
      %v1619 = vadd.f32 %v1458, %v1618
      %v1620 = vpop.f32.mrb[0].mxu0
      %1621 = vmatprep.mubr.bf16.mxu0 %v860
      %1622 = vmatmul.mubr.bf16.gmra.mrb[0].mxu0 %v859
      %v1623 = vpop.f32.mrb[0].mxu0
      %v1624 = vadd.f32 %v1463, %v1623
      %v1625 = vpop.f32.mrb[0].mxu0
      %v1626 = vpop.f32.mrb[0].mxu0
      %v1627 = vadd.f32 %v1466, %v1626
      %v1628 = vpop.f32.mrb[0].mxu0
      %1629 = vmatprep.mubr.bf16.mxu0 %v867
      %1630 = vmatmul.mubr.bf16.gmra.mrb[0].mxu0 %v866
      %v1631 = vpop.f32.mrb[0].mxu0
      %v1632 = vadd.f32 %v1471, %v1631
      %v1633 = vpop.f32.mrb[0].mxu0
      %v1634 = vpop.f32.mrb[0].mxu0
      %v1635 = vadd.f32 %v1474, %v1634
      %v1636 = vpop.f32.mrb[0].mxu0
      %1637 = vdwg.mxu0
      %1638 = vmatprep.subr.bf16.mxu0 0
      %1639 = vmatpush1.bf16.msra.mxu0 %v1199
      %1640 = vmatprep.subr.bf16.mxu0 0
      %1641 = vmatpush1.bf16.msra.mxu0 %v1200
      %1642 = vmatprep.subr.bf16.mxu0 0
      %1643 = vmatpush1.bf16.msra.mxu0 %v1201
      %1644 = vmatprep.subr.bf16.mxu0 0
      %1645 = vmatpush1.bf16.msra.mxu0 %v1202
      %1646 = vmatprep.subr.bf16.mxu0 0
      %1647 = vmatpush1.bf16.msra.mxu0 %v1203
      %1648 = vmatprep.subr.bf16.mxu0 0
      %1649 = vmatpush1.bf16.msra.mxu0 %v1204
      %1650 = vmatprep.subr.bf16.mxu0 0
      %1651 = vmatpush1.bf16.msra.mxu0 %v1205
      %1652 = vmatprep.subr.bf16.mxu0 0
      %1653 = vmatpush1.bf16.msra.mxu0 %v1206
      %1654 = vmatprep.subr.bf16.mxu0 0
      %1655 = vmatpush1.bf16.msra.mxu0 %v1207
      %1656 = vmatprep.subr.bf16.mxu0 0
      %1657 = vmatpush1.bf16.msra.mxu0 %v1208
      %1658 = vmatprep.subr.bf16.mxu0 0
      %1659 = vmatpush1.bf16.msra.mxu0 %v1209
      %1660 = vmatprep.subr.bf16.mxu0 0
      %1661 = vmatpush1.bf16.msra.mxu0 %v1210
      %1662 = vmatprep.subr.bf16.mxu0 0
      %1663 = vmatpush1.bf16.msra.mxu0 %v1211
      %1664 = vmatprep.subr.bf16.mxu0 0
      %1665 = vmatpush1.bf16.msra.mxu0 %v1212
      %1666 = vmatprep.subr.bf16.mxu0 0
      %1667 = vmatpush1.bf16.msra.mxu0 %v1213
      %1668 = vmatprep.subr.bf16.mxu0 0
      %1669 = vmatpush1.bf16.msra.mxu0 %v1214
      %1670 = vmatprep.mubr.bf16.mxu0 %v764
      %1671 = vmatmul.mubr.bf16.gmra.mrb[0].mxu0 %v763
      %v1672 = vpop.f32.mrb[0].mxu0
      %v1673 = vadd.f32 %v1512, %v1672
      %v1674 = vpop.f32.mrb[0].mxu0
      %v1675 = vpop.f32.mrb[0].mxu0
      %v1676 = vadd.f32 %v1515, %v1675
      %v1677 = vpop.f32.mrb[0].mxu0
      %1678 = vmatprep.mubr.bf16.mxu0 %v771
      %1679 = vmatmul.mubr.bf16.gmra.mrb[0].mxu0 %v770
      %v1680 = vpop.f32.mrb[0].mxu0
      %v1681 = vadd.f32 %v1520, %v1680
      %v1682 = vpop.f32.mrb[0].mxu0
      %v1683 = vpop.f32.mrb[0].mxu0
      %v1684 = vadd.f32 %v1523, %v1683
      %v1685 = vpop.f32.mrb[0].mxu0
      %1686 = vmatprep.mubr.bf16.mxu0 %v778
      %1687 = vmatmul.mubr.bf16.gmra.mrb[0].mxu0 %v777
      %v1688 = vpop.f32.mrb[0].mxu0
      %v1689 = vadd.f32 %v1528, %v1688
      %v1690 = vpop.f32.mrb[0].mxu0
      %v1691 = vpop.f32.mrb[0].mxu0
      %v1692 = vadd.f32 %v1531, %v1691
      %v1693 = vpop.f32.mrb[0].mxu0
      %1694 = vmatprep.mubr.bf16.mxu0 %v785
      %1695 = vmatmul.mubr.bf16.gmra.mrb[0].mxu0 %v784
      %v1696 = vpop.f32.mrb[0].mxu0
      %v1697 = vadd.f32 %v1536, %v1696
      %v1698 = vpop.f32.mrb[0].mxu0
      %v1699 = vpop.f32.mrb[0].mxu0
      %v1700 = vadd.f32 %v1539, %v1699
      %v1701 = vpop.f32.mrb[0].mxu0
      %1702 = vmatprep.mubr.bf16.mxu0 %v792
      %1703 = vmatmul.mubr.bf16.gmra.mrb[0].mxu0 %v791
      %v1704 = vpop.f32.mrb[0].mxu0
      %v1705 = vadd.f32 %v1544, %v1704
      %v1706 = vpop.f32.mrb[0].mxu0
      %v1707 = vpop.f32.mrb[0].mxu0
      %v1708 = vadd.f32 %v1547, %v1707
      %v1709 = vpop.f32.mrb[0].mxu0
      %1710 = vmatprep.mubr.bf16.mxu0 %v799
      %1711 = vmatmul.mubr.bf16.gmra.mrb[0].mxu0 %v798
      %v1712 = vpop.f32.mrb[0].mxu0
      %v1713 = vadd.f32 %v1552, %v1712
      %v1714 = vpop.f32.mrb[0].mxu0
      %v1715 = vpop.f32.mrb[0].mxu0
      %v1716 = vadd.f32 %v1555, %v1715
      %v1717 = vpop.f32.mrb[0].mxu0
      %1718 = vmatprep.mubr.bf16.mxu0 %v806
      %1719 = vmatmul.mubr.bf16.gmra.mrb[0].mxu0 %v805
      %v1720 = vpop.f32.mrb[0].mxu0
      %v1721 = vadd.f32 %v1560, %v1720
      %v1722 = vpop.f32.mrb[0].mxu0
      %v1723 = vpop.f32.mrb[0].mxu0
      %v1724 = vadd.f32 %v1563, %v1723
      %v1725 = vpop.f32.mrb[0].mxu0
      %1726 = vmatprep.mubr.bf16.mxu0 %v813
      %1727 = vmatmul.mubr.bf16.gmra.mrb[0].mxu0 %v812
      %v1728 = vpop.f32.mrb[0].mxu0
      %v1729 = vadd.f32 %v1568, %v1728
      %v1730 = vpop.f32.mrb[0].mxu0
      %v1731 = vpop.f32.mrb[0].mxu0
      %v1732 = vadd.f32 %v1571, %v1731
      %v1733 = vpop.f32.mrb[0].mxu0
      %1734 = vmatprep.mubr.bf16.mxu0 %v820
      %1735 = vmatmul.mubr.bf16.gmra.mrb[0].mxu0 %v819
      %v1736 = vpop.f32.mrb[0].mxu0
      %v1737 = vadd.f32 %v1576, %v1736
      %v1738 = vpop.f32.mrb[0].mxu0
      %v1739 = vpop.f32.mrb[0].mxu0
      %v1740 = vadd.f32 %v1579, %v1739
      %v1741 = vpop.f32.mrb[0].mxu0
      %1742 = vmatprep.mubr.bf16.mxu0 %v827
      %1743 = vmatmul.mubr.bf16.gmra.mrb[0].mxu0 %v826
      %v1744 = vpop.f32.mrb[0].mxu0
      %v1745 = vadd.f32 %v1584, %v1744
      %v1746 = vpop.f32.mrb[0].mxu0
      %v1747 = vpop.f32.mrb[0].mxu0
      %v1748 = vadd.f32 %v1587, %v1747
      %v1749 = vpop.f32.mrb[0].mxu0
      %1750 = vmatprep.mubr.bf16.mxu0 %v834
      %1751 = vmatmul.mubr.bf16.gmra.mrb[0].mxu0 %v833
      %v1752 = vpop.f32.mrb[0].mxu0
      %v1753 = vadd.f32 %v1592, %v1752
      %v1754 = vpop.f32.mrb[0].mxu0
      %v1755 = vpop.f32.mrb[0].mxu0
      %v1756 = vadd.f32 %v1595, %v1755
      %v1757 = vpop.f32.mrb[0].mxu0
      %1758 = vmatprep.mubr.bf16.mxu0 %v841
      %1759 = vmatmul.mubr.bf16.gmra.mrb[0].mxu0 %v840
      %v1760 = vpop.f32.mrb[0].mxu0
      %v1761 = vadd.f32 %v1600, %v1760
      %v1762 = vpop.f32.mrb[0].mxu0
      %v1763 = vpop.f32.mrb[0].mxu0
      %v1764 = vadd.f32 %v1603, %v1763
      %v1765 = vpop.f32.mrb[0].mxu0
      %1766 = vmatprep.mubr.bf16.mxu0 %v848
      %1767 = vmatmul.mubr.bf16.gmra.mrb[0].mxu0 %v847
      %v1768 = vpop.f32.mrb[0].mxu0
      %v1769 = vadd.f32 %v1608, %v1768
      %v1770 = vpop.f32.mrb[0].mxu0
      %v1771 = vpop.f32.mrb[0].mxu0
      %v1772 = vadd.f32 %v1611, %v1771
      %v1773 = vpop.f32.mrb[0].mxu0
      %1774 = vmatprep.mubr.bf16.mxu0 %v855
      %1775 = vmatmul.mubr.bf16.gmra.mrb[0].mxu0 %v854
      %v1776 = vpop.f32.mrb[0].mxu0
      %v1777 = vadd.f32 %v1616, %v1776
      %v1778 = vpop.f32.mrb[0].mxu0
      %v1779 = vpop.f32.mrb[0].mxu0
      %v1780 = vadd.f32 %v1619, %v1779
      %v1781 = vpop.f32.mrb[0].mxu0
      %1782 = vmatprep.mubr.bf16.mxu0 %v862
      %1783 = vmatmul.mubr.bf16.gmra.mrb[0].mxu0 %v861
      %v1784 = vpop.f32.mrb[0].mxu0
      %v1785 = vadd.f32 %v1624, %v1784
      %v1786 = vpop.f32.mrb[0].mxu0
      %v1787 = vpop.f32.mrb[0].mxu0
      %v1788 = vadd.f32 %v1627, %v1787
      %v1789 = vpop.f32.mrb[0].mxu0
      %1790 = vmatprep.mubr.bf16.mxu0 %v869
      %1791 = vmatmul.mubr.bf16.gmra.mrb[0].mxu0 %v868
      %v1792 = vpop.f32.mrb[0].mxu0
      %v1793 = vadd.f32 %v1632, %v1792
      %v1794 = vpop.f32.mrb[0].mxu0
      %v1795 = vpop.f32.mrb[0].mxu0
      %v1796 = vadd.f32 %v1635, %v1795
      %v1797 = vpop.f32.mrb[0].mxu0
      %1798 = vdwg.mxu0
      %1799 = vmatprep.subr.bf16.mxu0 0
      %1800 = vmatpush1.bf16.msra.mxu0 %v1215
      %1801 = vmatprep.subr.bf16.mxu0 0
      %1802 = vmatpush1.bf16.msra.mxu0 %v1216
      %1803 = vmatprep.subr.bf16.mxu0 0
      %1804 = vmatpush1.bf16.msra.mxu0 0
      %1805 = vmatprep.subr.bf16.mxu0 0
      %1806 = vmatpush1.bf16.msra.mxu0 0
      %1807 = vmatprep.subr.bf16.mxu0 0
      %1808 = vmatpush1.bf16.msra.mxu0 0
      %1809 = vmatprep.subr.bf16.mxu0 0
      %1810 = vmatpush1.bf16.msra.mxu0 0
      %1811 = vmatprep.subr.bf16.mxu0 0
      %1812 = vmatpush1.bf16.msra.mxu0 0
      %1813 = vmatprep.subr.bf16.mxu0 0
      %1814 = vmatpush1.bf16.msra.mxu0 0
      %1815 = vmatprep.subr.bf16.mxu0 0
      %1816 = vmatpush1.bf16.msra.mxu0 0
      %1817 = vmatprep.subr.bf16.mxu0 0
      %1818 = vmatpush1.bf16.msra.mxu0 0
      %1819 = vmatprep.subr.bf16.mxu0 0
      %1820 = vmatpush1.bf16.msra.mxu0 0
      %1821 = vmatprep.subr.bf16.mxu0 0
      %1822 = vmatpush1.bf16.msra.mxu0 0
      %1823 = vmatprep.subr.bf16.mxu0 0
      %1824 = vmatpush1.bf16.msra.mxu0 0
      %1825 = vmatprep.subr.bf16.mxu0 0
      %1826 = vmatpush1.bf16.msra.mxu0 0
      %1827 = vmatprep.subr.bf16.mxu0 0
      %1828 = vmatpush1.bf16.msra.mxu0 0
      %1829 = vmatprep.subr.bf16.mxu0 0
      %1830 = vmatpush1.bf16.msra.mxu0 0
      %1831 = vmatprep.mubr.bf16.mxu0 0
      %1832 = vmatmul.mubr.bf16.gmra.mrb[0].mxu0 %v1269
      %v1833 = vpop.f32.mrb[0].mxu0
      %v1834 = vadd.f32 %v1673, %v1833
      %v1835 = vpop.f32.mrb[0].mxu0
      %v1836 = vpop.f32.mrb[0].mxu0
      %v1837 = vadd.f32 %v1676, %v1836
      %v1838 = vpop.f32.mrb[0].mxu0
      %1839 = vmatprep.mubr.bf16.mxu0 0
      %1840 = vmatmul.mubr.bf16.gmra.mrb[0].mxu0 %v1272
      %v1841 = vpop.f32.mrb[0].mxu0
      %v1842 = vadd.f32 %v1681, %v1841
      %v1843 = vpop.f32.mrb[0].mxu0
      %v1844 = vpop.f32.mrb[0].mxu0
      %v1845 = vadd.f32 %v1684, %v1844
      %v1846 = vpop.f32.mrb[0].mxu0
      %1847 = vmatprep.mubr.bf16.mxu0 0
      %1848 = vmatmul.mubr.bf16.gmra.mrb[0].mxu0 %v1275
      %v1849 = vpop.f32.mrb[0].mxu0
      %v1850 = vadd.f32 %v1689, %v1849
      %v1851 = vpop.f32.mrb[0].mxu0
      %v1852 = vpop.f32.mrb[0].mxu0
      %v1853 = vadd.f32 %v1692, %v1852
      %v1854 = vpop.f32.mrb[0].mxu0
      %1855 = vmatprep.mubr.bf16.mxu0 0
      %1856 = vmatmul.mubr.bf16.gmra.mrb[0].mxu0 %v1278
      %v1857 = vpop.f32.mrb[0].mxu0
      %v1858 = vadd.f32 %v1697, %v1857
      %v1859 = vpop.f32.mrb[0].mxu0
      %v1860 = vpop.f32.mrb[0].mxu0
      %v1861 = vadd.f32 %v1700, %v1860
      %v1862 = vpop.f32.mrb[0].mxu0
      %1863 = vmatprep.mubr.bf16.mxu0 0
      %1864 = vmatmul.mubr.bf16.gmra.mrb[0].mxu0 %v1281
      %v1865 = vpop.f32.mrb[0].mxu0
      %v1866 = vadd.f32 %v1705, %v1865
      %v1867 = vpop.f32.mrb[0].mxu0
      %v1868 = vpop.f32.mrb[0].mxu0
      %v1869 = vadd.f32 %v1708, %v1868
      %v1870 = vpop.f32.mrb[0].mxu0
      %1871 = vmatprep.mubr.bf16.mxu0 0
      %1872 = vmatmul.mubr.bf16.gmra.mrb[0].mxu0 %v1284
      %v1873 = vpop.f32.mrb[0].mxu0
      %v1874 = vadd.f32 %v1713, %v1873
      %v1875 = vpop.f32.mrb[0].mxu0
      %v1876 = vpop.f32.mrb[0].mxu0
      %v1877 = vadd.f32 %v1716, %v1876
      %v1878 = vpop.f32.mrb[0].mxu0
      %1879 = vmatprep.mubr.bf16.mxu0 0
      %1880 = vmatmul.mubr.bf16.gmra.mrb[0].mxu0 %v1287
      %v1881 = vpop.f32.mrb[0].mxu0
      %v1882 = vadd.f32 %v1721, %v1881
      %v1883 = vpop.f32.mrb[0].mxu0
      %v1884 = vpop.f32.mrb[0].mxu0
      %v1885 = vadd.f32 %v1724, %v1884
      %v1886 = vpop.f32.mrb[0].mxu0
      %1887 = vmatprep.mubr.bf16.mxu0 0
      %1888 = vmatmul.mubr.bf16.gmra.mrb[0].mxu0 %v1290
      %v1889 = vpop.f32.mrb[0].mxu0
      %v1890 = vadd.f32 %v1729, %v1889
      %v1891 = vpop.f32.mrb[0].mxu0
      %v1892 = vpop.f32.mrb[0].mxu0
      %v1893 = vadd.f32 %v1732, %v1892
      %v1894 = vpop.f32.mrb[0].mxu0
      %1895 = vmatprep.mubr.bf16.mxu0 0
      %1896 = vmatmul.mubr.bf16.gmra.mrb[0].mxu0 %v1293
      %v1897 = vpop.f32.mrb[0].mxu0
      %v1898 = vadd.f32 %v1737, %v1897
      %v1899 = vpop.f32.mrb[0].mxu0
      %v1900 = vpop.f32.mrb[0].mxu0
      %v1901 = vadd.f32 %v1740, %v1900
      %v1902 = vpop.f32.mrb[0].mxu0
      %1903 = vmatprep.mubr.bf16.mxu0 0
      %1904 = vmatmul.mubr.bf16.gmra.mrb[0].mxu0 %v1296
      %v1905 = vpop.f32.mrb[0].mxu0
      %v1906 = vadd.f32 %v1745, %v1905
      %v1907 = vpop.f32.mrb[0].mxu0
      %v1908 = vpop.f32.mrb[0].mxu0
      %v1909 = vadd.f32 %v1748, %v1908
      %v1910 = vpop.f32.mrb[0].mxu0
      %1911 = vmatprep.mubr.bf16.mxu0 0
      %1912 = vmatmul.mubr.bf16.gmra.mrb[0].mxu0 %v1299
      %v1913 = vpop.f32.mrb[0].mxu0
      %v1914 = vadd.f32 %v1753, %v1913
      %v1915 = vpop.f32.mrb[0].mxu0
      %v1916 = vpop.f32.mrb[0].mxu0
      %v1917 = vadd.f32 %v1756, %v1916
      %v1918 = vpop.f32.mrb[0].mxu0
      %1919 = vmatprep.mubr.bf16.mxu0 0
      %1920 = vmatmul.mubr.bf16.gmra.mrb[0].mxu0 %v1302
      %v1921 = vpop.f32.mrb[0].mxu0
      %v1922 = vadd.f32 %v1761, %v1921
      %v1923 = vpop.f32.mrb[0].mxu0
      %v1924 = vpop.f32.mrb[0].mxu0
      %v1925 = vadd.f32 %v1764, %v1924
      %v1926 = vpop.f32.mrb[0].mxu0
      %1927 = vmatprep.mubr.bf16.mxu0 0
      %1928 = vmatmul.mubr.bf16.gmra.mrb[0].mxu0 %v1305
      %v1929 = vpop.f32.mrb[0].mxu0
      %v1930 = vadd.f32 %v1769, %v1929
      %v1931 = vpop.f32.mrb[0].mxu0
      %v1932 = vpop.f32.mrb[0].mxu0
      %v1933 = vadd.f32 %v1772, %v1932
      %v1934 = vpop.f32.mrb[0].mxu0
      %1935 = vmatprep.mubr.bf16.mxu0 0
      %1936 = vmatmul.mubr.bf16.gmra.mrb[0].mxu0 %v1308
      %v1937 = vpop.f32.mrb[0].mxu0
      %v1938 = vadd.f32 %v1777, %v1937
      %v1939 = vpop.f32.mrb[0].mxu0
      %v1940 = vpop.f32.mrb[0].mxu0
      %v1941 = vadd.f32 %v1780, %v1940
      %v1942 = vpop.f32.mrb[0].mxu0
      %1943 = vmatprep.mubr.bf16.mxu0 0
      %1944 = vmatmul.mubr.bf16.gmra.mrb[0].mxu0 %v1311
      %v1945 = vpop.f32.mrb[0].mxu0
      %v1946 = vadd.f32 %v1785, %v1945
      %v1947 = vpop.f32.mrb[0].mxu0
      %v1948 = vpop.f32.mrb[0].mxu0
      %v1949 = vadd.f32 %v1788, %v1948
      %v1950 = vpop.f32.mrb[0].mxu0
      %1951 = vmatprep.mubr.bf16.mxu0 0
      %1952 = vmatmul.mubr.bf16.gmra.mrb[0].mxu0 %v1314
      %v1953 = vpop.f32.mrb[0].mxu0
      %v1954 = vadd.f32 %v1793, %v1953
      %v1955 = vpop.f32.mrb[0].mxu0
      %v1956 = vpop.f32.mrb[0].mxu0
      %v1957 = vadd.f32 %v1796, %v1956
      %v1958 = vpop.f32.mrb[0].mxu0
      %1959 = vdwg.mxu0
      %v1960 = vmax.f32 %v1834, %v1842
      %v1961 = vmax.f32 %v1837, %v1845
      %v1962 = vmax.f32 %v1850, %v1858
      %v1963 = vmax.f32 %v1853, %v1861
      %v1964 = vmax.f32 %v1866, %v1874
      %v1965 = vmax.f32 %v1869, %v1877
      %v1966 = vmax.f32 %v1882, %v1890
      %v1967 = vmax.f32 %v1885, %v1893
      %v1968 = vmax.f32 %v1898, %v1906
      %v1969 = vmax.f32 %v1901, %v1909
      %v1970 = vmax.f32 %v1914, %v1922
      %v1971 = vmax.f32 %v1917, %v1925
      %v1972 = vmax.f32 %v1930, %v1938
      %v1973 = vmax.f32 %v1933, %v1941
      %v1974 = vmax.f32 %v1946, %v1954
      %v1975 = vmax.f32 %v1949, %v1957
      %vm1992 = vcmask 1046528
      %v1993 = vrot.slane %v1960, 1
      %v1994 = vrot.slane %v1961, 1
      %v1995 = vsel %vm1992, %v1993, %v1994
      %v1996 = vrot.slane %v1962, 1
      %v1997 = vrot.slane %v1963, 1
      %v1998 = vsel %vm1992, %v1996, %v1997
      %v1999 = vrot.slane %v1964, 1
      %v2000 = vrot.slane %v1965, 1
      %v2001 = vsel %vm1992, %v1999, %v2000
      %v2002 = vrot.slane %v1966, 1
      %v2003 = vrot.slane %v1967, 1
      %v2004 = vsel %vm1992, %v2002, %v2003
      %v2005 = vrot.slane %v1968, 1
      %v2006 = vrot.slane %v1969, 1
      %v2007 = vsel %vm1992, %v2005, %v2006
      %v2008 = vrot.slane %v1970, 1
      %v2009 = vrot.slane %v1971, 1
      %v2010 = vsel %vm1992, %v2008, %v2009
      %v2011 = vrot.slane %v1972, 1
      %v2012 = vrot.slane %v1973, 1
      %v2013 = vsel %vm1992, %v2011, %v2012
      %v2014 = vrot.slane %v1974, 1
      %v2015 = vrot.slane %v1975, 1
      %v2016 = vsel %vm1992, %v2014, %v2015
      %v2033 = vmax.f32 %v1960, %v1995
      %v2034 = vmax.f32 %v1961, %v1994
      %v2035 = vmax.f32 %v1962, %v1998
      %v2036 = vmax.f32 %v1963, %v1997
      %v2037 = vmax.f32 %v1964, %v2001
      %v2038 = vmax.f32 %v1965, %v2000
      %v2039 = vmax.f32 %v1966, %v2004
      %v2040 = vmax.f32 %v1967, %v2003
      %v2041 = vmax.f32 %v1968, %v2007
      %v2042 = vmax.f32 %v1969, %v2006
      %v2043 = vmax.f32 %v1970, %v2010
      %v2044 = vmax.f32 %v1971, %v2009
      %v2045 = vmax.f32 %v1972, %v2013
      %v2046 = vmax.f32 %v1973, %v2012
      %v2047 = vmax.f32 %v1974, %v2016
      %v2048 = vmax.f32 %v1975, %v2015
      %2049 = vst.msk [vmem:[%s170] sm:$0xff] %vm1267, %v2033
      %vm2050 = vcmask 260096
      %2051 = vst.msk [vmem:[%s170 + $0x8] sm:$0x7f] %vm2050, %v2034
      %2052 = vst.msk [vmem:[%s170 + $0x10] sm:$0xff] %vm1267, %v2035
      %2053 = vst.msk [vmem:[%s170 + $0x18] sm:$0x7f] %vm2050, %v2036
      %2054 = vst.msk [vmem:[%s170 + $0x20] sm:$0xff] %vm1267, %v2037
      %2055 = vst.msk [vmem:[%s170 + $0x28] sm:$0x7f] %vm2050, %v2038
      %2056 = vst.msk [vmem:[%s170 + $0x30] sm:$0xff] %vm1267, %v2039
      %2057 = vst.msk [vmem:[%s170 + $0x38] sm:$0x7f] %vm2050, %v2040
      %2058 = vst.msk [vmem:[%s170 + $0x40] sm:$0xff] %vm1267, %v2041
      %2059 = vst.msk [vmem:[%s170 + $0x48] sm:$0x7f] %vm2050, %v2042
      %2060 = vst.msk [vmem:[%s170 + $0x50] sm:$0xff] %vm1267, %v2043
      %2061 = vst.msk [vmem:[%s170 + $0x58] sm:$0x7f] %vm2050, %v2044
      %2062 = vst.msk [vmem:[%s170 + $0x60] sm:$0xff] %vm1267, %v2045
      %2063 = vst.msk [vmem:[%s170 + $0x68] sm:$0x7f] %vm2050, %v2046
      %2064 = vst.msk [vmem:[%s170 + $0x70] sm:$0xff] %vm1267, %v2047
      %2065 = vst.msk [vmem:[%s170 + $0x78] sm:$0x7f] %vm2050, %v2048
      %p2066 = scmp.lt.s32.totalorder %s14, 1
      %s2067 = scalar_select %p2066, %s14, 1
      %s2068 = smul.addr %s2067, 16
      %s2069 = smul.addr %s2068, 8
      %s2070 = scalar_lea.vmem %s3, %s2069
      // Predicated region
      $region33: #{net_forward.5} parent=31 // pred_check
        %p2071 = pneg %p100
      $region34: #{net_forward.5} parent=31 // pred_check_branch
        %2073 = sbr.rel (%p2071) target = $region36
      $region35: #{net_forward.5} parent=31 // pred_region
        _
      $region36: #{net_forward.5} parent=31 // pred_fallthru
        _
    $region32: #{net_forward.5} parent=5 // pred_fallthru
      _
    %p2074 = scmp.le.s32.totalorder 2, %s9
    // Predicated region
    $region37: #{net_forward.5} parent=5 // pred_check
      %p2075 = pneg %p2074
    $region38: #{net_forward.5} parent=5 // pred_check_branch
      %2077 = sbr.rel (%p2075) target = $region40
    $region39: #{net_forward.5} parent=5 // pred_region
      %s2078 = ssub.s32 %s9, 2
      // Predicated region
      $region41: #{net_forward.5} parent=39 // pred_check
        %p2079 = pneg %p106
      $region42: #{net_forward.5} parent=39 // pred_check_branch
        %2081 = sbr.rel (%p2079) target = $region44
      $region43: #{net_forward.5} parent=39 // pred_region
        %p2082 = scmp.lt.s32.totalorder %s15, 1
        %s2083 = scalar_select %p2082, %s15, 1
        %s2084 = smul.addr %s2083, 16
        %s2085 = smul.addr %s2084, 8
        %s2086 = scalar_lea.vmem %s3, %s2085
      $region44: #{net_forward.5} parent=39 // pred_fallthru
        _
    $region40: #{net_forward.5} parent=5 // pred_fallthru
      _
  $region6: #{net_forward.5} parent=0 // loop_footer
    %s13 = sadd.s32 1, %s9
  $region7: #{net_forward.5} parent=0 // loop_footer_branch
    %8 = sbr.rel target = $region3
  $region8: #{net_forward.5} parent=0 // loop_exit
    _

// kernel: net_forward.6
$region0: #{net_forward.6}
  #allocation0 [shape = 'u32[]', space=smem, size = 0x4, offset = 0x4, fixed_abs, tag = 'smem constant byte address 0x4 - core index']
  #allocation1 [shape = 'u32[144,128]{1,0:T(1,128)}', space=vmem, size = 0x12000, scoped, tag = 'internal scratch']
  %s0 = inlined_call_operand.vmem [shape: bf16[2,64,800], index: 0, kind: input, shape index: {}]
  %s1 = inlined_call_operand.vmem [shape: bf16[800,64], index: 1, kind: input, shape index: {}]
  %s2 = inlined_call_operand.vmem [shape: f32[1,64], index: 2, kind: input, shape index: {}]
  %s3 = inlined_call_operand.vmem [shape: f32[2,4,7,64], index: 3, kind: output, shape index: {}]
  %s4 = sld [smem:[#allocation0]]
  $region45: #{net_forward.6} parent=0
    _
  %s6 = ssub.s32 1, %s4
  %s7 = scalar_select 0, %s6, %s4
  loop: start=0, step=1, limit=4
  $region2: #{net_forward.6} parent=0 // loop_pre_header
    _
  $region3: #{net_forward.6} parent=0 // loop_header
    %s9 = sphi 0, %s13
    %p10 = scmp.ge.s32.totalorder %s9, 4
    %s19 = sphi 0, %s21
    %s22 = sphi 0, %s19
    %s23 = sphi 0, %s22
    %s39 = sphi 0, %s23
    %s43 = sphi 0, %s43
    %s45 = sphi 0, %s43
    %s46 = sphi 0, %s45
    %s60 = sphi 0, %s46
    %s64 = sphi 0, %s64
    %s66 = sphi 0, %s64
    %s67 = sphi 0, %s66
    %s81 = sphi 0, %s67
    %s87 = sphi 0, %s89
    %s90 = sphi 0, %s87
    %s91 = sphi 0, %s90
    %s107 = sphi 0, %s91
  $region4: #{net_forward.6} parent=0 // loop_header_branch
    %12 = sbr.rel (%p10) target = $region8
  $region5: #{net_forward.6} parent=0 // loop_body
    %s14 = ssub.s32 %s9, 1
    %s15 = ssub.s32 %s9, 2
    %s16 = sadd.s32 %s9, 1
    %s17 = ssub.s32 %s9, %s16
    %p18 = scmp.eq.s32.totalorder %s17, 0
    %s20 = sadd.s32 %s19, 1
    %s21 = scalar_select %p18, %s19, %s20
    %p24 = pneg %p18
    %p25 = scmp.eq.s32.totalorder %s9, 1
    %p26 = por %p24, %p25
    %p27 = scmp.ne.s32.totalorder %s19, %s22
    %p28 = scmp.eq.s32.totalorder %s9, 0
    %p29 = por %p27, %p28
    %p30 = scmp.ne.s32.totalorder %s19, %s22
    %p31 = scmp.eq.s32.totalorder %s14, 1
    %p32 = por %p30, %p31
    %p33 = scmp.ne.s32.totalorder %s22, %s23
    %p34 = scmp.eq.s32.totalorder %s14, 0
    %p35 = por %p33, %p34
    %p36 = scmp.ne.s32.totalorder %s22, %s23
    %p37 = scmp.eq.s32.totalorder %s15, 1
    %p38 = por %p36, %p37
    %p40 = scmp.ne.s32.totalorder %s23, %s39
    %p41 = scmp.eq.s32.totalorder %s15, 0
    %p42 = por %p40, %p41
    %s44 = sadd.s32 %s43, 1
    %p47 = scmp.eq.s32.totalorder %s9, 1
    %p48 = scmp.ne.s32.totalorder %s43, %s45
    %p49 = scmp.eq.s32.totalorder %s9, 0
    %p50 = por %p48, %p49
    %p51 = scmp.ne.s32.totalorder %s43, %s45
    %p52 = scmp.eq.s32.totalorder %s14, 1
    %p53 = por %p51, %p52
    %p54 = scmp.ne.s32.totalorder %s45, %s46
    %p55 = scmp.eq.s32.totalorder %s14, 0
    %p56 = por %p54, %p55
    %p57 = scmp.ne.s32.totalorder %s45, %s46
    %p58 = scmp.eq.s32.totalorder %s15, 1
    %p59 = por %p57, %p58
    %p61 = scmp.ne.s32.totalorder %s46, %s60
    %p62 = scmp.eq.s32.totalorder %s15, 0
    %p63 = por %p61, %p62
    %s65 = sadd.s32 %s64, 1
    %p68 = scmp.eq.s32.totalorder %s9, 1
    %p69 = scmp.ne.s32.totalorder %s64, %s66
    %p70 = scmp.eq.s32.totalorder %s9, 0
    %p71 = por %p69, %p70
    %p72 = scmp.ne.s32.totalorder %s64, %s66
    %p73 = scmp.eq.s32.totalorder %s14, 1
    %p74 = por %p72, %p73
    %p75 = scmp.ne.s32.totalorder %s66, %s67
    %p76 = scmp.eq.s32.totalorder %s14, 0
    %p77 = por %p75, %p76
    %p78 = scmp.ne.s32.totalorder %s66, %s67
    %p79 = scmp.eq.s32.totalorder %s15, 1
    %p80 = por %p78, %p79
    %p82 = scmp.ne.s32.totalorder %s67, %s81
    %p83 = scmp.eq.s32.totalorder %s15, 0
    %p84 = por %p82, %p83
    %s85 = ssub.s32 %s9, %s16
    %p86 = scmp.eq.s32.totalorder %s85, 0
    %s88 = sadd.s32 %s87, 1
    %s89 = scalar_select %p86, %s87, %s88
    %p92 = pneg %p86
    %p93 = scmp.eq.s32.totalorder %s9, 1
    %p94 = por %p92, %p93
    %p95 = scmp.ne.s32.totalorder %s87, %s90
    %p96 = scmp.eq.s32.totalorder %s9, 0
    %p97 = por %p95, %p96
    %p98 = scmp.ne.s32.totalorder %s87, %s90
    %p99 = scmp.eq.s32.totalorder %s14, 1
    %p100 = por %p98, %p99
    %p101 = scmp.ne.s32.totalorder %s90, %s91
    %p102 = scmp.eq.s32.totalorder %s14, 0
    %p103 = por %p101, %p102
    %p104 = scmp.ne.s32.totalorder %s90, %s91
    %p105 = scmp.eq.s32.totalorder %s15, 1
    %p106 = por %p104, %p105
    %p108 = scmp.ne.s32.totalorder %s91, %s107
    %p109 = scmp.eq.s32.totalorder %s15, 0
    %p110 = por %p108, %p109
    %p111 = scmp.le.s32.totalorder 1, %s9
    %p112 = scmp.lt.s32.totalorder %s9, 3
    %p113 = pnand %p111, %p112
    %p114 = pneg %p113
    // Predicated region
    $region9: #{net_forward.6} parent=5 // pred_check
      _
    $region10: #{net_forward.6} parent=5 // pred_check_branch
      %116 = sbr.rel (%p113) target = $region12
    $region11: #{net_forward.6} parent=5 // pred_region
      %s117 = ssub.s32 %s9, 1
      // Predicated region
      $region13: #{net_forward.6} parent=11 // pred_check
        %p118 = pneg %p56
      $region14: #{net_forward.6} parent=11 // pred_check_branch
        %120 = sbr.rel (%p118) target = $region16
      $region15: #{net_forward.6} parent=11 // pred_region
        _
      $region16: #{net_forward.6} parent=11 // pred_fallthru
        _
      // Predicated region
      $region17: #{net_forward.6} parent=11 // pred_check
        %p121 = pneg %p77
      $region18: #{net_forward.6} parent=11 // pred_check_branch
        %123 = sbr.rel (%p121) target = $region20
      $region19: #{net_forward.6} parent=11 // pred_region
        _
      $region20: #{net_forward.6} parent=11 // pred_fallthru
        _
    $region12: #{net_forward.6} parent=5 // pred_fallthru
      _
    %p124 = scmp.lt.s32.totalorder %s9, 2
    // Predicated region
    $region21: #{net_forward.6} parent=5 // pred_check
      %p125 = pneg %p124
    $region22: #{net_forward.6} parent=5 // pred_check_branch
      %127 = sbr.rel (%p125) target = $region24
    $region23: #{net_forward.6} parent=5 // pred_region
      // Predicated region
      $region25: #{net_forward.6} parent=23 // pred_check
        %p128 = pneg %p29
      $region26: #{net_forward.6} parent=23 // pred_check_branch
        %130 = sbr.rel (%p128) target = $region28
      $region27: #{net_forward.6} parent=23 // pred_region
        %p131 = scmp.lt.s32.totalorder %s9, 1
        %s132 = scalar_select %p131, %s9, 1
        %s133 = smul.addr %s132, 56
        %s134 = smul.addr %s133, 4
        %s135 = scalar_lea.vmem %s0, %s134
      $region28: #{net_forward.6} parent=23 // pred_fallthru
        _
    $region24: #{net_forward.6} parent=5 // pred_fallthru
      _
    %p136 = scmp.le.s32.totalorder 1, %s9
    %p137 = scmp.lt.s32.totalorder %s9, 3
    %p138 = pnand %p136, %p137
    %p139 = pneg %p138
    // Predicated region
    $region29: #{net_forward.6} parent=5 // pred_check
      _
    $region30: #{net_forward.6} parent=5 // pred_check_branch
      %141 = sbr.rel (%p138) target = $region32
    $region31: #{net_forward.6} parent=5 // pred_region
      %s142 = ssub.s32 %s9, 1
      %p143 = scmp.lt.s32.totalorder %s14, 1
      %s144 = scalar_select %p143, %s14, 1
      %s145 = smul.addr %s144, 56
      %s146 = smul.addr %s145, 4
      %s147 = scalar_lea.vmem %s0, %s146
      %p148 = pneg %p35
      %p149 = pneg %p32
      %p150 = pneg %p56
      %p151 = pneg %p53
      %p152 = pneg %p77
      %p153 = pneg %p74
      %p154 = pneg %p103
      %p155 = pneg %p100
      %p156 = scmp.lt.s32.totalorder %s14, 1
      %s157 = scalar_select %p156, %s14, 1
      %s158 = smul.addr %s157, 4
      %s159 = smul.addr %s158, 8
      %s160 = scalar_lea.vmem %s3, %s159
      %p161 = scmp.lt.s32.totalorder %s14, 1
      %s162 = scalar_select %p161, %s14, 1
      %s163 = smul.addr %s162, 56
      %s164 = smul.addr %s163, 4
      %s165 = scalar_lea.vmem %s0, %s164
      %p166 = scmp.lt.s32.totalorder %s14, 1
      %s167 = scalar_select %p166, %s14, 1
      %s168 = smul.addr %s167, 4
      %s169 = smul.addr %s168, 8
      %s170 = scalar_lea.vmem %s3, %s169
      %v172 = vld [vmem:[%s165] sm:$0xff]
      %v173 = vld [vmem:[%s165 + $0x8] sm:$0xff]
      %v174 = vld [vmem:[%s165 + $0x10] sm:$0xff]
      %v175 = vld [vmem:[%s165 + $0x18] sm:$0xf]
      %v176 = vld [vmem:[%s165 + $0x1c] sm:$0xff]
      %v177 = vld [vmem:[%s165 + $0x24] sm:$0xff]
      %v178 = vld [vmem:[%s165 + $0x2c] sm:$0xff]
      %v179 = vld [vmem:[%s165 + $0x34] sm:$0xf]
      %v180 = vld [vmem:[%s165 + $0x38] sm:$0xff]
      %v181 = vld [vmem:[%s165 + $0x40] sm:$0xff]
      %v182 = vld [vmem:[%s165 + $0x48] sm:$0xff]
      %v183 = vld [vmem:[%s165 + $0x50] sm:$0xf]
      %v184 = vld [vmem:[%s165 + $0x54] sm:$0xff]
      %v185 = vld [vmem:[%s165 + $0x5c] sm:$0xff]
      %v186 = vld [vmem:[%s165 + $0x64] sm:$0xff]
      %v187 = vld [vmem:[%s165 + $0x6c] sm:$0xf]
      %v188 = vld [vmem:[%s165 + $0x70] sm:$0xff]
      %v189 = vld [vmem:[%s165 + $0x78] sm:$0xff]
      %v190 = vld [vmem:[%s165 + $0x80] sm:$0xff]
      %v191 = vld [vmem:[%s165 + $0x88] sm:$0xf]
      %v192 = vld [vmem:[%s165 + $0x8c] sm:$0xff]
      %v193 = vld [vmem:[%s165 + $0x94] sm:$0xff]
      %v194 = vld [vmem:[%s165 + $0x9c] sm:$0xff]
      %v195 = vld [vmem:[%s165 + $0xa4] sm:$0xf]
      %v196 = vld [vmem:[%s165 + $0xa8] sm:$0xff]
      %v197 = vld [vmem:[%s165 + $0xb0] sm:$0xff]
      %v198 = vld [vmem:[%s165 + $0xb8] sm:$0xff]
      %v199 = vld [vmem:[%s165 + $0xc0] sm:$0xf]
      %v200 = vld [vmem:[%s165 + $0xc4] sm:$0xff]
      %v201 = vld [vmem:[%s165 + $0xcc] sm:$0xff]
      %v202 = vld [vmem:[%s165 + $0xd4] sm:$0xff]
      %v203 = vld [vmem:[%s165 + $0xdc] sm:$0xf]
      %v204 = vld [vmem:[%s1] sm:$0xf]
      %v205 = vld [vmem:[%s1 + $0x4] sm:$0xf]
      %v206 = vld [vmem:[%s1 + $0x8] sm:$0xf]
      %v207 = vld [vmem:[%s1 + $0xc] sm:$0xf]
      %v208 = vld [vmem:[%s1 + $0x10] sm:$0xf]
      %v209 = vld [vmem:[%s1 + $0x14] sm:$0xf]
      %v210 = vld [vmem:[%s1 + $0x18] sm:$0xf]
      %v211 = vld [vmem:[%s1 + $0x1c] sm:$0xf]
      %v212 = vld [vmem:[%s1 + $0x20] sm:$0xf]
      %v213 = vld [vmem:[%s1 + $0x24] sm:$0xf]
      %v214 = vld [vmem:[%s1 + $0x28] sm:$0xf]
      %v215 = vld [vmem:[%s1 + $0x2c] sm:$0xf]
      %v216 = vld [vmem:[%s1 + $0x30] sm:$0xf]
      %v217 = vld [vmem:[%s1 + $0x34] sm:$0xf]
      %v218 = vld [vmem:[%s1 + $0x38] sm:$0xf]
      %v219 = vld [vmem:[%s1 + $0x3c] sm:$0xf]
      %v220 = vld [vmem:[%s1 + $0x40] sm:$0xf]
      %v221 = vld [vmem:[%s1 + $0x44] sm:$0xf]
      %v222 = vld [vmem:[%s1 + $0x48] sm:$0xf]
      %v223 = vld [vmem:[%s1 + $0x4c] sm:$0xf]
      %v224 = vld [vmem:[%s1 + $0x50] sm:$0xf]
      %v225 = vld [vmem:[%s1 + $0x54] sm:$0xf]
      %v226 = vld [vmem:[%s1 + $0x58] sm:$0xf]
      %v227 = vld [vmem:[%s1 + $0x5c] sm:$0xf]
      %v228 = vld [vmem:[%s1 + $0x60] sm:$0xf]
      %v229 = vld [vmem:[%s1 + $0x64] sm:$0xf]
      %v230 = vld [vmem:[%s1 + $0x68] sm:$0xf]
      %v231 = vld [vmem:[%s1 + $0x6c] sm:$0xf]
      %v232 = vld [vmem:[%s1 + $0x70] sm:$0xf]
      %v233 = vld [vmem:[%s1 + $0x74] sm:$0xf]
      %v234 = vld [vmem:[%s1 + $0x78] sm:$0xf]
      %v235 = vld [vmem:[%s1 + $0x7c] sm:$0xf]
      %v236 = vld [vmem:[%s1 + $0x80] sm:$0xf]
      %v237 = vld [vmem:[%s1 + $0x84] sm:$0xf]
      %v238 = vld [vmem:[%s1 + $0x88] sm:$0xf]
      %v239 = vld [vmem:[%s1 + $0x8c] sm:$0xf]
      %v240 = vld [vmem:[%s1 + $0x90] sm:$0xf]
      %v241 = vld [vmem:[%s1 + $0x94] sm:$0xf]
      %v242 = vld [vmem:[%s1 + $0x98] sm:$0xf]
      %v243 = vld [vmem:[%s1 + $0x9c] sm:$0xf]
      %v244 = vld [vmem:[%s1 + $0xa0] sm:$0xf]
      %v245 = vld [vmem:[%s1 + $0xa4] sm:$0xf]
      %v246 = vld [vmem:[%s1 + $0xa8] sm:$0xf]
      %v247 = vld [vmem:[%s1 + $0xac] sm:$0xf]
      %v248 = vld [vmem:[%s1 + $0xb0] sm:$0xf]
      %v249 = vld [vmem:[%s1 + $0xb4] sm:$0xf]
      %v250 = vld [vmem:[%s1 + $0xb8] sm:$0xf]
      %v251 = vld [vmem:[%s1 + $0xbc] sm:$0xf]
      %v252 = vld [vmem:[%s1 + $0xc0] sm:$0xf]
      %v253 = vld [vmem:[%s1 + $0xc4] sm:$0xf]
      %v254 = vld [vmem:[%s1 + $0xc8] sm:$0xf]
      %v255 = vld [vmem:[%s1 + $0xcc] sm:$0xf]
      %v256 = vld [vmem:[%s1 + $0xd0] sm:$0xf]
      %v257 = vld [vmem:[%s1 + $0xd4] sm:$0xf]
      %v258 = vld [vmem:[%s1 + $0xd8] sm:$0xf]
      %v259 = vld [vmem:[%s1 + $0xdc] sm:$0xf]
      %v260 = vld [vmem:[%s1 + $0xe0] sm:$0xf]
      %v261 = vld [vmem:[%s1 + $0xe4] sm:$0xf]
      %v262 = vld [vmem:[%s1 + $0xe8] sm:$0xf]
      %v263 = vld [vmem:[%s1 + $0xec] sm:$0xf]
      %v264 = vld [vmem:[%s1 + $0xf0] sm:$0xf]
      %v265 = vld [vmem:[%s1 + $0xf4] sm:$0xf]
      %v266 = vld [vmem:[%s1 + $0xf8] sm:$0xf]
      %v267 = vld [vmem:[%s1 + $0xfc] sm:$0xf]
      %v268 = vld [vmem:[%s1 + $0x100] sm:$0xf]
      %v269 = vld [vmem:[%s1 + $0x104] sm:$0xf]
      %v270 = vld [vmem:[%s1 + $0x108] sm:$0xf]
      %v271 = vld [vmem:[%s1 + $0x10c] sm:$0xf]
      %v272 = vld [vmem:[%s1 + $0x110] sm:$0xf]
      %v273 = vld [vmem:[%s1 + $0x114] sm:$0xf]
      %v274 = vld [vmem:[%s1 + $0x118] sm:$0xf]
      %v275 = vld [vmem:[%s1 + $0x11c] sm:$0xf]
      %v276 = vld [vmem:[%s1 + $0x120] sm:$0xf]
      %v277 = vld [vmem:[%s1 + $0x124] sm:$0xf]
      %v278 = vld [vmem:[%s1 + $0x128] sm:$0xf]
      %v279 = vld [vmem:[%s1 + $0x12c] sm:$0xf]
      %v280 = vld [vmem:[%s1 + $0x130] sm:$0xf]
      %v281 = vld [vmem:[%s1 + $0x134] sm:$0xf]
      %v282 = vld [vmem:[%s1 + $0x138] sm:$0xf]
      %v283 = vld [vmem:[%s1 + $0x13c] sm:$0xf]
      %v284 = vld [vmem:[%s1 + $0x140] sm:$0xf]
      %v285 = vld [vmem:[%s1 + $0x144] sm:$0xf]
      %v286 = vld [vmem:[%s1 + $0x148] sm:$0xf]
      %v287 = vld [vmem:[%s1 + $0x14c] sm:$0xf]
      %v288 = vld [vmem:[%s1 + $0x150] sm:$0xf]
      %v289 = vld [vmem:[%s1 + $0x154] sm:$0xf]
      %v290 = vld [vmem:[%s1 + $0x158] sm:$0xf]
      %v291 = vld [vmem:[%s1 + $0x15c] sm:$0xf]
      %v292 = vld [vmem:[%s1 + $0x160] sm:$0xf]
      %v293 = vld [vmem:[%s1 + $0x164] sm:$0xf]
      %v294 = vld [vmem:[%s1 + $0x168] sm:$0xf]
      %v295 = vld [vmem:[%s1 + $0x16c] sm:$0xf]
      %v296 = vld [vmem:[%s1 + $0x170] sm:$0xf]
      %v297 = vld [vmem:[%s1 + $0x174] sm:$0xf]
      %v298 = vld [vmem:[%s1 + $0x178] sm:$0xf]
      %v299 = vld [vmem:[%s1 + $0x17c] sm:$0xf]
      %v300 = vld [vmem:[%s1 + $0x180] sm:$0xf]
      %v301 = vld [vmem:[%s1 + $0x184] sm:$0xf]
      %v302 = vld [vmem:[%s1 + $0x188] sm:$0xf]
      %v303 = vld [vmem:[%s1 + $0x18c] sm:$0xf]
      %v304 = vld [vmem:[%s2] sm:$0x1]
      %v306 = vlaneseq
      %v307 = vshrl.u32 %v306, 7
      %v308 = vsub.s32 0, %v307
      %v309 = vrot.slane %v304, %v308
      %v343 = vunpack.c.l.b16 %v172
      %v344 = vunpack.c.h.b16 %v172
      %v345 = vunpack.c.l.b16 %v173
      %v346 = vunpack.c.h.b16 %v173
      %v347 = vunpack.c.l.b16 %v174
      %v348 = vunpack.c.h.b16 %v174
      %v349 = vunpack.c.l.b16 %v175
      %v350 = vunpack.c.l.b16 %v176
      %v351 = vunpack.c.h.b16 %v176
      %v352 = vunpack.c.l.b16 %v177
      %v353 = vunpack.c.h.b16 %v177
      %v354 = vunpack.c.l.b16 %v178
      %v355 = vunpack.c.h.b16 %v178
      %v356 = vunpack.c.l.b16 %v179
      %v357 = vunpack.c.l.b16 %v180
      %v358 = vunpack.c.h.b16 %v180
      %v359 = vunpack.c.l.b16 %v181
      %v360 = vunpack.c.h.b16 %v181
      %v361 = vunpack.c.l.b16 %v182
      %v362 = vunpack.c.h.b16 %v182
      %v363 = vunpack.c.l.b16 %v183
      %v364 = vunpack.c.l.b16 %v184
      %v365 = vunpack.c.h.b16 %v184
      %v366 = vunpack.c.l.b16 %v185
      %v367 = vunpack.c.h.b16 %v185
      %v368 = vunpack.c.l.b16 %v186
      %v369 = vunpack.c.h.b16 %v186
      %v370 = vunpack.c.l.b16 %v187
      %v371 = vunpack.c.l.b16 %v188
      %v372 = vunpack.c.h.b16 %v188
      %v373 = vunpack.c.l.b16 %v189
      %v374 = vunpack.c.h.b16 %v189
      %v375 = vunpack.c.l.b16 %v190
      %v376 = vunpack.c.h.b16 %v190
      %v377 = vunpack.c.l.b16 %v191
      %v378 = vunpack.c.l.b16 %v192
      %v379 = vunpack.c.h.b16 %v192
      %v380 = vunpack.c.l.b16 %v193
      %v381 = vunpack.c.h.b16 %v193
      %v382 = vunpack.c.l.b16 %v194
      %v383 = vunpack.c.h.b16 %v194
      %v384 = vunpack.c.l.b16 %v195
      %v385 = vunpack.c.l.b16 %v196
      %v386 = vunpack.c.h.b16 %v196
      %v387 = vunpack.c.l.b16 %v197
      %v388 = vunpack.c.h.b16 %v197
      %v389 = vunpack.c.l.b16 %v198
      %v390 = vunpack.c.h.b16 %v198
      %v391 = vunpack.c.l.b16 %v199
      %v392 = vunpack.c.l.b16 %v200
      %v393 = vunpack.c.h.b16 %v200
      %v394 = vunpack.c.l.b16 %v201
      %v395 = vunpack.c.h.b16 %v201
      %v396 = vunpack.c.l.b16 %v202
      %v397 = vunpack.c.h.b16 %v202
      %v398 = vunpack.c.l.b16 %v203
      %v399 = vpack.c.b16 %v350, %v343
      %v400 = vpack.c.b16 %v351, %v344
      %v401 = vpack.c.b16 %v352, %v345
      %v402 = vpack.c.b16 %v353, %v346
      %v403 = vpack.c.b16 %v354, %v347
      %v404 = vpack.c.b16 %v355, %v348
      %v405 = vpack.c.b16 %v356, %v349
      %v406 = vpack.c.b16 %v364, %v357
      %v407 = vpack.c.b16 %v365, %v358
      %v408 = vpack.c.b16 %v366, %v359
      %v409 = vpack.c.b16 %v367, %v360
      %v410 = vpack.c.b16 %v368, %v361
      %v411 = vpack.c.b16 %v369, %v362
      %v412 = vpack.c.b16 %v370, %v363
      %v413 = vpack.c.b16 %v378, %v371
      %v414 = vpack.c.b16 %v379, %v372
      %v415 = vpack.c.b16 %v380, %v373
      %v416 = vpack.c.b16 %v381, %v374
      %v417 = vpack.c.b16 %v382, %v375
      %v418 = vpack.c.b16 %v383, %v376
      %v419 = vpack.c.b16 %v384, %v377
      %v420 = vpack.c.b16 %v392, %v385
      %v421 = vpack.c.b16 %v393, %v386
      %v422 = vpack.c.b16 %v394, %v387
      %v423 = vpack.c.b16 %v395, %v388
      %v424 = vpack.c.b16 %v396, %v389
      %v425 = vpack.c.b16 %v397, %v390
      %v426 = vpack.c.b16 %v398, %v391
      %v551 = vunpack.c.l.b16 %v204
      %v552 = vunpack.c.l.b16 %v205
      %v553 = vunpack.c.l.b16 %v206
      %v554 = vunpack.c.l.b16 %v207
      %v555 = vunpack.c.l.b16 %v208
      %v556 = vunpack.c.l.b16 %v209
      %v557 = vunpack.c.l.b16 %v210
      %v558 = vunpack.c.l.b16 %v211
      %v559 = vunpack.c.l.b16 %v212
      %v560 = vunpack.c.l.b16 %v213
      %v561 = vunpack.c.l.b16 %v214
      %v562 = vunpack.c.l.b16 %v215
      %v563 = vunpack.c.l.b16 %v216
      %v564 = vunpack.c.l.b16 %v217
      %v565 = vunpack.c.l.b16 %v218
      %v566 = vunpack.c.l.b16 %v219
      %v567 = vunpack.c.l.b16 %v220
      %v568 = vunpack.c.l.b16 %v221
      %v569 = vunpack.c.l.b16 %v222
      %v570 = vunpack.c.l.b16 %v223
      %v571 = vunpack.c.l.b16 %v224
      %v572 = vunpack.c.l.b16 %v225
      %v573 = vunpack.c.l.b16 %v226
      %v574 = vunpack.c.l.b16 %v227
      %v575 = vunpack.c.l.b16 %v228
      %v576 = vunpack.c.l.b16 %v229
      %v577 = vunpack.c.l.b16 %v230
      %v578 = vunpack.c.l.b16 %v231
      %v579 = vunpack.c.l.b16 %v232
      %v580 = vunpack.c.l.b16 %v233
      %v581 = vunpack.c.l.b16 %v234
      %v582 = vunpack.c.l.b16 %v235
      %v583 = vunpack.c.l.b16 %v236
      %v584 = vunpack.c.l.b16 %v237
      %v585 = vunpack.c.l.b16 %v238
      %v586 = vunpack.c.l.b16 %v239
      %v587 = vunpack.c.l.b16 %v240
      %v588 = vunpack.c.l.b16 %v241
      %v589 = vunpack.c.l.b16 %v242
      %v590 = vunpack.c.l.b16 %v243
      %v591 = vunpack.c.l.b16 %v244
      %v592 = vunpack.c.l.b16 %v245
      %v593 = vunpack.c.l.b16 %v246
      %v594 = vunpack.c.l.b16 %v247
      %v595 = vunpack.c.l.b16 %v248
      %v596 = vunpack.c.l.b16 %v249
      %v597 = vunpack.c.l.b16 %v250
      %v598 = vunpack.c.l.b16 %v251
      %v599 = vunpack.c.l.b16 %v252
      %v600 = vunpack.c.l.b16 %v253
      %v601 = vunpack.c.l.b16 %v254
      %v602 = vunpack.c.l.b16 %v255
      %v603 = vunpack.c.l.b16 %v256
      %v604 = vunpack.c.l.b16 %v257
      %v605 = vunpack.c.l.b16 %v258
      %v606 = vunpack.c.l.b16 %v259
      %v607 = vunpack.c.l.b16 %v260
      %v608 = vunpack.c.l.b16 %v261
      %v609 = vunpack.c.l.b16 %v262
      %v610 = vunpack.c.l.b16 %v263
      %v611 = vunpack.c.l.b16 %v264
      %v612 = vunpack.c.l.b16 %v265
      %v613 = vunpack.c.l.b16 %v266
      %v614 = vunpack.c.l.b16 %v267
      %v615 = vunpack.c.l.b16 %v268
      %v616 = vunpack.c.l.b16 %v269
      %v617 = vunpack.c.l.b16 %v270
      %v618 = vunpack.c.l.b16 %v271
      %v619 = vunpack.c.l.b16 %v272
      %v620 = vunpack.c.l.b16 %v273
      %v621 = vunpack.c.l.b16 %v274
      %v622 = vunpack.c.l.b16 %v275
      %v623 = vunpack.c.l.b16 %v276
      %v624 = vunpack.c.l.b16 %v277
      %v625 = vunpack.c.l.b16 %v278
      %v626 = vunpack.c.l.b16 %v279
      %v627 = vunpack.c.l.b16 %v280
      %v628 = vunpack.c.l.b16 %v281
      %v629 = vunpack.c.l.b16 %v282
      %v630 = vunpack.c.l.b16 %v283
      %v631 = vunpack.c.l.b16 %v284
      %v632 = vunpack.c.l.b16 %v285
      %v633 = vunpack.c.l.b16 %v286
      %v634 = vunpack.c.l.b16 %v287
      %v635 = vunpack.c.l.b16 %v288
      %v636 = vunpack.c.l.b16 %v289
      %v637 = vunpack.c.l.b16 %v290
      %v638 = vunpack.c.l.b16 %v291
      %v639 = vunpack.c.l.b16 %v292
      %v640 = vunpack.c.l.b16 %v293
      %v641 = vunpack.c.l.b16 %v294
      %v642 = vunpack.c.l.b16 %v295
      %v643 = vunpack.c.l.b16 %v296
      %v644 = vunpack.c.l.b16 %v297
      %v645 = vunpack.c.l.b16 %v298
      %v646 = vunpack.c.l.b16 %v299
      %v647 = vunpack.c.l.b16 %v300
      %v648 = vunpack.c.l.b16 %v301
      %v649 = vunpack.c.l.b16 %v302
      %v650 = vunpack.c.l.b16 %v303
      %v651 = vpack.c.b16 %v552, %v551
      %v652 = vpack.c.b16 %v554, %v553
      %v653 = vpack.c.b16 %v556, %v555
      %v654 = vpack.c.b16 %v558, %v557
      %v655 = vpack.c.b16 %v560, %v559
      %v656 = vpack.c.b16 %v562, %v561
      %v657 = vpack.c.b16 %v564, %v563
      %v658 = vpack.c.b16 %v566, %v565
      %v659 = vpack.c.b16 %v568, %v567
      %v660 = vpack.c.b16 %v570, %v569
      %v661 = vpack.c.b16 %v572, %v571
      %v662 = vpack.c.b16 %v574, %v573
      %v663 = vpack.c.b16 %v576, %v575
      %v664 = vpack.c.b16 %v578, %v577
      %v665 = vpack.c.b16 %v580, %v579
      %v666 = vpack.c.b16 %v582, %v581
      %v667 = vpack.c.b16 %v584, %v583
      %v668 = vpack.c.b16 %v586, %v585
      %v669 = vpack.c.b16 %v588, %v587
      %v670 = vpack.c.b16 %v590, %v589
      %v671 = vpack.c.b16 %v592, %v591
      %v672 = vpack.c.b16 %v594, %v593
      %v673 = vpack.c.b16 %v596, %v595
      %v674 = vpack.c.b16 %v598, %v597
      %v675 = vpack.c.b16 %v600, %v599
      %v676 = vpack.c.b16 %v602, %v601
      %v677 = vpack.c.b16 %v604, %v603
      %v678 = vpack.c.b16 %v606, %v605
      %v679 = vpack.c.b16 %v608, %v607
      %v680 = vpack.c.b16 %v610, %v609
      %v681 = vpack.c.b16 %v612, %v611
      %v682 = vpack.c.b16 %v614, %v613
      %v683 = vpack.c.b16 %v616, %v615
      %v684 = vpack.c.b16 %v618, %v617
      %v685 = vpack.c.b16 %v620, %v619
      %v686 = vpack.c.b16 %v622, %v621
      %v687 = vpack.c.b16 %v624, %v623
      %v688 = vpack.c.b16 %v626, %v625
      %v689 = vpack.c.b16 %v628, %v627
      %v690 = vpack.c.b16 %v630, %v629
      %v691 = vpack.c.b16 %v632, %v631
      %v692 = vpack.c.b16 %v634, %v633
      %v693 = vpack.c.b16 %v636, %v635
      %v694 = vpack.c.b16 %v638, %v637
      %v695 = vpack.c.b16 %v640, %v639
      %v696 = vpack.c.b16 %v642, %v641
      %v697 = vpack.c.b16 %v644, %v643
      %v698 = vpack.c.b16 %v646, %v645
      %v699 = vpack.c.b16 %v648, %v647
      %v700 = vpack.c.b16 %v650, %v649
      %vm751 = vcmask 261120
      %v753 = vsel %vm751, %v405, 0
      %v756 = vsel %vm751, %v412, 0
      %v759 = vsel %vm751, %v419, 0
      %v762 = vsel %vm751, %v426, 0
      %764 = vmatprep.subr.bf16.mxu0 0
      %765 = vmatpush1.bf16.msra.mxu0 %v651
      %766 = vmatprep.subr.bf16.mxu0 0
      %767 = vmatpush1.bf16.msra.mxu0 %v652
      %768 = vmatprep.subr.bf16.mxu0 0
      %769 = vmatpush1.bf16.msra.mxu0 %v653
      %770 = vmatprep.subr.bf16.mxu0 0
      %771 = vmatpush1.bf16.msra.mxu0 %v654
      %772 = vmatprep.subr.bf16.mxu0 0
      %773 = vmatpush1.bf16.msra.mxu0 %v655
      %774 = vmatprep.subr.bf16.mxu0 0
      %775 = vmatpush1.bf16.msra.mxu0 %v656
      %776 = vmatprep.subr.bf16.mxu0 0
      %777 = vmatpush1.bf16.msra.mxu0 %v657
      %778 = vmatprep.subr.bf16.mxu0 0
      %779 = vmatpush1.bf16.msra.mxu0 %v658
      %780 = vmatprep.subr.bf16.mxu0 0
      %781 = vmatpush1.bf16.msra.mxu0 %v659
      %782 = vmatprep.subr.bf16.mxu0 0
      %783 = vmatpush1.bf16.msra.mxu0 %v660
      %784 = vmatprep.subr.bf16.mxu0 0
      %785 = vmatpush1.bf16.msra.mxu0 %v661
      %786 = vmatprep.subr.bf16.mxu0 0
      %787 = vmatpush1.bf16.msra.mxu0 %v662
      %788 = vmatprep.subr.bf16.mxu0 0
      %789 = vmatpush1.bf16.msra.mxu0 %v663
      %790 = vmatprep.subr.bf16.mxu0 0
      %791 = vmatpush1.bf16.msra.mxu0 %v664
      %792 = vmatprep.subr.bf16.mxu0 0
      %793 = vmatpush1.bf16.msra.mxu0 %v665
      %794 = vmatprep.subr.bf16.mxu0 0
      %795 = vmatpush1.bf16.msra.mxu0 %v666
      %796 = vmatprep.mubr.bf16.mxu0 %v400
      %797 = vmatmul.mubr.bf16.gmra.mrb[0].mxu0 %v399
      %v798 = vpop.f32.mrb[0].mxu0
      %v799 = vadd.f32 %v309, %v798
      %v800 = vpop.f32.mrb[0].mxu0
      %v801 = vpop.f32.mrb[0].mxu0
      %v802 = vadd.f32 %v309, %v801
      %v803 = vpop.f32.mrb[0].mxu0
      %804 = vmatprep.mubr.bf16.mxu0 %v407
      %805 = vmatmul.mubr.bf16.gmra.mrb[0].mxu0 %v406
      %v806 = vpop.f32.mrb[0].mxu0
      %v807 = vadd.f32 %v309, %v806
      %v808 = vpop.f32.mrb[0].mxu0
      %v809 = vpop.f32.mrb[0].mxu0
      %v810 = vadd.f32 %v309, %v809
      %v811 = vpop.f32.mrb[0].mxu0
      %812 = vmatprep.mubr.bf16.mxu0 %v414
      %813 = vmatmul.mubr.bf16.gmra.mrb[0].mxu0 %v413
      %v814 = vpop.f32.mrb[0].mxu0
      %v815 = vadd.f32 %v309, %v814
      %v816 = vpop.f32.mrb[0].mxu0
      %v817 = vpop.f32.mrb[0].mxu0
      %v818 = vadd.f32 %v309, %v817
      %v819 = vpop.f32.mrb[0].mxu0
      %820 = vmatprep.mubr.bf16.mxu0 %v421
      %821 = vmatmul.mubr.bf16.gmra.mrb[0].mxu0 %v420
      %v822 = vpop.f32.mrb[0].mxu0
      %v823 = vadd.f32 %v309, %v822
      %v824 = vpop.f32.mrb[0].mxu0
      %v825 = vpop.f32.mrb[0].mxu0
      %v826 = vadd.f32 %v309, %v825
      %v827 = vpop.f32.mrb[0].mxu0
      %828 = vdwg.mxu0
      %829 = vmatprep.subr.bf16.mxu0 0
      %830 = vmatpush1.bf16.msra.mxu0 %v667
      %831 = vmatprep.subr.bf16.mxu0 0
      %832 = vmatpush1.bf16.msra.mxu0 %v668
      %833 = vmatprep.subr.bf16.mxu0 0
      %834 = vmatpush1.bf16.msra.mxu0 %v669
      %835 = vmatprep.subr.bf16.mxu0 0
      %836 = vmatpush1.bf16.msra.mxu0 %v670
      %837 = vmatprep.subr.bf16.mxu0 0
      %838 = vmatpush1.bf16.msra.mxu0 %v671
      %839 = vmatprep.subr.bf16.mxu0 0
      %840 = vmatpush1.bf16.msra.mxu0 %v672
      %841 = vmatprep.subr.bf16.mxu0 0
      %842 = vmatpush1.bf16.msra.mxu0 %v673
      %843 = vmatprep.subr.bf16.mxu0 0
      %844 = vmatpush1.bf16.msra.mxu0 %v674
      %845 = vmatprep.subr.bf16.mxu0 0
      %846 = vmatpush1.bf16.msra.mxu0 %v675
      %847 = vmatprep.subr.bf16.mxu0 0
      %848 = vmatpush1.bf16.msra.mxu0 %v676
      %849 = vmatprep.subr.bf16.mxu0 0
      %850 = vmatpush1.bf16.msra.mxu0 %v677
      %851 = vmatprep.subr.bf16.mxu0 0
      %852 = vmatpush1.bf16.msra.mxu0 %v678
      %853 = vmatprep.subr.bf16.mxu0 0
      %854 = vmatpush1.bf16.msra.mxu0 %v679
      %855 = vmatprep.subr.bf16.mxu0 0
      %856 = vmatpush1.bf16.msra.mxu0 %v680
      %857 = vmatprep.subr.bf16.mxu0 0
      %858 = vmatpush1.bf16.msra.mxu0 %v681
      %859 = vmatprep.subr.bf16.mxu0 0
      %860 = vmatpush1.bf16.msra.mxu0 %v682
      %861 = vmatprep.mubr.bf16.mxu0 %v402
      %862 = vmatmul.mubr.bf16.gmra.mrb[0].mxu0 %v401
      %v863 = vpop.f32.mrb[0].mxu0
      %v864 = vadd.f32 %v799, %v863
      %v865 = vpop.f32.mrb[0].mxu0
      %v866 = vpop.f32.mrb[0].mxu0
      %v867 = vadd.f32 %v802, %v866
      %v868 = vpop.f32.mrb[0].mxu0
      %869 = vmatprep.mubr.bf16.mxu0 %v409
      %870 = vmatmul.mubr.bf16.gmra.mrb[0].mxu0 %v408
      %v871 = vpop.f32.mrb[0].mxu0
      %v872 = vadd.f32 %v807, %v871
      %v873 = vpop.f32.mrb[0].mxu0
      %v874 = vpop.f32.mrb[0].mxu0
      %v875 = vadd.f32 %v810, %v874
      %v876 = vpop.f32.mrb[0].mxu0
      %877 = vmatprep.mubr.bf16.mxu0 %v416
      %878 = vmatmul.mubr.bf16.gmra.mrb[0].mxu0 %v415
      %v879 = vpop.f32.mrb[0].mxu0
      %v880 = vadd.f32 %v815, %v879
      %v881 = vpop.f32.mrb[0].mxu0
      %v882 = vpop.f32.mrb[0].mxu0
      %v883 = vadd.f32 %v818, %v882
      %v884 = vpop.f32.mrb[0].mxu0
      %885 = vmatprep.mubr.bf16.mxu0 %v423
      %886 = vmatmul.mubr.bf16.gmra.mrb[0].mxu0 %v422
      %v887 = vpop.f32.mrb[0].mxu0
      %v888 = vadd.f32 %v823, %v887
      %v889 = vpop.f32.mrb[0].mxu0
      %v890 = vpop.f32.mrb[0].mxu0
      %v891 = vadd.f32 %v826, %v890
      %v892 = vpop.f32.mrb[0].mxu0
      %893 = vdwg.mxu0
      %894 = vmatprep.subr.bf16.mxu0 0
      %895 = vmatpush1.bf16.msra.mxu0 %v683
      %896 = vmatprep.subr.bf16.mxu0 0
      %897 = vmatpush1.bf16.msra.mxu0 %v684
      %898 = vmatprep.subr.bf16.mxu0 0
      %899 = vmatpush1.bf16.msra.mxu0 %v685
      %900 = vmatprep.subr.bf16.mxu0 0
      %901 = vmatpush1.bf16.msra.mxu0 %v686
      %902 = vmatprep.subr.bf16.mxu0 0
      %903 = vmatpush1.bf16.msra.mxu0 %v687
      %904 = vmatprep.subr.bf16.mxu0 0
      %905 = vmatpush1.bf16.msra.mxu0 %v688
      %906 = vmatprep.subr.bf16.mxu0 0
      %907 = vmatpush1.bf16.msra.mxu0 %v689
      %908 = vmatprep.subr.bf16.mxu0 0
      %909 = vmatpush1.bf16.msra.mxu0 %v690
      %910 = vmatprep.subr.bf16.mxu0 0
      %911 = vmatpush1.bf16.msra.mxu0 %v691
      %912 = vmatprep.subr.bf16.mxu0 0
      %913 = vmatpush1.bf16.msra.mxu0 %v692
      %914 = vmatprep.subr.bf16.mxu0 0
      %915 = vmatpush1.bf16.msra.mxu0 %v693
      %916 = vmatprep.subr.bf16.mxu0 0
      %917 = vmatpush1.bf16.msra.mxu0 %v694
      %918 = vmatprep.subr.bf16.mxu0 0
      %919 = vmatpush1.bf16.msra.mxu0 %v695
      %920 = vmatprep.subr.bf16.mxu0 0
      %921 = vmatpush1.bf16.msra.mxu0 %v696
      %922 = vmatprep.subr.bf16.mxu0 0
      %923 = vmatpush1.bf16.msra.mxu0 %v697
      %924 = vmatprep.subr.bf16.mxu0 0
      %925 = vmatpush1.bf16.msra.mxu0 %v698
      %926 = vmatprep.mubr.bf16.mxu0 %v404
      %927 = vmatmul.mubr.bf16.gmra.mrb[0].mxu0 %v403
      %v928 = vpop.f32.mrb[0].mxu0
      %v929 = vadd.f32 %v864, %v928
      %v930 = vpop.f32.mrb[0].mxu0
      %v931 = vpop.f32.mrb[0].mxu0
      %v932 = vadd.f32 %v867, %v931
      %v933 = vpop.f32.mrb[0].mxu0
      %934 = vmatprep.mubr.bf16.mxu0 %v411
      %935 = vmatmul.mubr.bf16.gmra.mrb[0].mxu0 %v410
      %v936 = vpop.f32.mrb[0].mxu0
      %v937 = vadd.f32 %v872, %v936
      %v938 = vpop.f32.mrb[0].mxu0
      %v939 = vpop.f32.mrb[0].mxu0
      %v940 = vadd.f32 %v875, %v939
      %v941 = vpop.f32.mrb[0].mxu0
      %942 = vmatprep.mubr.bf16.mxu0 %v418
      %943 = vmatmul.mubr.bf16.gmra.mrb[0].mxu0 %v417
      %v944 = vpop.f32.mrb[0].mxu0
      %v945 = vadd.f32 %v880, %v944
      %v946 = vpop.f32.mrb[0].mxu0
      %v947 = vpop.f32.mrb[0].mxu0
      %v948 = vadd.f32 %v883, %v947
      %v949 = vpop.f32.mrb[0].mxu0
      %950 = vmatprep.mubr.bf16.mxu0 %v425
      %951 = vmatmul.mubr.bf16.gmra.mrb[0].mxu0 %v424
      %v952 = vpop.f32.mrb[0].mxu0
      %v953 = vadd.f32 %v888, %v952
      %v954 = vpop.f32.mrb[0].mxu0
      %v955 = vpop.f32.mrb[0].mxu0
      %v956 = vadd.f32 %v891, %v955
      %v957 = vpop.f32.mrb[0].mxu0
      %958 = vdwg.mxu0
      %959 = vmatprep.subr.bf16.mxu0 0
      %960 = vmatpush1.bf16.msra.mxu0 %v699
      %961 = vmatprep.subr.bf16.mxu0 0
      %962 = vmatpush1.bf16.msra.mxu0 %v700
      %963 = vmatprep.subr.bf16.mxu0 0
      %964 = vmatpush1.bf16.msra.mxu0 0
      %965 = vmatprep.subr.bf16.mxu0 0
      %966 = vmatpush1.bf16.msra.mxu0 0
      %967 = vmatprep.subr.bf16.mxu0 0
      %968 = vmatpush1.bf16.msra.mxu0 0
      %969 = vmatprep.subr.bf16.mxu0 0
      %970 = vmatpush1.bf16.msra.mxu0 0
      %971 = vmatprep.subr.bf16.mxu0 0
      %972 = vmatpush1.bf16.msra.mxu0 0
      %973 = vmatprep.subr.bf16.mxu0 0
      %974 = vmatpush1.bf16.msra.mxu0 0
      %975 = vmatprep.subr.bf16.mxu0 0
      %976 = vmatpush1.bf16.msra.mxu0 0
      %977 = vmatprep.subr.bf16.mxu0 0
      %978 = vmatpush1.bf16.msra.mxu0 0
      %979 = vmatprep.subr.bf16.mxu0 0
      %980 = vmatpush1.bf16.msra.mxu0 0
      %981 = vmatprep.subr.bf16.mxu0 0
      %982 = vmatpush1.bf16.msra.mxu0 0
      %983 = vmatprep.subr.bf16.mxu0 0
      %984 = vmatpush1.bf16.msra.mxu0 0
      %985 = vmatprep.subr.bf16.mxu0 0
      %986 = vmatpush1.bf16.msra.mxu0 0
      %987 = vmatprep.subr.bf16.mxu0 0
      %988 = vmatpush1.bf16.msra.mxu0 0
      %989 = vmatprep.subr.bf16.mxu0 0
      %990 = vmatpush1.bf16.msra.mxu0 0
      %991 = vmatprep.mubr.bf16.mxu0 0
      %992 = vmatmul.mubr.bf16.gmra.mrb[0].mxu0 %v753
      %v993 = vpop.f32.mrb[0].mxu0
      %v994 = vadd.f32 %v929, %v993
      %v995 = vpop.f32.mrb[0].mxu0
      %v996 = vpop.f32.mrb[0].mxu0
      %v997 = vadd.f32 %v932, %v996
      %v998 = vpop.f32.mrb[0].mxu0
      %999 = vmatprep.mubr.bf16.mxu0 0
      %1000 = vmatmul.mubr.bf16.gmra.mrb[0].mxu0 %v756
      %v1001 = vpop.f32.mrb[0].mxu0
      %v1002 = vadd.f32 %v937, %v1001
      %v1003 = vpop.f32.mrb[0].mxu0
      %v1004 = vpop.f32.mrb[0].mxu0
      %v1005 = vadd.f32 %v940, %v1004
      %v1006 = vpop.f32.mrb[0].mxu0
      %1007 = vmatprep.mubr.bf16.mxu0 0
      %1008 = vmatmul.mubr.bf16.gmra.mrb[0].mxu0 %v759
      %v1009 = vpop.f32.mrb[0].mxu0
      %v1010 = vadd.f32 %v945, %v1009
      %v1011 = vpop.f32.mrb[0].mxu0
      %v1012 = vpop.f32.mrb[0].mxu0
      %v1013 = vadd.f32 %v948, %v1012
      %v1014 = vpop.f32.mrb[0].mxu0
      %1015 = vmatprep.mubr.bf16.mxu0 0
      %1016 = vmatmul.mubr.bf16.gmra.mrb[0].mxu0 %v762
      %v1017 = vpop.f32.mrb[0].mxu0
      %v1018 = vadd.f32 %v953, %v1017
      %v1019 = vpop.f32.mrb[0].mxu0
      %v1020 = vpop.f32.mrb[0].mxu0
      %v1021 = vadd.f32 %v956, %v1020
      %v1022 = vpop.f32.mrb[0].mxu0
      %1023 = vdwg.mxu0
      %v1024 = vmax.f32 %v994, %v997
      %v1025 = vmax.f32 %v1002, %v1005
      %v1026 = vmax.f32 %v1010, %v1013
      %v1027 = vmax.f32 %v1018, %v1021
      %v1032 = vrot.slane %v1024, 1
      %v1033 = vrot.slane %v1025, 1
      %v1034 = vrot.slane %v1026, 1
      %v1035 = vrot.slane %v1027, 1
      %v1040 = vmax.f32 %v1024, %v1032
      %v1041 = vmax.f32 %v1025, %v1033
      %v1042 = vmax.f32 %v1026, %v1034
      %v1043 = vmax.f32 %v1027, %v1035
      %vm1044 = vcmask 522240
      %1045 = vst.msk [vmem:[%s170] sm:$0x7f] %vm1044, %v1040
      %1046 = vst.msk [vmem:[%s170 + $0x8] sm:$0x7f] %vm1044, %v1041
      %1047 = vst.msk [vmem:[%s170 + $0x10] sm:$0x7f] %vm1044, %v1042
      %1048 = vst.msk [vmem:[%s170 + $0x18] sm:$0x7f] %vm1044, %v1043
      %p1049 = scmp.lt.s32.totalorder %s14, 1
      %s1050 = scalar_select %p1049, %s14, 1
      %s1051 = smul.addr %s1050, 4
      %s1052 = smul.addr %s1051, 8
      %s1053 = scalar_lea.vmem %s3, %s1052
      // Predicated region
      $region33: #{net_forward.6} parent=31 // pred_check
        %p1054 = pneg %p100
      $region34: #{net_forward.6} parent=31 // pred_check_branch
        %1056 = sbr.rel (%p1054) target = $region36
      $region35: #{net_forward.6} parent=31 // pred_region
        _
      $region36: #{net_forward.6} parent=31 // pred_fallthru
        _
    $region32: #{net_forward.6} parent=5 // pred_fallthru
      _
    %p1057 = scmp.le.s32.totalorder 2, %s9
    // Predicated region
    $region37: #{net_forward.6} parent=5 // pred_check
      %p1058 = pneg %p1057
    $region38: #{net_forward.6} parent=5 // pred_check_branch
      %1060 = sbr.rel (%p1058) target = $region40
    $region39: #{net_forward.6} parent=5 // pred_region
      %s1061 = ssub.s32 %s9, 2
      // Predicated region
      $region41: #{net_forward.6} parent=39 // pred_check
        %p1062 = pneg %p106
      $region42: #{net_forward.6} parent=39 // pred_check_branch
        %1064 = sbr.rel (%p1062) target = $region44
      $region43: #{net_forward.6} parent=39 // pred_region
        %p1065 = scmp.lt.s32.totalorder %s15, 1
        %s1066 = scalar_select %p1065, %s15, 1
        %s1067 = smul.addr %s1066, 4
        %s1068 = smul.addr %s1067, 8
        %s1069 = scalar_lea.vmem %s3, %s1068
      $region44: #{net_forward.6} parent=39 // pred_fallthru
        _
    $region40: #{net_forward.6} parent=5 // pred_fallthru
      _
  $region6: #{net_forward.6} parent=0 // loop_footer
    %s13 = sadd.s32 1, %s9
  $region7: #{net_forward.6} parent=0 // loop_footer_branch
    %8 = sbr.rel target = $region3
  $region8: #{net_forward.6} parent=0 // loop_exit
    _

// kernel: net_forward.7
$region0: #{net_forward.7}
  #allocation0 [shape = 'u32[]', space=smem, size = 0x4, offset = 0x4, fixed_abs, tag = 'smem constant byte address 0x4 - core index']
  #allocation1 [shape = 'u32[144,128]{1,0:T(1,128)}', space=vmem, size = 0x12000, scoped, tag = 'internal scratch']
  %s0 = inlined_call_operand.vmem [shape: bf16[2,1024], index: 0, kind: input, shape index: {}]
  %s1 = inlined_call_operand.vmem [shape: bf16[1024,64], index: 1, kind: input, shape index: {}]
  %s2 = inlined_call_operand.vmem [shape: f32[1,64], index: 2, kind: input, shape index: {}]
  %s3 = inlined_call_operand.vmem [shape: bf16[64,10], index: 3, kind: input, shape index: {}]
  %s4 = inlined_call_operand.vmem [shape: f32[1,10], index: 4, kind: input, shape index: {}]
  %s5 = inlined_call_operand.hbm [shape: f32[2,10], index: 5, kind: output, shape index: {}]
  %s6 = sld [smem:[#allocation0]]
  $region30: #{net_forward.7} parent=0
    _
  %s8 = ssub.s32 1, %s6
  %s9 = scalar_select 0, %s8, %s6
  $region1: #{net_forward.7} parent=0
    #allocation2 [shape = 'u8[1024]{0}', space=vmem, size = 0x400, scoped, tag = 'output window, operand 0, single buffered']
    #allocation3 [shape = 's32[1]{0}', space=sflag, size = 0x4, scoped, tag = 'scoped memory for net_forward.7']
    %10 = vsyncpa [#allocation3], 0
    // Predicated region
    $region2: #{net_forward.7} parent=1 // pred_check
      _
    $region3: #{net_forward.7} parent=1 // pred_check_branch
      %12 = sbr.rel (0) target = $region5
    $region4: #{net_forward.7} parent=1 // pred_region
      _
    $region5: #{net_forward.7} parent=1 // pred_fallthru
      _
    // Predicated region
    $region6: #{net_forward.7} parent=1 // pred_check
      _
    $region7: #{net_forward.7} parent=1 // pred_check_branch
      %14 = sbr.rel (0) target = $region9
    $region8: #{net_forward.7} parent=1 // pred_region
      _
    $region9: #{net_forward.7} parent=1 // pred_fallthru
      _
    // Predicated region
    $region10: #{net_forward.7} parent=1 // pred_check
      _
    $region11: #{net_forward.7} parent=1 // pred_check_branch
      %16 = sbr.rel (0) target = $region13
    $region12: #{net_forward.7} parent=1 // pred_region
      _
    $region13: #{net_forward.7} parent=1 // pred_fallthru
      _
    // Predicated region
    $region14: #{net_forward.7} parent=1 // pred_check
      _
    $region15: #{net_forward.7} parent=1 // pred_check_branch
      %18 = sbr.rel (0) target = $region17
    $region16: #{net_forward.7} parent=1 // pred_region
      _
    $region17: #{net_forward.7} parent=1 // pred_fallthru
      _
    // Predicated region
    $region18: #{net_forward.7} parent=1 // pred_check
      _
    $region19: #{net_forward.7} parent=1 // pred_check_branch
      %20 = sbr.rel (0) target = $region21
    $region20: #{net_forward.7} parent=1 // pred_region
      _
    $region21: #{net_forward.7} parent=1 // pred_fallthru
      _
    %v22 = vld [vmem:[%s0] sm:$0xff]
    %v23 = vld [vmem:[%s1] sm:$0xf]
    %v24 = vld [vmem:[%s1 + $0x4] sm:$0xf]
    %v25 = vld [vmem:[%s1 + $0x8] sm:$0xf]
    %v26 = vld [vmem:[%s1 + $0xc] sm:$0xf]
    %v27 = vld [vmem:[%s1 + $0x10] sm:$0xf]
    %v28 = vld [vmem:[%s1 + $0x14] sm:$0xf]
    %v29 = vld [vmem:[%s1 + $0x18] sm:$0xf]
    %v30 = vld [vmem:[%s1 + $0x1c] sm:$0xf]
    %v31 = vld [vmem:[%s1 + $0x20] sm:$0xf]
    %v32 = vld [vmem:[%s1 + $0x24] sm:$0xf]
    %v33 = vld [vmem:[%s1 + $0x28] sm:$0xf]
    %v34 = vld [vmem:[%s1 + $0x2c] sm:$0xf]
    %v35 = vld [vmem:[%s1 + $0x30] sm:$0xf]
    %v36 = vld [vmem:[%s1 + $0x34] sm:$0xf]
    %v37 = vld [vmem:[%s1 + $0x38] sm:$0xf]
    %v38 = vld [vmem:[%s1 + $0x3c] sm:$0xf]
    %v39 = vld [vmem:[%s1 + $0x40] sm:$0xf]
    %v40 = vld [vmem:[%s1 + $0x44] sm:$0xf]
    %v41 = vld [vmem:[%s1 + $0x48] sm:$0xf]
    %v42 = vld [vmem:[%s1 + $0x4c] sm:$0xf]
    %v43 = vld [vmem:[%s1 + $0x50] sm:$0xf]
    %v44 = vld [vmem:[%s1 + $0x54] sm:$0xf]
    %v45 = vld [vmem:[%s1 + $0x58] sm:$0xf]
    %v46 = vld [vmem:[%s1 + $0x5c] sm:$0xf]
    %v47 = vld [vmem:[%s1 + $0x60] sm:$0xf]
    %v48 = vld [vmem:[%s1 + $0x64] sm:$0xf]
    %v49 = vld [vmem:[%s1 + $0x68] sm:$0xf]
    %v50 = vld [vmem:[%s1 + $0x6c] sm:$0xf]
    %v51 = vld [vmem:[%s1 + $0x70] sm:$0xf]
    %v52 = vld [vmem:[%s1 + $0x74] sm:$0xf]
    %v53 = vld [vmem:[%s1 + $0x78] sm:$0xf]
    %v54 = vld [vmem:[%s1 + $0x7c] sm:$0xf]
    %v55 = vld [vmem:[%s1 + $0x80] sm:$0xf]
    %v56 = vld [vmem:[%s1 + $0x84] sm:$0xf]
    %v57 = vld [vmem:[%s1 + $0x88] sm:$0xf]
    %v58 = vld [vmem:[%s1 + $0x8c] sm:$0xf]
    %v59 = vld [vmem:[%s1 + $0x90] sm:$0xf]
    %v60 = vld [vmem:[%s1 + $0x94] sm:$0xf]
    %v61 = vld [vmem:[%s1 + $0x98] sm:$0xf]
    %v62 = vld [vmem:[%s1 + $0x9c] sm:$0xf]
    %v63 = vld [vmem:[%s1 + $0xa0] sm:$0xf]
    %v64 = vld [vmem:[%s1 + $0xa4] sm:$0xf]
    %v65 = vld [vmem:[%s1 + $0xa8] sm:$0xf]
    %v66 = vld [vmem:[%s1 + $0xac] sm:$0xf]
    %v67 = vld [vmem:[%s1 + $0xb0] sm:$0xf]
    %v68 = vld [vmem:[%s1 + $0xb4] sm:$0xf]
    %v69 = vld [vmem:[%s1 + $0xb8] sm:$0xf]
    %v70 = vld [vmem:[%s1 + $0xbc] sm:$0xf]
    %v71 = vld [vmem:[%s1 + $0xc0] sm:$0xf]
    %v72 = vld [vmem:[%s1 + $0xc4] sm:$0xf]
    %v73 = vld [vmem:[%s1 + $0xc8] sm:$0xf]
    %v74 = vld [vmem:[%s1 + $0xcc] sm:$0xf]
    %v75 = vld [vmem:[%s1 + $0xd0] sm:$0xf]
    %v76 = vld [vmem:[%s1 + $0xd4] sm:$0xf]
    %v77 = vld [vmem:[%s1 + $0xd8] sm:$0xf]
    %v78 = vld [vmem:[%s1 + $0xdc] sm:$0xf]
    %v79 = vld [vmem:[%s1 + $0xe0] sm:$0xf]
    %v80 = vld [vmem:[%s1 + $0xe4] sm:$0xf]
    %v81 = vld [vmem:[%s1 + $0xe8] sm:$0xf]
    %v82 = vld [vmem:[%s1 + $0xec] sm:$0xf]
    %v83 = vld [vmem:[%s1 + $0xf0] sm:$0xf]
    %v84 = vld [vmem:[%s1 + $0xf4] sm:$0xf]
    %v85 = vld [vmem:[%s1 + $0xf8] sm:$0xf]
    %v86 = vld [vmem:[%s1 + $0xfc] sm:$0xf]
    %v87 = vld [vmem:[%s1 + $0x100] sm:$0xf]
    %v88 = vld [vmem:[%s1 + $0x104] sm:$0xf]
    %v89 = vld [vmem:[%s1 + $0x108] sm:$0xf]
    %v90 = vld [vmem:[%s1 + $0x10c] sm:$0xf]
    %v91 = vld [vmem:[%s1 + $0x110] sm:$0xf]
    %v92 = vld [vmem:[%s1 + $0x114] sm:$0xf]
    %v93 = vld [vmem:[%s1 + $0x118] sm:$0xf]
    %v94 = vld [vmem:[%s1 + $0x11c] sm:$0xf]
    %v95 = vld [vmem:[%s1 + $0x120] sm:$0xf]
    %v96 = vld [vmem:[%s1 + $0x124] sm:$0xf]
    %v97 = vld [vmem:[%s1 + $0x128] sm:$0xf]
    %v98 = vld [vmem:[%s1 + $0x12c] sm:$0xf]
    %v99 = vld [vmem:[%s1 + $0x130] sm:$0xf]
    %v100 = vld [vmem:[%s1 + $0x134] sm:$0xf]
    %v101 = vld [vmem:[%s1 + $0x138] sm:$0xf]
    %v102 = vld [vmem:[%s1 + $0x13c] sm:$0xf]
    %v103 = vld [vmem:[%s1 + $0x140] sm:$0xf]
    %v104 = vld [vmem:[%s1 + $0x144] sm:$0xf]
    %v105 = vld [vmem:[%s1 + $0x148] sm:$0xf]
    %v106 = vld [vmem:[%s1 + $0x14c] sm:$0xf]
    %v107 = vld [vmem:[%s1 + $0x150] sm:$0xf]
    %v108 = vld [vmem:[%s1 + $0x154] sm:$0xf]
    %v109 = vld [vmem:[%s1 + $0x158] sm:$0xf]
    %v110 = vld [vmem:[%s1 + $0x15c] sm:$0xf]
    %v111 = vld [vmem:[%s1 + $0x160] sm:$0xf]
    %v112 = vld [vmem:[%s1 + $0x164] sm:$0xf]
    %v113 = vld [vmem:[%s1 + $0x168] sm:$0xf]
    %v114 = vld [vmem:[%s1 + $0x16c] sm:$0xf]
    %v115 = vld [vmem:[%s1 + $0x170] sm:$0xf]
    %v116 = vld [vmem:[%s1 + $0x174] sm:$0xf]
    %v117 = vld [vmem:[%s1 + $0x178] sm:$0xf]
    %v118 = vld [vmem:[%s1 + $0x17c] sm:$0xf]
    %v119 = vld [vmem:[%s1 + $0x180] sm:$0xf]
    %v120 = vld [vmem:[%s1 + $0x184] sm:$0xf]
    %v121 = vld [vmem:[%s1 + $0x188] sm:$0xf]
    %v122 = vld [vmem:[%s1 + $0x18c] sm:$0xf]
    %v123 = vld [vmem:[%s1 + $0x190] sm:$0xf]
    %v124 = vld [vmem:[%s1 + $0x194] sm:$0xf]
    %v125 = vld [vmem:[%s1 + $0x198] sm:$0xf]
    %v126 = vld [vmem:[%s1 + $0x19c] sm:$0xf]
    %v127 = vld [vmem:[%s1 + $0x1a0] sm:$0xf]
    %v128 = vld [vmem:[%s1 + $0x1a4] sm:$0xf]
    %v129 = vld [vmem:[%s1 + $0x1a8] sm:$0xf]
    %v130 = vld [vmem:[%s1 + $0x1ac] sm:$0xf]
    %v131 = vld [vmem:[%s1 + $0x1b0] sm:$0xf]
    %v132 = vld [vmem:[%s1 + $0x1b4] sm:$0xf]
    %v133 = vld [vmem:[%s1 + $0x1b8] sm:$0xf]
    %v134 = vld [vmem:[%s1 + $0x1bc] sm:$0xf]
    %v135 = vld [vmem:[%s1 + $0x1c0] sm:$0xf]
    %v136 = vld [vmem:[%s1 + $0x1c4] sm:$0xf]
    %v137 = vld [vmem:[%s1 + $0x1c8] sm:$0xf]
    %v138 = vld [vmem:[%s1 + $0x1cc] sm:$0xf]
    %v139 = vld [vmem:[%s1 + $0x1d0] sm:$0xf]
    %v140 = vld [vmem:[%s1 + $0x1d4] sm:$0xf]
    %v141 = vld [vmem:[%s1 + $0x1d8] sm:$0xf]
    %v142 = vld [vmem:[%s1 + $0x1dc] sm:$0xf]
    %v143 = vld [vmem:[%s1 + $0x1e0] sm:$0xf]
    %v144 = vld [vmem:[%s1 + $0x1e4] sm:$0xf]
    %v145 = vld [vmem:[%s1 + $0x1e8] sm:$0xf]
    %v146 = vld [vmem:[%s1 + $0x1ec] sm:$0xf]
    %v147 = vld [vmem:[%s1 + $0x1f0] sm:$0xf]
    %v148 = vld [vmem:[%s1 + $0x1f4] sm:$0xf]
    %v149 = vld [vmem:[%s1 + $0x1f8] sm:$0xf]
    %v150 = vld [vmem:[%s1 + $0x1fc] sm:$0xf]
    %v151 = vld [vmem:[%s2] sm:$0x1]
    %v153 = vlaneseq
    %v154 = vshrl.u32 %v153, 7
    %v155 = vsub.s32 0, %v154
    %v156 = vrot.slane %v151, %v155
    %v159 = vcombine.high %v22, %v22
    %v161 = vunpack.c.l.s4 1966171168
    %v162 = vunpack.c.0.s8 %v161
    %v163 = vlaneseq
    %v164 = vshrl.u32 %v163, 7
    %v165 = vsub.s32 %v162, %v164
    %v166 = vrot.slane %v22, %v165
    %v168 = vunpack.c.l.s4 1966171168
    %v169 = vunpack.c.0.s8 %v168
    %v170 = vlaneseq
    %v171 = vshrl.u32 %v170, 7
    %v172 = vsub.s32 %v169, %v171
    %v173 = vrot.slane %v159, %v172
    %v174 = vcombine.high %v166, %v166
    %v175 = vcombine.high %v173, %v173
    %v177 = vunpack.c.l.s4 1966171168
    %v178 = vunpack.c.0.s8 %v177
    %v179 = vlaneseq
    %v180 = vshrl.u32 %v179, 7
    %v181 = vsub.s32 %v178, %v180
    %v182 = vrot.slane %v166, %v181
    %v184 = vunpack.c.l.s4 1966171168
    %v185 = vunpack.c.0.s8 %v184
    %v186 = vlaneseq
    %v187 = vshrl.u32 %v186, 7
    %v188 = vsub.s32 %v185, %v187
    %v189 = vrot.slane %v173, %v188
    %v191 = vunpack.c.l.s4 1966171168
    %v192 = vunpack.c.0.s8 %v191
    %v193 = vlaneseq
    %v194 = vshrl.u32 %v193, 7
    %v195 = vsub.s32 %v192, %v194
    %v196 = vrot.slane %v174, %v195
    %v198 = vunpack.c.l.s4 1966171168
    %v199 = vunpack.c.0.s8 %v198
    %v200 = vlaneseq
    %v201 = vshrl.u32 %v200, 7
    %v202 = vsub.s32 %v199, %v201
    %v203 = vrot.slane %v175, %v202
    %v204 = vcombine.high %v182, %v182
    %v205 = vcombine.high %v189, %v189
    %v206 = vcombine.high %v196, %v196
    %v207 = vcombine.high %v203, %v203
    %v344 = vunpack.c.l.b16 %v23
    %v345 = vunpack.c.l.b16 %v24
    %v346 = vunpack.c.l.b16 %v25
    %v347 = vunpack.c.l.b16 %v26
    %v348 = vunpack.c.l.b16 %v27
    %v349 = vunpack.c.l.b16 %v28
    %v350 = vunpack.c.l.b16 %v29
    %v351 = vunpack.c.l.b16 %v30
    %v352 = vunpack.c.l.b16 %v31
    %v353 = vunpack.c.l.b16 %v32
    %v354 = vunpack.c.l.b16 %v33
    %v355 = vunpack.c.l.b16 %v34
    %v356 = vunpack.c.l.b16 %v35
    %v357 = vunpack.c.l.b16 %v36
    %v358 = vunpack.c.l.b16 %v37
    %v359 = vunpack.c.l.b16 %v38
    %v360 = vunpack.c.l.b16 %v39
    %v361 = vunpack.c.l.b16 %v40
    %v362 = vunpack.c.l.b16 %v41
    %v363 = vunpack.c.l.b16 %v42
    %v364 = vunpack.c.l.b16 %v43
    %v365 = vunpack.c.l.b16 %v44
    %v366 = vunpack.c.l.b16 %v45
    %v367 = vunpack.c.l.b16 %v46
    %v368 = vunpack.c.l.b16 %v47
    %v369 = vunpack.c.l.b16 %v48
    %v370 = vunpack.c.l.b16 %v49
    %v371 = vunpack.c.l.b16 %v50
    %v372 = vunpack.c.l.b16 %v51
    %v373 = vunpack.c.l.b16 %v52
    %v374 = vunpack.c.l.b16 %v53
    %v375 = vunpack.c.l.b16 %v54
    %v376 = vunpack.c.l.b16 %v55
    %v377 = vunpack.c.l.b16 %v56
    %v378 = vunpack.c.l.b16 %v57
    %v379 = vunpack.c.l.b16 %v58
    %v380 = vunpack.c.l.b16 %v59
    %v381 = vunpack.c.l.b16 %v60
    %v382 = vunpack.c.l.b16 %v61
    %v383 = vunpack.c.l.b16 %v62
    %v384 = vunpack.c.l.b16 %v63
    %v385 = vunpack.c.l.b16 %v64
    %v386 = vunpack.c.l.b16 %v65
    %v387 = vunpack.c.l.b16 %v66
    %v388 = vunpack.c.l.b16 %v67
    %v389 = vunpack.c.l.b16 %v68
    %v390 = vunpack.c.l.b16 %v69
    %v391 = vunpack.c.l.b16 %v70
    %v392 = vunpack.c.l.b16 %v71
    %v393 = vunpack.c.l.b16 %v72
    %v394 = vunpack.c.l.b16 %v73
    %v395 = vunpack.c.l.b16 %v74
    %v396 = vunpack.c.l.b16 %v75
    %v397 = vunpack.c.l.b16 %v76
    %v398 = vunpack.c.l.b16 %v77
    %v399 = vunpack.c.l.b16 %v78
    %v400 = vunpack.c.l.b16 %v79
    %v401 = vunpack.c.l.b16 %v80
    %v402 = vunpack.c.l.b16 %v81
    %v403 = vunpack.c.l.b16 %v82
    %v404 = vunpack.c.l.b16 %v83
    %v405 = vunpack.c.l.b16 %v84
    %v406 = vunpack.c.l.b16 %v85
    %v407 = vunpack.c.l.b16 %v86
    %v408 = vunpack.c.l.b16 %v87
    %v409 = vunpack.c.l.b16 %v88
    %v410 = vunpack.c.l.b16 %v89
    %v411 = vunpack.c.l.b16 %v90
    %v412 = vunpack.c.l.b16 %v91
    %v413 = vunpack.c.l.b16 %v92
    %v414 = vunpack.c.l.b16 %v93
    %v415 = vunpack.c.l.b16 %v94
    %v416 = vunpack.c.l.b16 %v95
    %v417 = vunpack.c.l.b16 %v96
    %v418 = vunpack.c.l.b16 %v97
    %v419 = vunpack.c.l.b16 %v98
    %v420 = vunpack.c.l.b16 %v99
    %v421 = vunpack.c.l.b16 %v100
    %v422 = vunpack.c.l.b16 %v101
    %v423 = vunpack.c.l.b16 %v102
    %v424 = vunpack.c.l.b16 %v103
    %v425 = vunpack.c.l.b16 %v104
    %v426 = vunpack.c.l.b16 %v105
    %v427 = vunpack.c.l.b16 %v106
    %v428 = vunpack.c.l.b16 %v107
    %v429 = vunpack.c.l.b16 %v108
    %v430 = vunpack.c.l.b16 %v109
    %v431 = vunpack.c.l.b16 %v110
    %v432 = vunpack.c.l.b16 %v111
    %v433 = vunpack.c.l.b16 %v112
    %v434 = vunpack.c.l.b16 %v113
    %v435 = vunpack.c.l.b16 %v114
    %v436 = vunpack.c.l.b16 %v115
    %v437 = vunpack.c.l.b16 %v116
    %v438 = vunpack.c.l.b16 %v117
    %v439 = vunpack.c.l.b16 %v118
    %v440 = vunpack.c.l.b16 %v119
    %v441 = vunpack.c.l.b16 %v120
    %v442 = vunpack.c.l.b16 %v121
    %v443 = vunpack.c.l.b16 %v122
    %v444 = vunpack.c.l.b16 %v123
    %v445 = vunpack.c.l.b16 %v124
    %v446 = vunpack.c.l.b16 %v125
    %v447 = vunpack.c.l.b16 %v126
    %v448 = vunpack.c.l.b16 %v127
    %v449 = vunpack.c.l.b16 %v128
    %v450 = vunpack.c.l.b16 %v129
    %v451 = vunpack.c.l.b16 %v130
    %v452 = vunpack.c.l.b16 %v131
    %v453 = vunpack.c.l.b16 %v132
    %v454 = vunpack.c.l.b16 %v133
    %v455 = vunpack.c.l.b16 %v134
    %v456 = vunpack.c.l.b16 %v135
    %v457 = vunpack.c.l.b16 %v136
    %v458 = vunpack.c.l.b16 %v137
    %v459 = vunpack.c.l.b16 %v138
    %v460 = vunpack.c.l.b16 %v139
    %v461 = vunpack.c.l.b16 %v140
    %v462 = vunpack.c.l.b16 %v141
    %v463 = vunpack.c.l.b16 %v142
    %v464 = vunpack.c.l.b16 %v143
    %v465 = vunpack.c.l.b16 %v144
    %v466 = vunpack.c.l.b16 %v145
    %v467 = vunpack.c.l.b16 %v146
    %v468 = vunpack.c.l.b16 %v147
    %v469 = vunpack.c.l.b16 %v148
    %v470 = vunpack.c.l.b16 %v149
    %v471 = vunpack.c.l.b16 %v150
    %v472 = vpack.c.b16 %v345, %v344
    %v473 = vpack.c.b16 %v347, %v346
    %v474 = vpack.c.b16 %v349, %v348
    %v475 = vpack.c.b16 %v351, %v350
    %v476 = vpack.c.b16 %v353, %v352
    %v477 = vpack.c.b16 %v355, %v354
    %v478 = vpack.c.b16 %v357, %v356
    %v479 = vpack.c.b16 %v359, %v358
    %v480 = vpack.c.b16 %v361, %v360
    %v481 = vpack.c.b16 %v363, %v362
    %v482 = vpack.c.b16 %v365, %v364
    %v483 = vpack.c.b16 %v367, %v366
    %v484 = vpack.c.b16 %v369, %v368
    %v485 = vpack.c.b16 %v371, %v370
    %v486 = vpack.c.b16 %v373, %v372
    %v487 = vpack.c.b16 %v375, %v374
    %v488 = vpack.c.b16 %v377, %v376
    %v489 = vpack.c.b16 %v379, %v378
    %v490 = vpack.c.b16 %v381, %v380
    %v491 = vpack.c.b16 %v383, %v382
    %v492 = vpack.c.b16 %v385, %v384
    %v493 = vpack.c.b16 %v387, %v386
    %v494 = vpack.c.b16 %v389, %v388
    %v495 = vpack.c.b16 %v391, %v390
    %v496 = vpack.c.b16 %v393, %v392
    %v497 = vpack.c.b16 %v395, %v394
    %v498 = vpack.c.b16 %v397, %v396
    %v499 = vpack.c.b16 %v399, %v398
    %v500 = vpack.c.b16 %v401, %v400
    %v501 = vpack.c.b16 %v403, %v402
    %v502 = vpack.c.b16 %v405, %v404
    %v503 = vpack.c.b16 %v407, %v406
    %v504 = vpack.c.b16 %v409, %v408
    %v505 = vpack.c.b16 %v411, %v410
    %v506 = vpack.c.b16 %v413, %v412
    %v507 = vpack.c.b16 %v415, %v414
    %v508 = vpack.c.b16 %v417, %v416
    %v509 = vpack.c.b16 %v419, %v418
    %v510 = vpack.c.b16 %v421, %v420
    %v511 = vpack.c.b16 %v423, %v422
    %v512 = vpack.c.b16 %v425, %v424
    %v513 = vpack.c.b16 %v427, %v426
    %v514 = vpack.c.b16 %v429, %v428
    %v515 = vpack.c.b16 %v431, %v430
    %v516 = vpack.c.b16 %v433, %v432
    %v517 = vpack.c.b16 %v435, %v434
    %v518 = vpack.c.b16 %v437, %v436
    %v519 = vpack.c.b16 %v439, %v438
    %v520 = vpack.c.b16 %v441, %v440
    %v521 = vpack.c.b16 %v443, %v442
    %v522 = vpack.c.b16 %v445, %v444
    %v523 = vpack.c.b16 %v447, %v446
    %v524 = vpack.c.b16 %v449, %v448
    %v525 = vpack.c.b16 %v451, %v450
    %v526 = vpack.c.b16 %v453, %v452
    %v527 = vpack.c.b16 %v455, %v454
    %v528 = vpack.c.b16 %v457, %v456
    %v529 = vpack.c.b16 %v459, %v458
    %v530 = vpack.c.b16 %v461, %v460
    %v531 = vpack.c.b16 %v463, %v462
    %v532 = vpack.c.b16 %v465, %v464
    %v533 = vpack.c.b16 %v467, %v466
    %v534 = vpack.c.b16 %v469, %v468
    %v535 = vpack.c.b16 %v471, %v470
    %600 = vmatprep.subr.bf16.mxu0 0
    %601 = vmatpush1.bf16.msra.mxu0 %v472
    %602 = vmatprep.subr.bf16.mxu0 0
    %603 = vmatpush1.bf16.msra.mxu0 %v473
    %604 = vmatprep.subr.bf16.mxu0 0
    %605 = vmatpush1.bf16.msra.mxu0 %v474
    %606 = vmatprep.subr.bf16.mxu0 0
    %607 = vmatpush1.bf16.msra.mxu0 %v475
    %608 = vmatprep.subr.bf16.mxu0 0
    %609 = vmatpush1.bf16.msra.mxu0 %v476
    %610 = vmatprep.subr.bf16.mxu0 0
    %611 = vmatpush1.bf16.msra.mxu0 %v477
    %612 = vmatprep.subr.bf16.mxu0 0
    %613 = vmatpush1.bf16.msra.mxu0 %v478
    %614 = vmatprep.subr.bf16.mxu0 0
    %615 = vmatpush1.bf16.msra.mxu0 %v479
    %616 = vmatprep.subr.bf16.mxu0 0
    %617 = vmatpush1.bf16.msra.mxu0 %v480
    %618 = vmatprep.subr.bf16.mxu0 0
    %619 = vmatpush1.bf16.msra.mxu0 %v481
    %620 = vmatprep.subr.bf16.mxu0 0
    %621 = vmatpush1.bf16.msra.mxu0 %v482
    %622 = vmatprep.subr.bf16.mxu0 0
    %623 = vmatpush1.bf16.msra.mxu0 %v483
    %624 = vmatprep.subr.bf16.mxu0 0
    %625 = vmatpush1.bf16.msra.mxu0 %v484
    %626 = vmatprep.subr.bf16.mxu0 0
    %627 = vmatpush1.bf16.msra.mxu0 %v485
    %628 = vmatprep.subr.bf16.mxu0 0
    %629 = vmatpush1.bf16.msra.mxu0 %v486
    %630 = vmatprep.subr.bf16.mxu0 0
    %631 = vmatpush1.bf16.msra.mxu0 %v487
    %632 = vmatprep.mubr.bf16.mxu0 %v196
    %633 = vmatmul.mubr.bf16.gmra.mrb[0].mxu0 %v182
    %v634 = vpop.f32.mrb[0].mxu0
    %v635 = vadd.f32 %v156, %v634
    %v636 = vpop.f32.mrb[0].mxu0
    %v637 = vpop.f32.mrb[0].mxu0
    %v638 = vpop.f32.mrb[0].mxu0
    %639 = vdwg.mxu0
    %640 = vmatprep.subr.bf16.mxu0 0
    %641 = vmatpush1.bf16.msra.mxu0 %v488
    %642 = vmatprep.subr.bf16.mxu0 0
    %643 = vmatpush1.bf16.msra.mxu0 %v489
    %644 = vmatprep.subr.bf16.mxu0 0
    %645 = vmatpush1.bf16.msra.mxu0 %v490
    %646 = vmatprep.subr.bf16.mxu0 0
    %647 = vmatpush1.bf16.msra.mxu0 %v491
    %648 = vmatprep.subr.bf16.mxu0 0
    %649 = vmatpush1.bf16.msra.mxu0 %v492
    %650 = vmatprep.subr.bf16.mxu0 0
    %651 = vmatpush1.bf16.msra.mxu0 %v493
    %652 = vmatprep.subr.bf16.mxu0 0
    %653 = vmatpush1.bf16.msra.mxu0 %v494
    %654 = vmatprep.subr.bf16.mxu0 0
    %655 = vmatpush1.bf16.msra.mxu0 %v495
    %656 = vmatprep.subr.bf16.mxu0 0
    %657 = vmatpush1.bf16.msra.mxu0 %v496
    %658 = vmatprep.subr.bf16.mxu0 0
    %659 = vmatpush1.bf16.msra.mxu0 %v497
    %660 = vmatprep.subr.bf16.mxu0 0
    %661 = vmatpush1.bf16.msra.mxu0 %v498
    %662 = vmatprep.subr.bf16.mxu0 0
    %663 = vmatpush1.bf16.msra.mxu0 %v499
    %664 = vmatprep.subr.bf16.mxu0 0
    %665 = vmatpush1.bf16.msra.mxu0 %v500
    %666 = vmatprep.subr.bf16.mxu0 0
    %667 = vmatpush1.bf16.msra.mxu0 %v501
    %668 = vmatprep.subr.bf16.mxu0 0
    %669 = vmatpush1.bf16.msra.mxu0 %v502
    %670 = vmatprep.subr.bf16.mxu0 0
    %671 = vmatpush1.bf16.msra.mxu0 %v503
    %672 = vmatprep.mubr.bf16.mxu0 %v206
    %673 = vmatmul.mubr.bf16.gmra.mrb[0].mxu0 %v204
    %v674 = vpop.f32.mrb[0].mxu0
    %v675 = vadd.f32 %v635, %v674
    %v676 = vpop.f32.mrb[0].mxu0
    %v677 = vpop.f32.mrb[0].mxu0
    %v678 = vpop.f32.mrb[0].mxu0
    %679 = vdwg.mxu0
    %680 = vmatprep.subr.bf16.mxu0 0
    %681 = vmatpush1.bf16.msra.mxu0 %v504
    %682 = vmatprep.subr.bf16.mxu0 0
    %683 = vmatpush1.bf16.msra.mxu0 %v505
    %684 = vmatprep.subr.bf16.mxu0 0
    %685 = vmatpush1.bf16.msra.mxu0 %v506
    %686 = vmatprep.subr.bf16.mxu0 0
    %687 = vmatpush1.bf16.msra.mxu0 %v507
    %688 = vmatprep.subr.bf16.mxu0 0
    %689 = vmatpush1.bf16.msra.mxu0 %v508
    %690 = vmatprep.subr.bf16.mxu0 0
    %691 = vmatpush1.bf16.msra.mxu0 %v509
    %692 = vmatprep.subr.bf16.mxu0 0
    %693 = vmatpush1.bf16.msra.mxu0 %v510
    %694 = vmatprep.subr.bf16.mxu0 0
    %695 = vmatpush1.bf16.msra.mxu0 %v511
    %696 = vmatprep.subr.bf16.mxu0 0
    %697 = vmatpush1.bf16.msra.mxu0 %v512
    %698 = vmatprep.subr.bf16.mxu0 0
    %699 = vmatpush1.bf16.msra.mxu0 %v513
    %700 = vmatprep.subr.bf16.mxu0 0
    %701 = vmatpush1.bf16.msra.mxu0 %v514
    %702 = vmatprep.subr.bf16.mxu0 0
    %703 = vmatpush1.bf16.msra.mxu0 %v515
    %704 = vmatprep.subr.bf16.mxu0 0
    %705 = vmatpush1.bf16.msra.mxu0 %v516
    %706 = vmatprep.subr.bf16.mxu0 0
    %707 = vmatpush1.bf16.msra.mxu0 %v517
    %708 = vmatprep.subr.bf16.mxu0 0
    %709 = vmatpush1.bf16.msra.mxu0 %v518
    %710 = vmatprep.subr.bf16.mxu0 0
    %711 = vmatpush1.bf16.msra.mxu0 %v519
    %712 = vmatprep.mubr.bf16.mxu0 %v203
    %713 = vmatmul.mubr.bf16.gmra.mrb[0].mxu0 %v189
    %v714 = vpop.f32.mrb[0].mxu0
    %v715 = vadd.f32 %v675, %v714
    %v716 = vpop.f32.mrb[0].mxu0
    %v717 = vpop.f32.mrb[0].mxu0
    %v718 = vpop.f32.mrb[0].mxu0
    %719 = vdwg.mxu0
    %720 = vmatprep.subr.bf16.mxu0 0
    %721 = vmatpush1.bf16.msra.mxu0 %v520
    %722 = vmatprep.subr.bf16.mxu0 0
    %723 = vmatpush1.bf16.msra.mxu0 %v521
    %724 = vmatprep.subr.bf16.mxu0 0
    %725 = vmatpush1.bf16.msra.mxu0 %v522
    %726 = vmatprep.subr.bf16.mxu0 0
    %727 = vmatpush1.bf16.msra.mxu0 %v523
    %728 = vmatprep.subr.bf16.mxu0 0
    %729 = vmatpush1.bf16.msra.mxu0 %v524
    %730 = vmatprep.subr.bf16.mxu0 0
    %731 = vmatpush1.bf16.msra.mxu0 %v525
    %732 = vmatprep.subr.bf16.mxu0 0
    %733 = vmatpush1.bf16.msra.mxu0 %v526
    %734 = vmatprep.subr.bf16.mxu0 0
    %735 = vmatpush1.bf16.msra.mxu0 %v527
    %736 = vmatprep.subr.bf16.mxu0 0
    %737 = vmatpush1.bf16.msra.mxu0 %v528
    %738 = vmatprep.subr.bf16.mxu0 0
    %739 = vmatpush1.bf16.msra.mxu0 %v529
    %740 = vmatprep.subr.bf16.mxu0 0
    %741 = vmatpush1.bf16.msra.mxu0 %v530
    %742 = vmatprep.subr.bf16.mxu0 0
    %743 = vmatpush1.bf16.msra.mxu0 %v531
    %744 = vmatprep.subr.bf16.mxu0 0
    %745 = vmatpush1.bf16.msra.mxu0 %v532
    %746 = vmatprep.subr.bf16.mxu0 0
    %747 = vmatpush1.bf16.msra.mxu0 %v533
    %748 = vmatprep.subr.bf16.mxu0 0
    %749 = vmatpush1.bf16.msra.mxu0 %v534
    %750 = vmatprep.subr.bf16.mxu0 0
    %751 = vmatpush1.bf16.msra.mxu0 %v535
    %752 = vmatprep.mubr.bf16.mxu0 %v207
    %753 = vmatmul.mubr.bf16.gmra.mrb[0].mxu0 %v205
    %v754 = vpop.f32.mrb[0].mxu0
    %v755 = vadd.f32 %v715, %v754
    %v756 = vpop.f32.mrb[0].mxu0
    %v757 = vpop.f32.mrb[0].mxu0
    %v758 = vpop.f32.mrb[0].mxu0
    %759 = vdwg.mxu0
    %v760 = vpack.c.bf16 %v755, %v755
    %v761 = vld [vmem:[%s3] sm:$0xf]
    %v762 = vld [vmem:[%s3 + $0x4] sm:$0xf]
    %v763 = vld [vmem:[%s3 + $0x8] sm:$0xf]
    %v764 = vld [vmem:[%s3 + $0xc] sm:$0xf]
    %v765 = vld [vmem:[%s3 + $0x10] sm:$0xf]
    %v766 = vld [vmem:[%s3 + $0x14] sm:$0xf]
    %v767 = vld [vmem:[%s3 + $0x18] sm:$0xf]
    %v768 = vld [vmem:[%s3 + $0x1c] sm:$0xf]
    %v769 = vld [vmem:[%s4] sm:$0x1]
    %v771 = vlaneseq
    %v772 = vshrl.u32 %v771, 7
    %v773 = vsub.s32 0, %v772
    %v774 = vrot.slane %v769, %v773
    %v784 = vunpack.c.l.b16 %v761
    %v785 = vunpack.c.l.b16 %v762
    %v786 = vunpack.c.l.b16 %v763
    %v787 = vunpack.c.l.b16 %v764
    %v788 = vunpack.c.l.b16 %v765
    %v789 = vunpack.c.l.b16 %v766
    %v790 = vunpack.c.l.b16 %v767
    %v791 = vunpack.c.l.b16 %v768
    %v792 = vpack.c.b16 %v785, %v784
    %v793 = vpack.c.b16 %v787, %v786
    %v794 = vpack.c.b16 %v789, %v788
    %v795 = vpack.c.b16 %v791, %v790
    %vm800 = vcmask 523264
    %v802 = vsel %vm800, %v760, 0
    %804 = vmatprep.subr.bf16.mxu0 0
    %805 = vmatpush1.bf16.msra.mxu0 %v792
    %806 = vmatprep.subr.bf16.mxu0 0
    %807 = vmatpush1.bf16.msra.mxu0 %v793
    %808 = vmatprep.subr.bf16.mxu0 0
    %809 = vmatpush1.bf16.msra.mxu0 %v794
    %810 = vmatprep.subr.bf16.mxu0 0
    %811 = vmatpush1.bf16.msra.mxu0 %v795
    %812 = vmatprep.subr.bf16.mxu0 0
    %813 = vmatpush1.bf16.msra.mxu0 0
    %814 = vmatprep.subr.bf16.mxu0 0
    %815 = vmatpush1.bf16.msra.mxu0 0
    %816 = vmatprep.subr.bf16.mxu0 0
    %817 = vmatpush1.bf16.msra.mxu0 0
    %818 = vmatprep.subr.bf16.mxu0 0
    %819 = vmatpush1.bf16.msra.mxu0 0
    %820 = vmatprep.subr.bf16.mxu0 0
    %821 = vmatpush1.bf16.msra.mxu0 0
    %822 = vmatprep.subr.bf16.mxu0 0
    %823 = vmatpush1.bf16.msra.mxu0 0
    %824 = vmatprep.subr.bf16.mxu0 0
    %825 = vmatpush1.bf16.msra.mxu0 0
    %826 = vmatprep.subr.bf16.mxu0 0
    %827 = vmatpush1.bf16.msra.mxu0 0
    %828 = vmatprep.subr.bf16.mxu0 0
    %829 = vmatpush1.bf16.msra.mxu0 0
    %830 = vmatprep.subr.bf16.mxu0 0
    %831 = vmatpush1.bf16.msra.mxu0 0
    %832 = vmatprep.subr.bf16.mxu0 0
    %833 = vmatpush1.bf16.msra.mxu0 0
    %834 = vmatprep.subr.bf16.mxu0 0
    %835 = vmatpush1.bf16.msra.mxu0 0
    %836 = vmatprep.mubr.bf16.mxu0 0
    %837 = vmatmul.mubr.bf16.gmra.mrb[0].mxu0 %v802
    %v838 = vpop.f32.mrb[0].mxu0
    %v839 = vadd.f32 %v774, %v838
    %v840 = vpop.f32.mrb[0].mxu0
    %v841 = vpop.f32.mrb[0].mxu0
    %v842 = vpop.f32.mrb[0].mxu0
    %843 = vdwg.mxu0
    %vm844 = vcmask 74752
    %845 = vst.msk [vmem:[#allocation2] sm:$0x3] %vm844, %v839
    // Predicated region
    $region22: #{net_forward.7} parent=1 // pred_check
      _
    $region23: #{net_forward.7} parent=1 // pred_check_branch
      %847 = sbr.rel (0) target = $region25
    $region24: #{net_forward.7} parent=1 // pred_region
      %s849 = ssub.s32 32, 32
      %850 = vsyncadd [#allocation3], %s849
      %s852 = sshll.u32 [#allocation2], 4
      %s853 = int_to_ptr.vmem [resolvable:$true] %s852
      %855 = dma.vmem_to_hbm [thread:$0]  %s853, 32, %s5, [#allocation3]
    $region25: #{net_forward.7} parent=1 // pred_fallthru
      _
    // Predicated region
    $region26: #{net_forward.7} parent=1 // pred_check
      _
    $region27: #{net_forward.7} parent=1 // pred_check_branch
      %857 = sbr.rel (0) target = $region29
    $region28: #{net_forward.7} parent=1 // pred_region
      %858 = dma.done [#allocation3], 32
    $region29: #{net_forward.7} parent=1 // pred_fallthru
      _
    %859 = vsyncpa [#allocation3], 1

</llo_original>
